<compile_context>
chip_gen: v6e
topology: v6e:2x2x1
jax: 0.10.0
libtpu: 0.0.40
codegen_flags: <defaults>
</compile_context>

<pallas_src>
import jax
import jax.numpy as jnp
from jax.experimental import pallas as pl
from jax.experimental.pallas import tpu as pltpu

NEG_SLOPE = 0.01  # torch.nn.LeakyReLU default negative_slope
LANE = 128        # TPU lane width


def _round_up(n, m):
    return ((n + m - 1) // m) * m


# ---------------------------------------------------------------------------
# Fused kernel: all hidden layers + predict in one body
# ---------------------------------------------------------------------------
def _make_fused_kernel(n_hidden):
    def kernel(*refs):
        # refs = (x, w1, b1, ..., wL, bL, w_pred, b_pred, out)
        x_ref = refs[0]
        layer_refs = refs[1:1 + 2 * n_hidden]
        wp_ref = refs[1 + 2 * n_hidden]
        bp_ref = refs[2 + 2 * n_hidden]
        o_ref = refs[-1]

        x = x_ref[...]
        for l in range(n_hidden):
            w_ref = layer_refs[2 * l]
            b_ref = layer_refs[2 * l + 1]
            h = w_ref.shape[1] // 2
            # One 2h-wide matmul for both the sin and relu halves.
            y = jnp.dot(x, w_ref[...], preferred_element_type=jnp.float32)
            y = y + b_ref[...]
            # Lane-index select: sin on cols [0, h), leaky_relu on [h, 2h).
            # (This IS the concat(sin(..), leaky_relu(..)) of the reference,
            # since the fused weight keeps the sin columns first.)
            lane = jax.lax.broadcasted_iota(jnp.int32, y.shape, 1)
            y_sin = jnp.sin(y)
            y_rel = jnp.where(y >= 0.0, y, NEG_SLOPE * y)
            x = jnp.where(lane < h, y_sin, y_rel)

        out = jnp.dot(x, wp_ref[...], preferred_element_type=jnp.float32)
        out = out + bp_ref[...]
        o_ref[...] = out.astype(o_ref.dtype)

    return kernel


# ---------------------------------------------------------------------------
# Wrapper
# ---------------------------------------------------------------------------
def _pick_tb(batch, tb):
    tb = min(tb, batch)
    if tb != batch:
        tb = max(8, (tb // 8) * 8)  # sublane-aligned tile
    return tb


def sin_feature_network(x, params, *, tb=128):
    """Fused forward pass. Returns (B, output_dim)."""
    B, d_in = x.shape
    hidden = params["hidden"]          # list of (w_fused (d_in,2h), b_fused (1,2h))
    w_p, b_p = params["predict"]       # lane-dense padded: (2h_last, 128k), (1, 128k)
    out_dim = params["output_dim"]
    d_out_pad = w_p.shape[1]

    tb = _pick_tb(B, tb)
    grid = (pl.cdiv(B, tb),)
    n_hidden = len(hidden)

    def const_spec(shape):
        # Full-block, constant index_map: DMA'd once, stays VMEM-resident.
        return pl.BlockSpec(shape, lambda i: (0, 0))

    in_specs = [pl.BlockSpec((tb, d_in), lambda i: (i, 0))]
    operands = [x]
    for w, b in hidden:
        in_specs += [const_spec(w.shape), const_spec(b.shape)]
        operands += [w, b]
    in_specs += [const_spec(w_p.shape), const_spec(b_p.shape)]
    operands += [w_p, b_p]

    # Advisory cost estimate for XLA's scheduler.
    flops = 0
    transcendentals = 0
    bytes_accessed = x.size * x.dtype.itemsize
    d = d_in
    for w, b in hidden:
        flops += 2 * B * d * w.shape[1]
        transcendentals += B * (w.shape[1] // 2)          # sin
        bytes_accessed += (w.size + b.size) * 4
        d = w.shape[1]
    flops += 2 * B * d * d_out_pad
    bytes_accessed += (w_p.size + b_p.size) * 4 + B * d_out_pad * 4

    out_padded = pl.pallas_call(
        _make_fused_kernel(n_hidden),
        out_shape=jax.ShapeDtypeStruct((B, d_out_pad), x.dtype),
        grid=grid,
        in_specs=in_specs,
        out_specs=pl.BlockSpec((tb, d_out_pad), lambda i: (i, 0)),
        compiler_params=pltpu.CompilerParams(
            dimension_semantics=("parallel",)),
        cost_estimate=pl.CostEstimate(
            flops=int(flops),
            transcendentals=int(transcendentals),
            bytes_accessed=int(bytes_accessed)),
    )(*operands)

    return out_padded[:, :out_dim]


# ---------------------------------------------------------------------------
# Parameter construction (deterministic, mimics nn.Linear's uniform init)
# ---------------------------------------------------------------------------
def init_linear(key, fan_in, fan_out):
    kw, kb = jax.random.split(key)
    bound = 1.0 / float(fan_in) ** 0.5
    w = jax.random.uniform(kw, (fan_in, fan_out), jnp.float32, -bound, bound)
    b = jax.random.uniform(kb, (1, fan_out), jnp.float32, -bound, bound)
    return w, b


def init_sin_feature_network(key, feature_dim, hidden_dims, output_dim):
    in_dims = [feature_dim] + [h * 2 for h in hidden_dims[:-1]]
    hidden = []
    for d_in, h in zip(in_dims, hidden_dims):
        key, ks, kr = jax.random.split(key, 3)
        w_s, b_s = init_linear(ks, d_in, h)
        w_r, b_r = init_linear(kr, d_in, h)
        # Fused [W_sin | W_relu] / [b_sin | b_relu] -> one matmul per layer.
        hidden.append((jnp.concatenate([w_s, w_r], axis=1),
                       jnp.concatenate([b_s, b_r], axis=1)))
    key, kp = jax.random.split(key)
    w_p, b_p = init_linear(kp, hidden_dims[-1] * 2, output_dim)
    # Zero-pad predict layer to a lane-dense (multiple of 128) output width so
    # the kernel's output store is unmasked; wrapper slices back to output_dim.
    d_out_pad = _round_up(max(output_dim, LANE), LANE)
    w_p = jnp.pad(w_p, ((0, 0), (0, d_out_pad - output_dim)))
    b_p = jnp.pad(b_p, ((0, 0), (0, d_out_pad - output_dim)))
    return {"hidden": hidden, "predict": (w_p, b_p), "output_dim": output_dim}


# ---------------------------------------------------------------------------
# Pure-JAX reference for correctness checking
# ---------------------------------------------------------------------------
def sin_feature_network_ref(x, params):
    for w, b in params["hidden"]:
        h = w.shape[1] // 2
        y = x @ w + b
        s = jnp.sin(y[:, :h])
        r = y[:, h:]
        r = jnp.where(r >= 0.0, r, NEG_SLOPE * r)
        x = jnp.concatenate([s, r], axis=1)
    w_p, b_p = params["predict"]
    return (x @ w_p + b_p)[:, :params["output_dim"]]


# ---------------------------------------------------------------------------
if __name__ == "__main__":
    feature_dim = 16
    hidden_dims = [32, 32]
    output_dim = 8
    batch = 256  # tb=128 -> grid (2,): both TensorCores busy on v7x

    key = jax.random.PRNGKey(0)
    key_params, key_x = jax.random.split(key)
    params = init_sin_feature_network(key_params, feature_dim, hidden_dims, output_dim)
    x = jax.random.normal(key_x, (batch, feature_dim), jnp.float32)

    out = sin_feature_network(x, params)
    out = jax.block_until_ready(out)

    ref = sin_feature_network_ref(x, params)
    assert out.shape == (batch, output_dim)
    assert jnp.allclose(out, ref, atol=2e-5, rtol=2e-5), float(
        jnp.max(jnp.abs(out - ref)))

    print("KERNEL_OK")
</pallas_src>

<mosaic_0001>
module attributes {stable_mosaic.version = 11 : i64} {
  func.func @kernel(%arg0: i32, %arg1: memref<128x16xf32, #tpu.memory_space<vmem>>, %arg2: memref<16x64xf32, #tpu.memory_space<vmem>>, %arg3: memref<1x64xf32, #tpu.memory_space<vmem>>, %arg4: memref<64x64xf32, #tpu.memory_space<vmem>>, %arg5: memref<1x64xf32, #tpu.memory_space<vmem>>, %arg6: memref<64x128xf32, #tpu.memory_space<vmem>>, %arg7: memref<1x128xf32, #tpu.memory_space<vmem>>, %arg8: memref<128x128xf32, #tpu.memory_space<vmem>>) attributes {dimension_semantics = [#tpu.dimension_semantics<parallel>], iteration_bounds = array<i64: 2>, scalar_prefetch = 0 : i64, scratch_operands = 0 : i64, tpu.core_type = #tpu.core_type<tc>, window_params = [{transform_indices = @transform_0, window_bounds = array<i64: 128, 16>}, {pipeline_mode = #tpu.pipeline_mode<synchronous>, transform_indices = @transform_1, window_bounds = array<i64: 16, 64>}, {pipeline_mode = #tpu.pipeline_mode<synchronous>, transform_indices = @transform_2, window_bounds = array<i64: 1, 64>}, {pipeline_mode = #tpu.pipeline_mode<synchronous>, transform_indices = @transform_3, window_bounds = array<i64: 64, 64>}, {pipeline_mode = #tpu.pipeline_mode<synchronous>, transform_indices = @transform_4, window_bounds = array<i64: 1, 64>}, {pipeline_mode = #tpu.pipeline_mode<synchronous>, transform_indices = @transform_5, window_bounds = array<i64: 64, 128>}, {pipeline_mode = #tpu.pipeline_mode<synchronous>, transform_indices = @transform_6, window_bounds = array<i64: 1, 128>}, {transform_indices = @transform_7, window_bounds = array<i64: 128, 128>}]} {
    %c0 = arith.constant 0 : index
    %c0_0 = arith.constant 0 : index
    %0 = vector.load %arg1[%c0, %c0_0] : memref<128x16xf32, #tpu.memory_space<vmem>>, vector<128x16xf32>
    %c0_1 = arith.constant 0 : index
    %c0_2 = arith.constant 0 : index
    %1 = vector.load %arg2[%c0_1, %c0_2] : memref<16x64xf32, #tpu.memory_space<vmem>>, vector<16x64xf32>
    %cst = arith.constant dense<0.000000e+00> : vector<128x64xf32>
    %2 = tpu.matmul %0, %1, %cst {dimension_numbers = #tpu.dot_dimension_numbers<[1], [0], [0], [1], [0, 0, 1, 1], [], []>} : vector<128x16xf32>, vector<16x64xf32>, vector<128x64xf32> -> vector<128x64xf32>
    %c0_3 = arith.constant 0 : index
    %c0_4 = arith.constant 0 : index
    %3 = vector.load %arg3[%c0_3, %c0_4] : memref<1x64xf32, #tpu.memory_space<vmem>>, vector<1x64xf32>
    %4 = vector.broadcast %3 : vector<1x64xf32> to vector<128x64xf32>
    %5 = arith.addf %2, %4 : vector<128x64xf32>
    %6 = tpu.iota {dimensions = array<i32: 1>} : vector<128x64xi32>
    %7 = math.sin %5 : vector<128x64xf32>
    %cst_5 = arith.constant 0.000000e+00 : f32
    %8 = vector.broadcast %cst_5 : f32 to vector<128x64xf32>
    %9 = arith.cmpf oge, %5, %8 : vector<128x64xf32>
    %cst_6 = arith.constant 0.00999999977 : f32
    %10 = vector.broadcast %cst_6 : f32 to vector<128x64xf32>
    %11 = arith.mulf %10, %5 : vector<128x64xf32>
    %12 = arith.select %9, %5, %11 : vector<128x64xi1>, vector<128x64xf32>
    %c32_i32 = arith.constant 32 : i32
    %13 = vector.broadcast %c32_i32 : i32 to vector<128x64xi32>
    %14 = arith.cmpi slt, %6, %13 : vector<128x64xi32>
    %15 = arith.select %14, %7, %12 : vector<128x64xi1>, vector<128x64xf32>
    %c0_7 = arith.constant 0 : index
    %c0_8 = arith.constant 0 : index
    %16 = vector.load %arg4[%c0_7, %c0_8] : memref<64x64xf32, #tpu.memory_space<vmem>>, vector<64x64xf32>
    %cst_9 = arith.constant dense<0.000000e+00> : vector<128x64xf32>
    %17 = tpu.matmul %15, %16, %cst_9 {dimension_numbers = #tpu.dot_dimension_numbers<[1], [0], [0], [1], [0, 0, 1, 1], [], []>} : vector<128x64xf32>, vector<64x64xf32>, vector<128x64xf32> -> vector<128x64xf32>
    %c0_10 = arith.constant 0 : index
    %c0_11 = arith.constant 0 : index
    %18 = vector.load %arg5[%c0_10, %c0_11] : memref<1x64xf32, #tpu.memory_space<vmem>>, vector<1x64xf32>
    %19 = vector.broadcast %18 : vector<1x64xf32> to vector<128x64xf32>
    %20 = arith.addf %17, %19 : vector<128x64xf32>
    %21 = tpu.iota {dimensions = array<i32: 1>} : vector<128x64xi32>
    %22 = math.sin %20 : vector<128x64xf32>
    %cst_12 = arith.constant 0.000000e+00 : f32
    %23 = vector.broadcast %cst_12 : f32 to vector<128x64xf32>
    %24 = arith.cmpf oge, %20, %23 : vector<128x64xf32>
    %cst_13 = arith.constant 0.00999999977 : f32
    %25 = vector.broadcast %cst_13 : f32 to vector<128x64xf32>
    %26 = arith.mulf %25, %20 : vector<128x64xf32>
    %27 = arith.select %24, %20, %26 : vector<128x64xi1>, vector<128x64xf32>
    %c32_i32_14 = arith.constant 32 : i32
    %28 = vector.broadcast %c32_i32_14 : i32 to vector<128x64xi32>
    %29 = arith.cmpi slt, %21, %28 : vector<128x64xi32>
    %30 = arith.select %29, %22, %27 : vector<128x64xi1>, vector<128x64xf32>
    %c0_15 = arith.constant 0 : index
    %c0_16 = arith.constant 0 : index
    %31 = vector.load %arg6[%c0_15, %c0_16] : memref<64x128xf32, #tpu.memory_space<vmem>>, vector<64x128xf32>
    %cst_17 = arith.constant dense<0.000000e+00> : vector<128x128xf32>
    %32 = tpu.matmul %30, %31, %cst_17 {dimension_numbers = #tpu.dot_dimension_numbers<[1], [0], [0], [1], [0, 0, 1, 1], [], []>} : vector<128x64xf32>, vector<64x128xf32>, vector<128x128xf32> -> vector<128x128xf32>
    %c0_18 = arith.constant 0 : index
    %c0_19 = arith.constant 0 : index
    %33 = vector.load %arg7[%c0_18, %c0_19] : memref<1x128xf32, #tpu.memory_space<vmem>>, vector<1x128xf32>
    %34 = vector.broadcast %33 : vector<1x128xf32> to vector<128x128xf32>
    %35 = arith.addf %32, %34 : vector<128x128xf32>
    %c0_20 = arith.constant 0 : index
    %c0_21 = arith.constant 0 : index
    %36 = vector.load %arg8[%c0_20, %c0_21] : memref<128x128xf32, #tpu.memory_space<vmem>>, vector<128x128xf32>
    tpu.vector_store %arg8[%c0_20, %c0_21], %35 {strides = array<i32>} : memref<128x128xf32, #tpu.memory_space<vmem>>, vector<128x128xf32>,
    return
  }
  func.func @transform_0(%arg0: i32) -> (i32, i32) {
    %c0_i32 = arith.constant 0 : i32
    %c0_i32_0 = arith.constant 0 : i32
    return %arg0, %c0_i32 : i32, i32
  }
  func.func @transform_1(%arg0: i32) -> (i32, i32) {
    %c0_i32 = arith.constant 0 : i32
    %c0_i32_0 = arith.constant 0 : i32
    %c0_i32_1 = arith.constant 0 : i32
    return %c0_i32, %c0_i32_0 : i32, i32
  }
  func.func @transform_2(%arg0: i32) -> (i32, i32) {
    %c0_i32 = arith.constant 0 : i32
    %c0_i32_0 = arith.constant 0 : i32
    %c0_i32_1 = arith.constant 0 : i32
    return %c0_i32, %c0_i32_0 : i32, i32
  }
  func.func @transform_3(%arg0: i32) -> (i32, i32) {
    %c0_i32 = arith.constant 0 : i32
    %c0_i32_0 = arith.constant 0 : i32
    %c0_i32_1 = arith.constant 0 : i32
    return %c0_i32, %c0_i32_0 : i32, i32
  }
  func.func @transform_4(%arg0: i32) -> (i32, i32) {
    %c0_i32 = arith.constant 0 : i32
    %c0_i32_0 = arith.constant 0 : i32
    %c0_i32_1 = arith.constant 0 : i32
    return %c0_i32, %c0_i32_0 : i32, i32
  }
  func.func @transform_5(%arg0: i32) -> (i32, i32) {
    %c0_i32 = arith.constant 0 : i32
    %c0_i32_0 = arith.constant 0 : i32
    %c0_i32_1 = arith.constant 0 : i32
    return %c0_i32, %c0_i32_0 : i32, i32
  }
  func.func @transform_6(%arg0: i32) -> (i32, i32) {
    %c0_i32 = arith.constant 0 : i32
    %c0_i32_0 = arith.constant 0 : i32
    %c0_i32_1 = arith.constant 0 : i32
    return %c0_i32, %c0_i32_0 : i32, i32
  }
  func.func @transform_7(%arg0: i32) -> (i32, i32) {
    %c0_i32 = arith.constant 0 : i32
    %c0_i32_0 = arith.constant 0 : i32
    return %arg0, %c0_i32 : i32, i32
  }
}

</mosaic_0001>

<llo_original>
// kernel: tpu_custom_call.1
$region0: #{tpu_custom_call.1}
  #allocation0 [shape = 'u32[]', space=smem, size = 0x4, offset = 0x4, fixed_abs, tag = 'smem constant byte address 0x4 - core index']
  #allocation1 [shape = 'u32[144,128]{1,0:T(1,128)}', space=vmem, size = 0x12000, scoped, tag = 'internal scratch']
  %s0 = inlined_call_operand.vmem [shape: f32[256,16], index: 0, kind: input, shape index: {}]
  %s1 = inlined_call_operand.vmem [shape: f32[16,64], index: 1, kind: input, shape index: {}]
  %s2 = inlined_call_operand.vmem [shape: f32[1,64], index: 2, kind: input, shape index: {}]
  %s3 = inlined_call_operand.vmem [shape: f32[64,64], index: 3, kind: input, shape index: {}]
  %s4 = inlined_call_operand.vmem [shape: f32[1,64], index: 4, kind: input, shape index: {}]
  %s5 = inlined_call_operand.vmem [shape: f32[64,128], index: 5, kind: input, shape index: {}]
  %s6 = inlined_call_operand.vmem [shape: f32[1,128], index: 6, kind: input, shape index: {}]
  %s7 = inlined_call_operand.hbm [shape: f32[256,128], index: 7, kind: output, shape index: {}]
  %s8 = sld [smem:[#allocation0]]
  $region61: #{tpu_custom_call.1} parent=0
    _
  %s10 = ssub.s32 1, %s8
  %s11 = scalar_select 0, %s10, %s8
  $region1: #{tpu_custom_call.1} parent=0
    #allocation2 [shape = 'u8[131072]{0}', space=vmem, size = 0x20000, scoped, tag = 'output window, operand 0']
    #allocation3 [shape = 's32[2]{0}', space=sflag, size = 0x8, scoped, tag = 'scoped memory for tpu_custom_call.1']
    %12 = vsyncpa [#allocation3], 0
    %s13 = scalar_lea.sflag [#allocation3], 1
    %14 = vsyncpa %s13, 0
    loop: start=0, step=1, limit=4
    $region2: #{tpu_custom_call.1} parent=1 // loop_pre_header
      _
    $region3: #{tpu_custom_call.1} parent=1 // loop_header
      %s16 = sphi 0, %s20
      %p17 = scmp.ge.s32.totalorder %s16, 4
      %s26 = sphi 0, %s28
      %s29 = sphi 0, %s26
      %s30 = sphi 0, %s29
      %s46 = sphi 0, %s30
      %s50 = sphi 0, %s50
      %s52 = sphi 0, %s50
      %s53 = sphi 0, %s52
      %s67 = sphi 0, %s53
      %s71 = sphi 0, %s71
      %s73 = sphi 0, %s71
      %s74 = sphi 0, %s73
      %s88 = sphi 0, %s74
      %s92 = sphi 0, %s92
      %s94 = sphi 0, %s92
      %s95 = sphi 0, %s94
      %s109 = sphi 0, %s95
      %s113 = sphi 0, %s113
      %s115 = sphi 0, %s113
      %s116 = sphi 0, %s115
      %s130 = sphi 0, %s116
      %s134 = sphi 0, %s134
      %s136 = sphi 0, %s134
      %s137 = sphi 0, %s136
      %s151 = sphi 0, %s137
      %s155 = sphi 0, %s155
      %s157 = sphi 0, %s155
      %s158 = sphi 0, %s157
      %s172 = sphi 0, %s158
      %s178 = sphi 0, %s180
      %s181 = sphi 0, %s178
      %s182 = sphi 0, %s181
      %s198 = sphi 0, %s182
    $region4: #{tpu_custom_call.1} parent=1 // loop_header_branch
      %19 = sbr.rel (%p17) target = $region8
    $region5: #{tpu_custom_call.1} parent=1 // loop_body
      %s21 = ssub.s32 %s16, 1
      %s22 = ssub.s32 %s16, 2
      %s23 = sadd.s32 %s16, 1
      %s24 = ssub.s32 %s16, %s23
      %p25 = scmp.eq.s32.totalorder %s24, 0
      %s27 = sadd.s32 %s26, 1
      %s28 = scalar_select %p25, %s26, %s27
      %p31 = pneg %p25
      %p32 = scmp.eq.s32.totalorder %s16, 1
      %p33 = por %p31, %p32
      %p34 = scmp.ne.s32.totalorder %s26, %s29
      %p35 = scmp.eq.s32.totalorder %s16, 0
      %p36 = por %p34, %p35
      %p37 = scmp.ne.s32.totalorder %s26, %s29
      %p38 = scmp.eq.s32.totalorder %s21, 1
      %p39 = por %p37, %p38
      %p40 = scmp.ne.s32.totalorder %s29, %s30
      %p41 = scmp.eq.s32.totalorder %s21, 0
      %p42 = por %p40, %p41
      %p43 = scmp.ne.s32.totalorder %s29, %s30
      %p44 = scmp.eq.s32.totalorder %s22, 1
      %p45 = por %p43, %p44
      %p47 = scmp.ne.s32.totalorder %s30, %s46
      %p48 = scmp.eq.s32.totalorder %s22, 0
      %p49 = por %p47, %p48
      %s51 = sadd.s32 %s50, 1
      %p54 = scmp.eq.s32.totalorder %s16, 1
      %p55 = scmp.ne.s32.totalorder %s50, %s52
      %p56 = scmp.eq.s32.totalorder %s16, 0
      %p57 = por %p55, %p56
      %p58 = scmp.ne.s32.totalorder %s50, %s52
      %p59 = scmp.eq.s32.totalorder %s21, 1
      %p60 = por %p58, %p59
      %p61 = scmp.ne.s32.totalorder %s52, %s53
      %p62 = scmp.eq.s32.totalorder %s21, 0
      %p63 = por %p61, %p62
      %p64 = scmp.ne.s32.totalorder %s52, %s53
      %p65 = scmp.eq.s32.totalorder %s22, 1
      %p66 = por %p64, %p65
      %p68 = scmp.ne.s32.totalorder %s53, %s67
      %p69 = scmp.eq.s32.totalorder %s22, 0
      %p70 = por %p68, %p69
      %s72 = sadd.s32 %s71, 1
      %p75 = scmp.eq.s32.totalorder %s16, 1
      %p76 = scmp.ne.s32.totalorder %s71, %s73
      %p77 = scmp.eq.s32.totalorder %s16, 0
      %p78 = por %p76, %p77
      %p79 = scmp.ne.s32.totalorder %s71, %s73
      %p80 = scmp.eq.s32.totalorder %s21, 1
      %p81 = por %p79, %p80
      %p82 = scmp.ne.s32.totalorder %s73, %s74
      %p83 = scmp.eq.s32.totalorder %s21, 0
      %p84 = por %p82, %p83
      %p85 = scmp.ne.s32.totalorder %s73, %s74
      %p86 = scmp.eq.s32.totalorder %s22, 1
      %p87 = por %p85, %p86
      %p89 = scmp.ne.s32.totalorder %s74, %s88
      %p90 = scmp.eq.s32.totalorder %s22, 0
      %p91 = por %p89, %p90
      %s93 = sadd.s32 %s92, 1
      %p96 = scmp.eq.s32.totalorder %s16, 1
      %p97 = scmp.ne.s32.totalorder %s92, %s94
      %p98 = scmp.eq.s32.totalorder %s16, 0
      %p99 = por %p97, %p98
      %p100 = scmp.ne.s32.totalorder %s92, %s94
      %p101 = scmp.eq.s32.totalorder %s21, 1
      %p102 = por %p100, %p101
      %p103 = scmp.ne.s32.totalorder %s94, %s95
      %p104 = scmp.eq.s32.totalorder %s21, 0
      %p105 = por %p103, %p104
      %p106 = scmp.ne.s32.totalorder %s94, %s95
      %p107 = scmp.eq.s32.totalorder %s22, 1
      %p108 = por %p106, %p107
      %p110 = scmp.ne.s32.totalorder %s95, %s109
      %p111 = scmp.eq.s32.totalorder %s22, 0
      %p112 = por %p110, %p111
      %s114 = sadd.s32 %s113, 1
      %p117 = scmp.eq.s32.totalorder %s16, 1
      %p118 = scmp.ne.s32.totalorder %s113, %s115
      %p119 = scmp.eq.s32.totalorder %s16, 0
      %p120 = por %p118, %p119
      %p121 = scmp.ne.s32.totalorder %s113, %s115
      %p122 = scmp.eq.s32.totalorder %s21, 1
      %p123 = por %p121, %p122
      %p124 = scmp.ne.s32.totalorder %s115, %s116
      %p125 = scmp.eq.s32.totalorder %s21, 0
      %p126 = por %p124, %p125
      %p127 = scmp.ne.s32.totalorder %s115, %s116
      %p128 = scmp.eq.s32.totalorder %s22, 1
      %p129 = por %p127, %p128
      %p131 = scmp.ne.s32.totalorder %s116, %s130
      %p132 = scmp.eq.s32.totalorder %s22, 0
      %p133 = por %p131, %p132
      %s135 = sadd.s32 %s134, 1
      %p138 = scmp.eq.s32.totalorder %s16, 1
      %p139 = scmp.ne.s32.totalorder %s134, %s136
      %p140 = scmp.eq.s32.totalorder %s16, 0
      %p141 = por %p139, %p140
      %p142 = scmp.ne.s32.totalorder %s134, %s136
      %p143 = scmp.eq.s32.totalorder %s21, 1
      %p144 = por %p142, %p143
      %p145 = scmp.ne.s32.totalorder %s136, %s137
      %p146 = scmp.eq.s32.totalorder %s21, 0
      %p147 = por %p145, %p146
      %p148 = scmp.ne.s32.totalorder %s136, %s137
      %p149 = scmp.eq.s32.totalorder %s22, 1
      %p150 = por %p148, %p149
      %p152 = scmp.ne.s32.totalorder %s137, %s151
      %p153 = scmp.eq.s32.totalorder %s22, 0
      %p154 = por %p152, %p153
      %s156 = sadd.s32 %s155, 1
      %p159 = scmp.eq.s32.totalorder %s16, 1
      %p160 = scmp.ne.s32.totalorder %s155, %s157
      %p161 = scmp.eq.s32.totalorder %s16, 0
      %p162 = por %p160, %p161
      %p163 = scmp.ne.s32.totalorder %s155, %s157
      %p164 = scmp.eq.s32.totalorder %s21, 1
      %p165 = por %p163, %p164
      %p166 = scmp.ne.s32.totalorder %s157, %s158
      %p167 = scmp.eq.s32.totalorder %s21, 0
      %p168 = por %p166, %p167
      %p169 = scmp.ne.s32.totalorder %s157, %s158
      %p170 = scmp.eq.s32.totalorder %s22, 1
      %p171 = por %p169, %p170
      %p173 = scmp.ne.s32.totalorder %s158, %s172
      %p174 = scmp.eq.s32.totalorder %s22, 0
      %p175 = por %p173, %p174
      %s176 = ssub.s32 %s16, %s23
      %p177 = scmp.eq.s32.totalorder %s176, 0
      %s179 = sadd.s32 %s178, 1
      %s180 = scalar_select %p177, %s178, %s179
      %p183 = pneg %p177
      %p184 = scmp.eq.s32.totalorder %s16, 1
      %p185 = por %p183, %p184
      %p186 = scmp.ne.s32.totalorder %s178, %s181
      %p187 = scmp.eq.s32.totalorder %s16, 0
      %p188 = por %p186, %p187
      %p189 = scmp.ne.s32.totalorder %s178, %s181
      %p190 = scmp.eq.s32.totalorder %s21, 1
      %p191 = por %p189, %p190
      %p192 = scmp.ne.s32.totalorder %s181, %s182
      %p193 = scmp.eq.s32.totalorder %s21, 0
      %p194 = por %p192, %p193
      %p195 = scmp.ne.s32.totalorder %s181, %s182
      %p196 = scmp.eq.s32.totalorder %s22, 1
      %p197 = por %p195, %p196
      %p199 = scmp.ne.s32.totalorder %s182, %s198
      %p200 = scmp.eq.s32.totalorder %s22, 0
      %p201 = por %p199, %p200
      %p202 = scmp.le.s32.totalorder 1, %s16
      %p203 = scmp.lt.s32.totalorder %s16, 3
      %p204 = pnand %p202, %p203
      %p205 = pneg %p204
      // Predicated region
      $region9: #{tpu_custom_call.1} parent=5 // pred_check
        _
      $region10: #{tpu_custom_call.1} parent=5 // pred_check_branch
        %207 = sbr.rel (%p204) target = $region12
      $region11: #{tpu_custom_call.1} parent=5 // pred_region
        %s208 = ssub.s32 %s16, 1
        // Predicated region
        $region13: #{tpu_custom_call.1} parent=11 // pred_check
          %p209 = pneg %p63
        $region14: #{tpu_custom_call.1} parent=11 // pred_check_branch
          %211 = sbr.rel (%p209) target = $region16
        $region15: #{tpu_custom_call.1} parent=11 // pred_region
          _
        $region16: #{tpu_custom_call.1} parent=11 // pred_fallthru
          _
        // Predicated region
        $region17: #{tpu_custom_call.1} parent=11 // pred_check
          %p212 = pneg %p84
        $region18: #{tpu_custom_call.1} parent=11 // pred_check_branch
          %214 = sbr.rel (%p212) target = $region20
        $region19: #{tpu_custom_call.1} parent=11 // pred_region
          _
        $region20: #{tpu_custom_call.1} parent=11 // pred_fallthru
          _
        // Predicated region
        $region21: #{tpu_custom_call.1} parent=11 // pred_check
          %p215 = pneg %p105
        $region22: #{tpu_custom_call.1} parent=11 // pred_check_branch
          %217 = sbr.rel (%p215) target = $region24
        $region23: #{tpu_custom_call.1} parent=11 // pred_region
          _
        $region24: #{tpu_custom_call.1} parent=11 // pred_fallthru
          _
        // Predicated region
        $region25: #{tpu_custom_call.1} parent=11 // pred_check
          %p218 = pneg %p126
        $region26: #{tpu_custom_call.1} parent=11 // pred_check_branch
          %220 = sbr.rel (%p218) target = $region28
        $region27: #{tpu_custom_call.1} parent=11 // pred_region
          _
        $region28: #{tpu_custom_call.1} parent=11 // pred_fallthru
          _
        // Predicated region
        $region29: #{tpu_custom_call.1} parent=11 // pred_check
          %p221 = pneg %p147
        $region30: #{tpu_custom_call.1} parent=11 // pred_check_branch
          %223 = sbr.rel (%p221) target = $region32
        $region31: #{tpu_custom_call.1} parent=11 // pred_region
          _
        $region32: #{tpu_custom_call.1} parent=11 // pred_fallthru
          _
        // Predicated region
        $region33: #{tpu_custom_call.1} parent=11 // pred_check
          %p224 = pneg %p168
        $region34: #{tpu_custom_call.1} parent=11 // pred_check_branch
          %226 = sbr.rel (%p224) target = $region36
        $region35: #{tpu_custom_call.1} parent=11 // pred_region
          _
        $region36: #{tpu_custom_call.1} parent=11 // pred_fallthru
          _
      $region12: #{tpu_custom_call.1} parent=5 // pred_fallthru
        _
      %p227 = scmp.lt.s32.totalorder %s16, 2
      // Predicated region
      $region37: #{tpu_custom_call.1} parent=5 // pred_check
        %p228 = pneg %p227
      $region38: #{tpu_custom_call.1} parent=5 // pred_check_branch
        %230 = sbr.rel (%p228) target = $region40
      $region39: #{tpu_custom_call.1} parent=5 // pred_region
        // Predicated region
        $region41: #{tpu_custom_call.1} parent=39 // pred_check
          %p231 = pneg %p36
        $region42: #{tpu_custom_call.1} parent=39 // pred_check_branch
          %233 = sbr.rel (%p231) target = $region44
        $region43: #{tpu_custom_call.1} parent=39 // pred_region
          %s234 = smul.u32 16, %s16
          %p235 = scmp.lt.s32.totalorder %s234, 31
          %s236 = scalar_select %p235, %s234, 31
          %s237 = smul.addr %s236, 8
          %s238 = scalar_lea.vmem %s0, %s237
          %s239 = smul.u32 16, %s16
        $region44: #{tpu_custom_call.1} parent=39 // pred_fallthru
          _
      $region40: #{tpu_custom_call.1} parent=5 // pred_fallthru
        _
      %p240 = scmp.le.s32.totalorder 1, %s16
      %p241 = scmp.lt.s32.totalorder %s16, 3
      %p242 = pnand %p240, %p241
      %p243 = pneg %p242
      // Predicated region
      $region45: #{tpu_custom_call.1} parent=5 // pred_check
        _
      $region46: #{tpu_custom_call.1} parent=5 // pred_check_branch
        %245 = sbr.rel (%p242) target = $region48
      $region47: #{tpu_custom_call.1} parent=5 // pred_region
        %s246 = ssub.s32 %s16, 1
        %s247 = smul.u32 16, %s21
        %p248 = scmp.lt.s32.totalorder %s247, 31
        %s249 = scalar_select %p248, %s247, 31
        %s250 = smul.addr %s249, 8
        %s251 = scalar_lea.vmem %s0, %s250
        %p252 = pneg %p42
        %p253 = pneg %p39
        %p254 = pneg %p63
        %p255 = pneg %p60
        %p256 = pneg %p84
        %p257 = pneg %p81
        %p258 = pneg %p105
        %p259 = pneg %p102
        %p260 = pneg %p126
        %p261 = pneg %p123
        %p262 = pneg %p147
        %p263 = pneg %p144
        %p264 = pneg %p168
        %p265 = pneg %p165
        %p266 = pneg %p194
        %p267 = pneg %p191
        %s268 = sand.u32 %s181, 1
        %s269 = scalar_lea.sflag [#allocation3], %s268
        %s270 = sand.u32 %s181, 1
        %s271 = smul.addr %s270, 128
        %s272 = scalar_lea.vmem [#allocation2], %s271
        %s273 = smul.u32 16, %s21
        %p274 = scmp.lt.s32.totalorder %s273, 31
        %s275 = scalar_select %p274, %s273, 31
        %s276 = smul.addr %s275, 8
        %s277 = scalar_lea.vmem %s0, %s276
        %s278 = smul.u32 16, %s21
        %s279 = smul.u32 16, %s21
        %v280 = vld [vmem:[%s277] sm:$0xff]
        %v281 = vld [vmem:[%s277 + $0x8] sm:$0xff]
        %v282 = vld [vmem:[%s277 + $0x10] sm:$0xff]
        %v283 = vld [vmem:[%s277 + $0x18] sm:$0xff]
        %v284 = vld [vmem:[%s277 + $0x20] sm:$0xff]
        %v285 = vld [vmem:[%s277 + $0x28] sm:$0xff]
        %v286 = vld [vmem:[%s277 + $0x30] sm:$0xff]
        %v287 = vld [vmem:[%s277 + $0x38] sm:$0xff]
        %v288 = vld [vmem:[%s277 + $0x40] sm:$0xff]
        %v289 = vld [vmem:[%s277 + $0x48] sm:$0xff]
        %v290 = vld [vmem:[%s277 + $0x50] sm:$0xff]
        %v291 = vld [vmem:[%s277 + $0x58] sm:$0xff]
        %v292 = vld [vmem:[%s277 + $0x60] sm:$0xff]
        %v293 = vld [vmem:[%s277 + $0x68] sm:$0xff]
        %v294 = vld [vmem:[%s277 + $0x70] sm:$0xff]
        %v295 = vld [vmem:[%s277 + $0x78] sm:$0xff]
        %v296 = vld [vmem:[%s1] sm:$0xff]
        %v297 = vld [vmem:[%s1 + $0x8] sm:$0xff]
        %v298 = vld [vmem:[%s2] sm:$0x1]
        %v300 = vlaneseq
        %v301 = vshrl.u32 %v300, 7
        %v302 = vsub.s32 0, %v301
        %v303 = vrot.slane %v298, %v302
        %vm305 = vcmask 130048
        %v307 = vsel %vm305, %v280, 0
        %v310 = vsel %vm305, %v281, 0
        %v313 = vsel %vm305, %v282, 0
        %v316 = vsel %vm305, %v283, 0
        %v319 = vsel %vm305, %v284, 0
        %v322 = vsel %vm305, %v285, 0
        %v325 = vsel %vm305, %v286, 0
        %v328 = vsel %vm305, %v287, 0
        %v331 = vsel %vm305, %v288, 0
        %v334 = vsel %vm305, %v289, 0
        %v337 = vsel %vm305, %v290, 0
        %v340 = vsel %vm305, %v291, 0
        %v343 = vsel %vm305, %v292, 0
        %v346 = vsel %vm305, %v293, 0
        %v349 = vsel %vm305, %v294, 0
        %v352 = vsel %vm305, %v295, 0
        %354 = vmatprep.subr.mxu0 0.0
        %355 = vmatpush1.msra.mxu0 0.0
        %356 = vmatprep.subr.mxu0 0.0
        %357 = vmatpush1.msra.mxu0 0.0
        %358 = vmatprep.subr.mxu0 0.0
        %359 = vmatpush1.msra.mxu0 0.0
        %360 = vmatprep.subr.mxu0 0.0
        %361 = vmatpush1.msra.mxu0 0.0
        %362 = vmatprep.subr.mxu0 0.0
        %363 = vmatpush1.msra.mxu0 0.0
        %364 = vmatprep.subr.mxu0 0.0
        %365 = vmatpush1.msra.mxu0 0.0
        %366 = vmatprep.subr.mxu0 0.0
        %367 = vmatpush1.msra.mxu0 0.0
        %368 = vmatprep.subr.mxu0 0.0
        %369 = vmatpush1.msra.mxu0 0.0
        %370 = vmatprep.subr.mxu0 0.0
        %371 = vmatpush1.msra.mxu0 0.0
        %372 = vmatprep.subr.mxu0 0.0
        %373 = vmatpush1.msra.mxu0 0.0
        %374 = vmatprep.subr.mxu0 0.0
        %375 = vmatpush1.msra.mxu0 0.0
        %376 = vmatprep.subr.mxu0 0.0
        %377 = vmatpush1.msra.mxu0 0.0
        %378 = vmatprep.subr.mxu0 0.0
        %379 = vmatpush1.msra.mxu0 0.0
        %380 = vmatprep.subr.mxu0 0.0
        %381 = vmatpush1.msra.mxu0 0.0
        %382 = vmatprep.subr.mxu0 0.0
        %383 = vmatpush1.msra.mxu0 %v297
        %384 = vmatprep.subr.mxu0 0.0
        %385 = vmatpush1.msra.mxu0 %v296
        %386 = vmatprep.subr.mxu0 0.0
        %387 = vmatpush2.msra.mxu0 0.0
        %388 = vmatprep.subr.mxu0 0.0
        %389 = vmatpush2.msra.mxu0 0.0
        %390 = vmatprep.subr.mxu0 0.0
        %391 = vmatpush2.msra.mxu0 0.0
        %392 = vmatprep.subr.mxu0 0.0
        %393 = vmatpush2.msra.mxu0 0.0
        %394 = vmatprep.subr.mxu0 0.0
        %395 = vmatpush2.msra.mxu0 0.0
        %396 = vmatprep.subr.mxu0 0.0
        %397 = vmatpush2.msra.mxu0 0.0
        %398 = vmatprep.subr.mxu0 0.0
        %399 = vmatpush2.msra.mxu0 0.0
        %400 = vmatprep.subr.mxu0 0.0
        %401 = vmatpush2.msra.mxu0 0.0
        %402 = vmatprep.subr.mxu0 0.0
        %403 = vmatpush2.msra.mxu0 0.0
        %404 = vmatprep.subr.mxu0 0.0
        %405 = vmatpush2.msra.mxu0 0.0
        %406 = vmatprep.subr.mxu0 0.0
        %407 = vmatpush2.msra.mxu0 0.0
        %408 = vmatprep.subr.mxu0 0.0
        %409 = vmatpush2.msra.mxu0 0.0
        %410 = vmatprep.subr.mxu0 0.0
        %411 = vmatpush2.msra.mxu0 0.0
        %412 = vmatprep.subr.mxu0 0.0
        %413 = vmatpush2.msra.mxu0 0.0
        %414 = vmatprep.subr.mxu0 0.0
        %415 = vmatpush2.msra.mxu0 0.0
        %416 = vmatprep.subr.mxu0 0.0
        %417 = vmatpush2.msra.mxu0 0.0
        %418 = vmatprep.mubr.f32.mxu0 0.0
        %419 = vmatmul.mubr.f32.gmra.mxu0 %v307
        %v420 = vpop.f32.mrf.mxu0
        %v421 = vadd.f32 %v303, %v420
        %v422 = vpop.f32.mrf.mxu0
        %423 = vmatprep.mubr.f32.mxu0 0.0
        %424 = vmatmul.mubr.f32.gmra.mxu0 %v310
        %v425 = vpop.f32.mrf.mxu0
        %v426 = vadd.f32 %v303, %v425
        %v427 = vpop.f32.mrf.mxu0
        %428 = vmatprep.mubr.f32.mxu0 0.0
        %429 = vmatmul.mubr.f32.gmra.mxu0 %v313
        %v430 = vpop.f32.mrf.mxu0
        %v431 = vadd.f32 %v303, %v430
        %v432 = vpop.f32.mrf.mxu0
        %433 = vmatprep.mubr.f32.mxu0 0.0
        %434 = vmatmul.mubr.f32.gmra.mxu0 %v316
        %v435 = vpop.f32.mrf.mxu0
        %v436 = vadd.f32 %v303, %v435
        %v437 = vpop.f32.mrf.mxu0
        %438 = vmatprep.mubr.f32.mxu0 0.0
        %439 = vmatmul.mubr.f32.gmra.mxu0 %v319
        %v440 = vpop.f32.mrf.mxu0
        %v441 = vadd.f32 %v303, %v440
        %v442 = vpop.f32.mrf.mxu0
        %443 = vmatprep.mubr.f32.mxu0 0.0
        %444 = vmatmul.mubr.f32.gmra.mxu0 %v322
        %v445 = vpop.f32.mrf.mxu0
        %v446 = vadd.f32 %v303, %v445
        %v447 = vpop.f32.mrf.mxu0
        %448 = vmatprep.mubr.f32.mxu0 0.0
        %449 = vmatmul.mubr.f32.gmra.mxu0 %v325
        %v450 = vpop.f32.mrf.mxu0
        %v451 = vadd.f32 %v303, %v450
        %v452 = vpop.f32.mrf.mxu0
        %453 = vmatprep.mubr.f32.mxu0 0.0
        %454 = vmatmul.mubr.f32.gmra.mxu0 %v328
        %v455 = vpop.f32.mrf.mxu0
        %v456 = vadd.f32 %v303, %v455
        %v457 = vpop.f32.mrf.mxu0
        %458 = vmatprep.mubr.f32.mxu0 0.0
        %459 = vmatmul.mubr.f32.gmra.mxu0 %v331
        %v460 = vpop.f32.mrf.mxu0
        %v461 = vadd.f32 %v303, %v460
        %v462 = vpop.f32.mrf.mxu0
        %463 = vmatprep.mubr.f32.mxu0 0.0
        %464 = vmatmul.mubr.f32.gmra.mxu0 %v334
        %v465 = vpop.f32.mrf.mxu0
        %v466 = vadd.f32 %v303, %v465
        %v467 = vpop.f32.mrf.mxu0
        %468 = vmatprep.mubr.f32.mxu0 0.0
        %469 = vmatmul.mubr.f32.gmra.mxu0 %v337
        %v470 = vpop.f32.mrf.mxu0
        %v471 = vadd.f32 %v303, %v470
        %v472 = vpop.f32.mrf.mxu0
        %473 = vmatprep.mubr.f32.mxu0 0.0
        %474 = vmatmul.mubr.f32.gmra.mxu0 %v340
        %v475 = vpop.f32.mrf.mxu0
        %v476 = vadd.f32 %v303, %v475
        %v477 = vpop.f32.mrf.mxu0
        %478 = vmatprep.mubr.f32.mxu0 0.0
        %479 = vmatmul.mubr.f32.gmra.mxu0 %v343
        %v480 = vpop.f32.mrf.mxu0
        %v481 = vadd.f32 %v303, %v480
        %v482 = vpop.f32.mrf.mxu0
        %483 = vmatprep.mubr.f32.mxu0 0.0
        %484 = vmatmul.mubr.f32.gmra.mxu0 %v346
        %v485 = vpop.f32.mrf.mxu0
        %v486 = vadd.f32 %v303, %v485
        %v487 = vpop.f32.mrf.mxu0
        %488 = vmatprep.mubr.f32.mxu0 0.0
        %489 = vmatmul.mubr.f32.gmra.mxu0 %v349
        %v490 = vpop.f32.mrf.mxu0
        %v491 = vadd.f32 %v303, %v490
        %v492 = vpop.f32.mrf.mxu0
        %493 = vmatprep.mubr.f32.mxu0 0.0
        %494 = vmatmul.mubr.f32.gmra.mxu0 %v352
        %v495 = vpop.f32.mrf.mxu0
        %v496 = vadd.f32 %v303, %v495
        %v497 = vpop.f32.mrf.mxu0
        %498 = vdwg.mxu0
        %v499 = vlaneseq
        %v500 = vand.u32 %v499, 127
        %v501 = vand.u32 2147483647, %v421
        %vm502 = vcmp.le.f32.partialorder %v501, 0.7853982
        %vm503 = vcmp.lt.s32.totalorder %v421, 0
        %v504 = vand.u32 %v421, 2139095040
        %v505 = vshrl.u32 %v504, 23
        %v506 = vsub.s32 %v505, 127
        %v507 = vand.u32 2147483647, %v421
        %v508 = vand.u32 %v507, 8388607
        %v509 = vor.u32 %v508, 8388608
        %v510 = vsub.s32 0, %v509
        %v511 = vadd.s32 %v506, 1
        %vm512 = vcmp.gt.s32.totalorder %v511, 0
        %v513 = vsel %vm512, %v511, 0
        %v514 = vshrl.u32 %v513, 5
        %v515 = vand.u32 %v513, 31
        %v516 = vsub.s32 32, %v515
        %v517 = vshrl.u32 683565275, %v516
        %v518 = vshll.u32 683565275, %v515
        %v519 = vshrl.u32 2475754826, %v516
        %v520 = vor.u32 %v518, %v519
        %v521 = vshll.u32 2475754826, %v515
        %v522 = vshrl.u32 2131351028, %v516
        %v523 = vor.u32 %v521, %v522
        %v524 = vshll.u32 2131351028, %v515
        %v525 = vshrl.u32 2102212464, %v516
        %v526 = vor.u32 %v524, %v525
        %v527 = vshll.u32 2102212464, %v515
        %v528 = vshrl.u32 920167782, %v516
        %v529 = vor.u32 %v527, %v528
        %v530 = vshll.u32 920167782, %v515
        %v531 = vshrl.u32 1326507024, %v516
        %v532 = vor.u32 %v530, %v531
        %vm533 = vcmp.lt.s32.totalorder %v514, 1
        %vm534 = vcmp.lt.s32.totalorder %v514, 2
        %vm535 = vcmp.lt.s32.totalorder %v514, 3
        %vm536 = vcmp.lt.s32.totalorder %v514, 4
        %v537 = vsel %vm533, %v517, %v520
        %v538 = vsel %vm536, %v526, 2102212464
        %v539 = vsel %vm535, %v523, %v538
        %v540 = vsel %vm534, %v537, %v539
        %v541 = vsel %vm533, %v520, %v523
        %v542 = vsel %vm536, %v529, 920167782
        %v543 = vsel %vm535, %v526, %v542
        %v544 = vsel %vm534, %v541, %v543
        %v545 = vsel %vm533, %v523, %v526
        %v546 = vsel %vm536, %v532, 1326507024
        %v547 = vsel %vm535, %v529, %v546
        %v548 = vsel %vm534, %v545, %v547
        %v549 = vshll.u32 %v509, 8
        %v550 = vmul.u32.u64.compose %v549, %v548
        %v551 = vextract.low.u32 %v550
        %v552 = vextract.high.u32 %v550
        %v553 = vmul.u32.u64.compose %v549, %v544
        %v554 = vextract.low.u32 %v553
        %v555 = vextract.high.u32 %v553
        %v556 = vmul.u32 %v549, %v540
        %v557 = vadd.s32 %v552, %v554
        %vm558 = vc.u32 %v552, %v554
        %v559 = vadd.s32 %v555, 1
        %v560 = vsel %vm558, %v559, %v555
        %v561 = vadd.s32 %v556, %v560
        %v562 = vadd.s32 %v561, 536870912
        %v563 = vshrl.u32 %v562, 30
        %v564 = vshll.u32 %v563, 30
        %v565 = vsub.s32 %v561, %v564
        %vm566 = vcmp.lt.s32.totalorder %v565, 0
        %v567 = vsub.s32 0, %v565
        %v568 = vsel %vm566, %v567, %v565
        %v569 = vclz %v568
        %v570 = vsub.s32 %v569, 2
        %vm571 = vcmp.gt.s32.totalorder 0, %v570
        %v572 = vsel %vm571, 0, %v570
        %v573 = vsub.s32 32, %v572
        %v574 = vshll.u32 %v565, %v572
        %v575 = vshrl.u32 %v557, %v573
        %v576 = vor.u32 %v574, %v575
        %v577 = vsub.s32 4294967266, %v572
        %v578 = vadd.s32 %v577, 127
        %v579 = vshll.u32 %v578, 23
        %v580 = vor.u32 4788187, %v579
        %v581 = vand.u32 2147483647, %v580
        %v583 = vcvt.s32.f32 %v576
        %v584 = vmul.f32 %v583, %v581
        %v585 = vxor.u32 %v584, 2147483648
        %v586 = vsel %vm503, %v585, %v584
        %v587 = vsub.s32 4, %v563
        %v588 = vsel %vm503, %v587, %v563
        %v589 = vsel %vm502, %v421, %v586
        %v590 = vsel %vm502, 0, %v588
        %v591 = vcosq.f32.pop %v589
        %v592 = vsinq.f32.pop %v589
        %vm593 = vweird.f32 %v421
        %v594 = vadd.s32 %v590, 3
        %v595 = vand.u32 %v594, 3
        %vm596 = vcmp.lt.s32.totalorder %v595, 2
        %vm597 = vcmp.eq.s32.totalorder %v595, 0
        %v598 = vxor.u32 %v592, 2147483648
        %v599 = vsel %vm597, %v591, %v598
        %vm600 = vcmp.eq.s32.totalorder %v595, 2
        %v601 = vxor.u32 %v591, 2147483648
        %v602 = vsel %vm600, %v601, %v592
        %v603 = vsel %vm596, %v599, %v602
        %v604 = vsel %vm593, nan, %v603
        %v605 = vand.u32 2147483647, %v426
        %vm606 = vcmp.le.f32.partialorder %v605, 0.7853982
        %vm607 = vcmp.lt.s32.totalorder %v426, 0
        %v608 = vand.u32 %v426, 2139095040
        %v609 = vshrl.u32 %v608, 23
        %v610 = vsub.s32 %v609, 127
        %v611 = vand.u32 2147483647, %v426
        %v612 = vand.u32 %v611, 8388607
        %v613 = vor.u32 %v612, 8388608
        %v614 = vsub.s32 0, %v613
        %v615 = vadd.s32 %v610, 1
        %vm616 = vcmp.gt.s32.totalorder %v615, 0
        %v617 = vsel %vm616, %v615, 0
        %v618 = vshrl.u32 %v617, 5
        %v619 = vand.u32 %v617, 31
        %v620 = vsub.s32 32, %v619
        %v621 = vshrl.u32 683565275, %v620
        %v622 = vshll.u32 683565275, %v619
        %v623 = vshrl.u32 2475754826, %v620
        %v624 = vor.u32 %v622, %v623
        %v625 = vshll.u32 2475754826, %v619
        %v626 = vshrl.u32 2131351028, %v620
        %v627 = vor.u32 %v625, %v626
        %v628 = vshll.u32 2131351028, %v619
        %v629 = vshrl.u32 2102212464, %v620
        %v630 = vor.u32 %v628, %v629
        %v631 = vshll.u32 2102212464, %v619
        %v632 = vshrl.u32 920167782, %v620
        %v633 = vor.u32 %v631, %v632
        %v634 = vshll.u32 920167782, %v619
        %v635 = vshrl.u32 1326507024, %v620
        %v636 = vor.u32 %v634, %v635
        %vm637 = vcmp.lt.s32.totalorder %v618, 1
        %vm638 = vcmp.lt.s32.totalorder %v618, 2
        %vm639 = vcmp.lt.s32.totalorder %v618, 3
        %vm640 = vcmp.lt.s32.totalorder %v618, 4
        %v641 = vsel %vm637, %v621, %v624
        %v642 = vsel %vm640, %v630, 2102212464
        %v643 = vsel %vm639, %v627, %v642
        %v644 = vsel %vm638, %v641, %v643
        %v645 = vsel %vm637, %v624, %v627
        %v646 = vsel %vm640, %v633, 920167782
        %v647 = vsel %vm639, %v630, %v646
        %v648 = vsel %vm638, %v645, %v647
        %v649 = vsel %vm637, %v627, %v630
        %v650 = vsel %vm640, %v636, 1326507024
        %v651 = vsel %vm639, %v633, %v650
        %v652 = vsel %vm638, %v649, %v651
        %v653 = vshll.u32 %v613, 8
        %v654 = vmul.u32.u64.compose %v653, %v652
        %v655 = vextract.low.u32 %v654
        %v656 = vextract.high.u32 %v654
        %v657 = vmul.u32.u64.compose %v653, %v648
        %v658 = vextract.low.u32 %v657
        %v659 = vextract.high.u32 %v657
        %v660 = vmul.u32 %v653, %v644
        %v661 = vadd.s32 %v656, %v658
        %vm662 = vc.u32 %v656, %v658
        %v663 = vadd.s32 %v659, 1
        %v664 = vsel %vm662, %v663, %v659
        %v665 = vadd.s32 %v660, %v664
        %v666 = vadd.s32 %v665, 536870912
        %v667 = vshrl.u32 %v666, 30
        %v668 = vshll.u32 %v667, 30
        %v669 = vsub.s32 %v665, %v668
        %vm670 = vcmp.lt.s32.totalorder %v669, 0
        %v671 = vsub.s32 0, %v669
        %v672 = vsel %vm670, %v671, %v669
        %v673 = vclz %v672
        %v674 = vsub.s32 %v673, 2
        %vm675 = vcmp.gt.s32.totalorder 0, %v674
        %v676 = vsel %vm675, 0, %v674
        %v677 = vsub.s32 32, %v676
        %v678 = vshll.u32 %v669, %v676
        %v679 = vshrl.u32 %v661, %v677
        %v680 = vor.u32 %v678, %v679
        %v681 = vsub.s32 4294967266, %v676
        %v682 = vadd.s32 %v681, 127
        %v683 = vshll.u32 %v682, 23
        %v684 = vor.u32 4788187, %v683
        %v685 = vand.u32 2147483647, %v684
        %v687 = vcvt.s32.f32 %v680
        %v688 = vmul.f32 %v687, %v685
        %v689 = vxor.u32 %v688, 2147483648
        %v690 = vsel %vm607, %v689, %v688
        %v691 = vsub.s32 4, %v667
        %v692 = vsel %vm607, %v691, %v667
        %v693 = vsel %vm606, %v426, %v690
        %v694 = vsel %vm606, 0, %v692
        %v695 = vcosq.f32.pop %v693
        %v696 = vsinq.f32.pop %v693
        %vm697 = vweird.f32 %v426
        %v698 = vadd.s32 %v694, 3
        %v699 = vand.u32 %v698, 3
        %vm700 = vcmp.lt.s32.totalorder %v699, 2
        %vm701 = vcmp.eq.s32.totalorder %v699, 0
        %v702 = vxor.u32 %v696, 2147483648
        %v703 = vsel %vm701, %v695, %v702
        %vm704 = vcmp.eq.s32.totalorder %v699, 2
        %v705 = vxor.u32 %v695, 2147483648
        %v706 = vsel %vm704, %v705, %v696
        %v707 = vsel %vm700, %v703, %v706
        %v708 = vsel %vm697, nan, %v707
        %v709 = vand.u32 2147483647, %v431
        %vm710 = vcmp.le.f32.partialorder %v709, 0.7853982
        %vm711 = vcmp.lt.s32.totalorder %v431, 0
        %v712 = vand.u32 %v431, 2139095040
        %v713 = vshrl.u32 %v712, 23
        %v714 = vsub.s32 %v713, 127
        %v715 = vand.u32 2147483647, %v431
        %v716 = vand.u32 %v715, 8388607
        %v717 = vor.u32 %v716, 8388608
        %v718 = vsub.s32 0, %v717
        %v719 = vadd.s32 %v714, 1
        %vm720 = vcmp.gt.s32.totalorder %v719, 0
        %v721 = vsel %vm720, %v719, 0
        %v722 = vshrl.u32 %v721, 5
        %v723 = vand.u32 %v721, 31
        %v724 = vsub.s32 32, %v723
        %v725 = vshrl.u32 683565275, %v724
        %v726 = vshll.u32 683565275, %v723
        %v727 = vshrl.u32 2475754826, %v724
        %v728 = vor.u32 %v726, %v727
        %v729 = vshll.u32 2475754826, %v723
        %v730 = vshrl.u32 2131351028, %v724
        %v731 = vor.u32 %v729, %v730
        %v732 = vshll.u32 2131351028, %v723
        %v733 = vshrl.u32 2102212464, %v724
        %v734 = vor.u32 %v732, %v733
        %v735 = vshll.u32 2102212464, %v723
        %v736 = vshrl.u32 920167782, %v724
        %v737 = vor.u32 %v735, %v736
        %v738 = vshll.u32 920167782, %v723
        %v739 = vshrl.u32 1326507024, %v724
        %v740 = vor.u32 %v738, %v739
        %vm741 = vcmp.lt.s32.totalorder %v722, 1
        %vm742 = vcmp.lt.s32.totalorder %v722, 2
        %vm743 = vcmp.lt.s32.totalorder %v722, 3
        %vm744 = vcmp.lt.s32.totalorder %v722, 4
        %v745 = vsel %vm741, %v725, %v728
        %v746 = vsel %vm744, %v734, 2102212464
        %v747 = vsel %vm743, %v731, %v746
        %v748 = vsel %vm742, %v745, %v747
        %v749 = vsel %vm741, %v728, %v731
        %v750 = vsel %vm744, %v737, 920167782
        %v751 = vsel %vm743, %v734, %v750
        %v752 = vsel %vm742, %v749, %v751
        %v753 = vsel %vm741, %v731, %v734
        %v754 = vsel %vm744, %v740, 1326507024
        %v755 = vsel %vm743, %v737, %v754
        %v756 = vsel %vm742, %v753, %v755
        %v757 = vshll.u32 %v717, 8
        %v758 = vmul.u32.u64.compose %v757, %v756
        %v759 = vextract.low.u32 %v758
        %v760 = vextract.high.u32 %v758
        %v761 = vmul.u32.u64.compose %v757, %v752
        %v762 = vextract.low.u32 %v761
        %v763 = vextract.high.u32 %v761
        %v764 = vmul.u32 %v757, %v748
        %v765 = vadd.s32 %v760, %v762
        %vm766 = vc.u32 %v760, %v762
        %v767 = vadd.s32 %v763, 1
        %v768 = vsel %vm766, %v767, %v763
        %v769 = vadd.s32 %v764, %v768
        %v770 = vadd.s32 %v769, 536870912
        %v771 = vshrl.u32 %v770, 30
        %v772 = vshll.u32 %v771, 30
        %v773 = vsub.s32 %v769, %v772
        %vm774 = vcmp.lt.s32.totalorder %v773, 0
        %v775 = vsub.s32 0, %v773
        %v776 = vsel %vm774, %v775, %v773
        %v777 = vclz %v776
        %v778 = vsub.s32 %v777, 2
        %vm779 = vcmp.gt.s32.totalorder 0, %v778
        %v780 = vsel %vm779, 0, %v778
        %v781 = vsub.s32 32, %v780
        %v782 = vshll.u32 %v773, %v780
        %v783 = vshrl.u32 %v765, %v781
        %v784 = vor.u32 %v782, %v783
        %v785 = vsub.s32 4294967266, %v780
        %v786 = vadd.s32 %v785, 127
        %v787 = vshll.u32 %v786, 23
        %v788 = vor.u32 4788187, %v787
        %v789 = vand.u32 2147483647, %v788
        %v791 = vcvt.s32.f32 %v784
        %v792 = vmul.f32 %v791, %v789
        %v793 = vxor.u32 %v792, 2147483648
        %v794 = vsel %vm711, %v793, %v792
        %v795 = vsub.s32 4, %v771
        %v796 = vsel %vm711, %v795, %v771
        %v797 = vsel %vm710, %v431, %v794
        %v798 = vsel %vm710, 0, %v796
        %v799 = vcosq.f32.pop %v797
        %v800 = vsinq.f32.pop %v797
        %vm801 = vweird.f32 %v431
        %v802 = vadd.s32 %v798, 3
        %v803 = vand.u32 %v802, 3
        %vm804 = vcmp.lt.s32.totalorder %v803, 2
        %vm805 = vcmp.eq.s32.totalorder %v803, 0
        %v806 = vxor.u32 %v800, 2147483648
        %v807 = vsel %vm805, %v799, %v806
        %vm808 = vcmp.eq.s32.totalorder %v803, 2
        %v809 = vxor.u32 %v799, 2147483648
        %v810 = vsel %vm808, %v809, %v800
        %v811 = vsel %vm804, %v807, %v810
        %v812 = vsel %vm801, nan, %v811
        %v813 = vand.u32 2147483647, %v436
        %vm814 = vcmp.le.f32.partialorder %v813, 0.7853982
        %vm815 = vcmp.lt.s32.totalorder %v436, 0
        %v816 = vand.u32 %v436, 2139095040
        %v817 = vshrl.u32 %v816, 23
        %v818 = vsub.s32 %v817, 127
        %v819 = vand.u32 2147483647, %v436
        %v820 = vand.u32 %v819, 8388607
        %v821 = vor.u32 %v820, 8388608
        %v822 = vsub.s32 0, %v821
        %v823 = vadd.s32 %v818, 1
        %vm824 = vcmp.gt.s32.totalorder %v823, 0
        %v825 = vsel %vm824, %v823, 0
        %v826 = vshrl.u32 %v825, 5
        %v827 = vand.u32 %v825, 31
        %v828 = vsub.s32 32, %v827
        %v829 = vshrl.u32 683565275, %v828
        %v830 = vshll.u32 683565275, %v827
        %v831 = vshrl.u32 2475754826, %v828
        %v832 = vor.u32 %v830, %v831
        %v833 = vshll.u32 2475754826, %v827
        %v834 = vshrl.u32 2131351028, %v828
        %v835 = vor.u32 %v833, %v834
        %v836 = vshll.u32 2131351028, %v827
        %v837 = vshrl.u32 2102212464, %v828
        %v838 = vor.u32 %v836, %v837
        %v839 = vshll.u32 2102212464, %v827
        %v840 = vshrl.u32 920167782, %v828
        %v841 = vor.u32 %v839, %v840
        %v842 = vshll.u32 920167782, %v827
        %v843 = vshrl.u32 1326507024, %v828
        %v844 = vor.u32 %v842, %v843
        %vm845 = vcmp.lt.s32.totalorder %v826, 1
        %vm846 = vcmp.lt.s32.totalorder %v826, 2
        %vm847 = vcmp.lt.s32.totalorder %v826, 3
        %vm848 = vcmp.lt.s32.totalorder %v826, 4
        %v849 = vsel %vm845, %v829, %v832
        %v850 = vsel %vm848, %v838, 2102212464
        %v851 = vsel %vm847, %v835, %v850
        %v852 = vsel %vm846, %v849, %v851
        %v853 = vsel %vm845, %v832, %v835
        %v854 = vsel %vm848, %v841, 920167782
        %v855 = vsel %vm847, %v838, %v854
        %v856 = vsel %vm846, %v853, %v855
        %v857 = vsel %vm845, %v835, %v838
        %v858 = vsel %vm848, %v844, 1326507024
        %v859 = vsel %vm847, %v841, %v858
        %v860 = vsel %vm846, %v857, %v859
        %v861 = vshll.u32 %v821, 8
        %v862 = vmul.u32.u64.compose %v861, %v860
        %v863 = vextract.low.u32 %v862
        %v864 = vextract.high.u32 %v862
        %v865 = vmul.u32.u64.compose %v861, %v856
        %v866 = vextract.low.u32 %v865
        %v867 = vextract.high.u32 %v865
        %v868 = vmul.u32 %v861, %v852
        %v869 = vadd.s32 %v864, %v866
        %vm870 = vc.u32 %v864, %v866
        %v871 = vadd.s32 %v867, 1
        %v872 = vsel %vm870, %v871, %v867
        %v873 = vadd.s32 %v868, %v872
        %v874 = vadd.s32 %v873, 536870912
        %v875 = vshrl.u32 %v874, 30
        %v876 = vshll.u32 %v875, 30
        %v877 = vsub.s32 %v873, %v876
        %vm878 = vcmp.lt.s32.totalorder %v877, 0
        %v879 = vsub.s32 0, %v877
        %v880 = vsel %vm878, %v879, %v877
        %v881 = vclz %v880
        %v882 = vsub.s32 %v881, 2
        %vm883 = vcmp.gt.s32.totalorder 0, %v882
        %v884 = vsel %vm883, 0, %v882
        %v885 = vsub.s32 32, %v884
        %v886 = vshll.u32 %v877, %v884
        %v887 = vshrl.u32 %v869, %v885
        %v888 = vor.u32 %v886, %v887
        %v889 = vsub.s32 4294967266, %v884
        %v890 = vadd.s32 %v889, 127
        %v891 = vshll.u32 %v890, 23
        %v892 = vor.u32 4788187, %v891
        %v893 = vand.u32 2147483647, %v892
        %v895 = vcvt.s32.f32 %v888
        %v896 = vmul.f32 %v895, %v893
        %v897 = vxor.u32 %v896, 2147483648
        %v898 = vsel %vm815, %v897, %v896
        %v899 = vsub.s32 4, %v875
        %v900 = vsel %vm815, %v899, %v875
        %v901 = vsel %vm814, %v436, %v898
        %v902 = vsel %vm814, 0, %v900
        %v903 = vcosq.f32.pop %v901
        %v904 = vsinq.f32.pop %v901
        %vm905 = vweird.f32 %v436
        %v906 = vadd.s32 %v902, 3
        %v907 = vand.u32 %v906, 3
        %vm908 = vcmp.lt.s32.totalorder %v907, 2
        %vm909 = vcmp.eq.s32.totalorder %v907, 0
        %v910 = vxor.u32 %v904, 2147483648
        %v911 = vsel %vm909, %v903, %v910
        %vm912 = vcmp.eq.s32.totalorder %v907, 2
        %v913 = vxor.u32 %v903, 2147483648
        %v914 = vsel %vm912, %v913, %v904
        %v915 = vsel %vm908, %v911, %v914
        %v916 = vsel %vm905, nan, %v915
        %v917 = vand.u32 2147483647, %v441
        %vm918 = vcmp.le.f32.partialorder %v917, 0.7853982
        %vm919 = vcmp.lt.s32.totalorder %v441, 0
        %v920 = vand.u32 %v441, 2139095040
        %v921 = vshrl.u32 %v920, 23
        %v922 = vsub.s32 %v921, 127
        %v923 = vand.u32 2147483647, %v441
        %v924 = vand.u32 %v923, 8388607
        %v925 = vor.u32 %v924, 8388608
        %v926 = vsub.s32 0, %v925
        %v927 = vadd.s32 %v922, 1
        %vm928 = vcmp.gt.s32.totalorder %v927, 0
        %v929 = vsel %vm928, %v927, 0
        %v930 = vshrl.u32 %v929, 5
        %v931 = vand.u32 %v929, 31
        %v932 = vsub.s32 32, %v931
        %v933 = vshrl.u32 683565275, %v932
        %v934 = vshll.u32 683565275, %v931
        %v935 = vshrl.u32 2475754826, %v932
        %v936 = vor.u32 %v934, %v935
        %v937 = vshll.u32 2475754826, %v931
        %v938 = vshrl.u32 2131351028, %v932
        %v939 = vor.u32 %v937, %v938
        %v940 = vshll.u32 2131351028, %v931
        %v941 = vshrl.u32 2102212464, %v932
        %v942 = vor.u32 %v940, %v941
        %v943 = vshll.u32 2102212464, %v931
        %v944 = vshrl.u32 920167782, %v932
        %v945 = vor.u32 %v943, %v944
        %v946 = vshll.u32 920167782, %v931
        %v947 = vshrl.u32 1326507024, %v932
        %v948 = vor.u32 %v946, %v947
        %vm949 = vcmp.lt.s32.totalorder %v930, 1
        %vm950 = vcmp.lt.s32.totalorder %v930, 2
        %vm951 = vcmp.lt.s32.totalorder %v930, 3
        %vm952 = vcmp.lt.s32.totalorder %v930, 4
        %v953 = vsel %vm949, %v933, %v936
        %v954 = vsel %vm952, %v942, 2102212464
        %v955 = vsel %vm951, %v939, %v954
        %v956 = vsel %vm950, %v953, %v955
        %v957 = vsel %vm949, %v936, %v939
        %v958 = vsel %vm952, %v945, 920167782
        %v959 = vsel %vm951, %v942, %v958
        %v960 = vsel %vm950, %v957, %v959
        %v961 = vsel %vm949, %v939, %v942
        %v962 = vsel %vm952, %v948, 1326507024
        %v963 = vsel %vm951, %v945, %v962
        %v964 = vsel %vm950, %v961, %v963
        %v965 = vshll.u32 %v925, 8
        %v966 = vmul.u32.u64.compose %v965, %v964
        %v967 = vextract.low.u32 %v966
        %v968 = vextract.high.u32 %v966
        %v969 = vmul.u32.u64.compose %v965, %v960
        %v970 = vextract.low.u32 %v969
        %v971 = vextract.high.u32 %v969
        %v972 = vmul.u32 %v965, %v956
        %v973 = vadd.s32 %v968, %v970
        %vm974 = vc.u32 %v968, %v970
        %v975 = vadd.s32 %v971, 1
        %v976 = vsel %vm974, %v975, %v971
        %v977 = vadd.s32 %v972, %v976
        %v978 = vadd.s32 %v977, 536870912
        %v979 = vshrl.u32 %v978, 30
        %v980 = vshll.u32 %v979, 30
        %v981 = vsub.s32 %v977, %v980
        %vm982 = vcmp.lt.s32.totalorder %v981, 0
        %v983 = vsub.s32 0, %v981
        %v984 = vsel %vm982, %v983, %v981
        %v985 = vclz %v984
        %v986 = vsub.s32 %v985, 2
        %vm987 = vcmp.gt.s32.totalorder 0, %v986
        %v988 = vsel %vm987, 0, %v986
        %v989 = vsub.s32 32, %v988
        %v990 = vshll.u32 %v981, %v988
        %v991 = vshrl.u32 %v973, %v989
        %v992 = vor.u32 %v990, %v991
        %v993 = vsub.s32 4294967266, %v988
        %v994 = vadd.s32 %v993, 127
        %v995 = vshll.u32 %v994, 23
        %v996 = vor.u32 4788187, %v995
        %v997 = vand.u32 2147483647, %v996
        %v999 = vcvt.s32.f32 %v992
        %v1000 = vmul.f32 %v999, %v997
        %v1001 = vxor.u32 %v1000, 2147483648
        %v1002 = vsel %vm919, %v1001, %v1000
        %v1003 = vsub.s32 4, %v979
        %v1004 = vsel %vm919, %v1003, %v979
        %v1005 = vsel %vm918, %v441, %v1002
        %v1006 = vsel %vm918, 0, %v1004
        %v1007 = vcosq.f32.pop %v1005
        %v1008 = vsinq.f32.pop %v1005
        %vm1009 = vweird.f32 %v441
        %v1010 = vadd.s32 %v1006, 3
        %v1011 = vand.u32 %v1010, 3
        %vm1012 = vcmp.lt.s32.totalorder %v1011, 2
        %vm1013 = vcmp.eq.s32.totalorder %v1011, 0
        %v1014 = vxor.u32 %v1008, 2147483648
        %v1015 = vsel %vm1013, %v1007, %v1014
        %vm1016 = vcmp.eq.s32.totalorder %v1011, 2
        %v1017 = vxor.u32 %v1007, 2147483648
        %v1018 = vsel %vm1016, %v1017, %v1008
        %v1019 = vsel %vm1012, %v1015, %v1018
        %v1020 = vsel %vm1009, nan, %v1019
        %v1021 = vand.u32 2147483647, %v446
        %vm1022 = vcmp.le.f32.partialorder %v1021, 0.7853982
        %vm1023 = vcmp.lt.s32.totalorder %v446, 0
        %v1024 = vand.u32 %v446, 2139095040
        %v1025 = vshrl.u32 %v1024, 23
        %v1026 = vsub.s32 %v1025, 127
        %v1027 = vand.u32 2147483647, %v446
        %v1028 = vand.u32 %v1027, 8388607
        %v1029 = vor.u32 %v1028, 8388608
        %v1030 = vsub.s32 0, %v1029
        %v1031 = vadd.s32 %v1026, 1
        %vm1032 = vcmp.gt.s32.totalorder %v1031, 0
        %v1033 = vsel %vm1032, %v1031, 0
        %v1034 = vshrl.u32 %v1033, 5
        %v1035 = vand.u32 %v1033, 31
        %v1036 = vsub.s32 32, %v1035
        %v1037 = vshrl.u32 683565275, %v1036
        %v1038 = vshll.u32 683565275, %v1035
        %v1039 = vshrl.u32 2475754826, %v1036
        %v1040 = vor.u32 %v1038, %v1039
        %v1041 = vshll.u32 2475754826, %v1035
        %v1042 = vshrl.u32 2131351028, %v1036
        %v1043 = vor.u32 %v1041, %v1042
        %v1044 = vshll.u32 2131351028, %v1035
        %v1045 = vshrl.u32 2102212464, %v1036
        %v1046 = vor.u32 %v1044, %v1045
        %v1047 = vshll.u32 2102212464, %v1035
        %v1048 = vshrl.u32 920167782, %v1036
        %v1049 = vor.u32 %v1047, %v1048
        %v1050 = vshll.u32 920167782, %v1035
        %v1051 = vshrl.u32 1326507024, %v1036
        %v1052 = vor.u32 %v1050, %v1051
        %vm1053 = vcmp.lt.s32.totalorder %v1034, 1
        %vm1054 = vcmp.lt.s32.totalorder %v1034, 2
        %vm1055 = vcmp.lt.s32.totalorder %v1034, 3
        %vm1056 = vcmp.lt.s32.totalorder %v1034, 4
        %v1057 = vsel %vm1053, %v1037, %v1040
        %v1058 = vsel %vm1056, %v1046, 2102212464
        %v1059 = vsel %vm1055, %v1043, %v1058
        %v1060 = vsel %vm1054, %v1057, %v1059
        %v1061 = vsel %vm1053, %v1040, %v1043
        %v1062 = vsel %vm1056, %v1049, 920167782
        %v1063 = vsel %vm1055, %v1046, %v1062
        %v1064 = vsel %vm1054, %v1061, %v1063
        %v1065 = vsel %vm1053, %v1043, %v1046
        %v1066 = vsel %vm1056, %v1052, 1326507024
        %v1067 = vsel %vm1055, %v1049, %v1066
        %v1068 = vsel %vm1054, %v1065, %v1067
        %v1069 = vshll.u32 %v1029, 8
        %v1070 = vmul.u32.u64.compose %v1069, %v1068
        %v1071 = vextract.low.u32 %v1070
        %v1072 = vextract.high.u32 %v1070
        %v1073 = vmul.u32.u64.compose %v1069, %v1064
        %v1074 = vextract.low.u32 %v1073
        %v1075 = vextract.high.u32 %v1073
        %v1076 = vmul.u32 %v1069, %v1060
        %v1077 = vadd.s32 %v1072, %v1074
        %vm1078 = vc.u32 %v1072, %v1074
        %v1079 = vadd.s32 %v1075, 1
        %v1080 = vsel %vm1078, %v1079, %v1075
        %v1081 = vadd.s32 %v1076, %v1080
        %v1082 = vadd.s32 %v1081, 536870912
        %v1083 = vshrl.u32 %v1082, 30
        %v1084 = vshll.u32 %v1083, 30
        %v1085 = vsub.s32 %v1081, %v1084
        %vm1086 = vcmp.lt.s32.totalorder %v1085, 0
        %v1087 = vsub.s32 0, %v1085
        %v1088 = vsel %vm1086, %v1087, %v1085
        %v1089 = vclz %v1088
        %v1090 = vsub.s32 %v1089, 2
        %vm1091 = vcmp.gt.s32.totalorder 0, %v1090
        %v1092 = vsel %vm1091, 0, %v1090
        %v1093 = vsub.s32 32, %v1092
        %v1094 = vshll.u32 %v1085, %v1092
        %v1095 = vshrl.u32 %v1077, %v1093
        %v1096 = vor.u32 %v1094, %v1095
        %v1097 = vsub.s32 4294967266, %v1092
        %v1098 = vadd.s32 %v1097, 127
        %v1099 = vshll.u32 %v1098, 23
        %v1100 = vor.u32 4788187, %v1099
        %v1101 = vand.u32 2147483647, %v1100
        %v1103 = vcvt.s32.f32 %v1096
        %v1104 = vmul.f32 %v1103, %v1101
        %v1105 = vxor.u32 %v1104, 2147483648
        %v1106 = vsel %vm1023, %v1105, %v1104
        %v1107 = vsub.s32 4, %v1083
        %v1108 = vsel %vm1023, %v1107, %v1083
        %v1109 = vsel %vm1022, %v446, %v1106
        %v1110 = vsel %vm1022, 0, %v1108
        %v1111 = vcosq.f32.pop %v1109
        %v1112 = vsinq.f32.pop %v1109
        %vm1113 = vweird.f32 %v446
        %v1114 = vadd.s32 %v1110, 3
        %v1115 = vand.u32 %v1114, 3
        %vm1116 = vcmp.lt.s32.totalorder %v1115, 2
        %vm1117 = vcmp.eq.s32.totalorder %v1115, 0
        %v1118 = vxor.u32 %v1112, 2147483648
        %v1119 = vsel %vm1117, %v1111, %v1118
        %vm1120 = vcmp.eq.s32.totalorder %v1115, 2
        %v1121 = vxor.u32 %v1111, 2147483648
        %v1122 = vsel %vm1120, %v1121, %v1112
        %v1123 = vsel %vm1116, %v1119, %v1122
        %v1124 = vsel %vm1113, nan, %v1123
        %v1125 = vand.u32 2147483647, %v451
        %vm1126 = vcmp.le.f32.partialorder %v1125, 0.7853982
        %vm1127 = vcmp.lt.s32.totalorder %v451, 0
        %v1128 = vand.u32 %v451, 2139095040
        %v1129 = vshrl.u32 %v1128, 23
        %v1130 = vsub.s32 %v1129, 127
        %v1131 = vand.u32 2147483647, %v451
        %v1132 = vand.u32 %v1131, 8388607
        %v1133 = vor.u32 %v1132, 8388608
        %v1134 = vsub.s32 0, %v1133
        %v1135 = vadd.s32 %v1130, 1
        %vm1136 = vcmp.gt.s32.totalorder %v1135, 0
        %v1137 = vsel %vm1136, %v1135, 0
        %v1138 = vshrl.u32 %v1137, 5
        %v1139 = vand.u32 %v1137, 31
        %v1140 = vsub.s32 32, %v1139
        %v1141 = vshrl.u32 683565275, %v1140
        %v1142 = vshll.u32 683565275, %v1139
        %v1143 = vshrl.u32 2475754826, %v1140
        %v1144 = vor.u32 %v1142, %v1143
        %v1145 = vshll.u32 2475754826, %v1139
        %v1146 = vshrl.u32 2131351028, %v1140
        %v1147 = vor.u32 %v1145, %v1146
        %v1148 = vshll.u32 2131351028, %v1139
        %v1149 = vshrl.u32 2102212464, %v1140
        %v1150 = vor.u32 %v1148, %v1149
        %v1151 = vshll.u32 2102212464, %v1139
        %v1152 = vshrl.u32 920167782, %v1140
        %v1153 = vor.u32 %v1151, %v1152
        %v1154 = vshll.u32 920167782, %v1139
        %v1155 = vshrl.u32 1326507024, %v1140
        %v1156 = vor.u32 %v1154, %v1155
        %vm1157 = vcmp.lt.s32.totalorder %v1138, 1
        %vm1158 = vcmp.lt.s32.totalorder %v1138, 2
        %vm1159 = vcmp.lt.s32.totalorder %v1138, 3
        %vm1160 = vcmp.lt.s32.totalorder %v1138, 4
        %v1161 = vsel %vm1157, %v1141, %v1144
        %v1162 = vsel %vm1160, %v1150, 2102212464
        %v1163 = vsel %vm1159, %v1147, %v1162
        %v1164 = vsel %vm1158, %v1161, %v1163
        %v1165 = vsel %vm1157, %v1144, %v1147
        %v1166 = vsel %vm1160, %v1153, 920167782
        %v1167 = vsel %vm1159, %v1150, %v1166
        %v1168 = vsel %vm1158, %v1165, %v1167
        %v1169 = vsel %vm1157, %v1147, %v1150
        %v1170 = vsel %vm1160, %v1156, 1326507024
        %v1171 = vsel %vm1159, %v1153, %v1170
        %v1172 = vsel %vm1158, %v1169, %v1171
        %v1173 = vshll.u32 %v1133, 8
        %v1174 = vmul.u32.u64.compose %v1173, %v1172
        %v1175 = vextract.low.u32 %v1174
        %v1176 = vextract.high.u32 %v1174
        %v1177 = vmul.u32.u64.compose %v1173, %v1168
        %v1178 = vextract.low.u32 %v1177
        %v1179 = vextract.high.u32 %v1177
        %v1180 = vmul.u32 %v1173, %v1164
        %v1181 = vadd.s32 %v1176, %v1178
        %vm1182 = vc.u32 %v1176, %v1178
        %v1183 = vadd.s32 %v1179, 1
        %v1184 = vsel %vm1182, %v1183, %v1179
        %v1185 = vadd.s32 %v1180, %v1184
        %v1186 = vadd.s32 %v1185, 536870912
        %v1187 = vshrl.u32 %v1186, 30
        %v1188 = vshll.u32 %v1187, 30
        %v1189 = vsub.s32 %v1185, %v1188
        %vm1190 = vcmp.lt.s32.totalorder %v1189, 0
        %v1191 = vsub.s32 0, %v1189
        %v1192 = vsel %vm1190, %v1191, %v1189
        %v1193 = vclz %v1192
        %v1194 = vsub.s32 %v1193, 2
        %vm1195 = vcmp.gt.s32.totalorder 0, %v1194
        %v1196 = vsel %vm1195, 0, %v1194
        %v1197 = vsub.s32 32, %v1196
        %v1198 = vshll.u32 %v1189, %v1196
        %v1199 = vshrl.u32 %v1181, %v1197
        %v1200 = vor.u32 %v1198, %v1199
        %v1201 = vsub.s32 4294967266, %v1196
        %v1202 = vadd.s32 %v1201, 127
        %v1203 = vshll.u32 %v1202, 23
        %v1204 = vor.u32 4788187, %v1203
        %v1205 = vand.u32 2147483647, %v1204
        %v1207 = vcvt.s32.f32 %v1200
        %v1208 = vmul.f32 %v1207, %v1205
        %v1209 = vxor.u32 %v1208, 2147483648
        %v1210 = vsel %vm1127, %v1209, %v1208
        %v1211 = vsub.s32 4, %v1187
        %v1212 = vsel %vm1127, %v1211, %v1187
        %v1213 = vsel %vm1126, %v451, %v1210
        %v1214 = vsel %vm1126, 0, %v1212
        %v1215 = vcosq.f32.pop %v1213
        %v1216 = vsinq.f32.pop %v1213
        %vm1217 = vweird.f32 %v451
        %v1218 = vadd.s32 %v1214, 3
        %v1219 = vand.u32 %v1218, 3
        %vm1220 = vcmp.lt.s32.totalorder %v1219, 2
        %vm1221 = vcmp.eq.s32.totalorder %v1219, 0
        %v1222 = vxor.u32 %v1216, 2147483648
        %v1223 = vsel %vm1221, %v1215, %v1222
        %vm1224 = vcmp.eq.s32.totalorder %v1219, 2
        %v1225 = vxor.u32 %v1215, 2147483648
        %v1226 = vsel %vm1224, %v1225, %v1216
        %v1227 = vsel %vm1220, %v1223, %v1226
        %v1228 = vsel %vm1217, nan, %v1227
        %v1229 = vand.u32 2147483647, %v456
        %vm1230 = vcmp.le.f32.partialorder %v1229, 0.7853982
        %vm1231 = vcmp.lt.s32.totalorder %v456, 0
        %v1232 = vand.u32 %v456, 2139095040
        %v1233 = vshrl.u32 %v1232, 23
        %v1234 = vsub.s32 %v1233, 127
        %v1235 = vand.u32 2147483647, %v456
        %v1236 = vand.u32 %v1235, 8388607
        %v1237 = vor.u32 %v1236, 8388608
        %v1238 = vsub.s32 0, %v1237
        %v1239 = vadd.s32 %v1234, 1
        %vm1240 = vcmp.gt.s32.totalorder %v1239, 0
        %v1241 = vsel %vm1240, %v1239, 0
        %v1242 = vshrl.u32 %v1241, 5
        %v1243 = vand.u32 %v1241, 31
        %v1244 = vsub.s32 32, %v1243
        %v1245 = vshrl.u32 683565275, %v1244
        %v1246 = vshll.u32 683565275, %v1243
        %v1247 = vshrl.u32 2475754826, %v1244
        %v1248 = vor.u32 %v1246, %v1247
        %v1249 = vshll.u32 2475754826, %v1243
        %v1250 = vshrl.u32 2131351028, %v1244
        %v1251 = vor.u32 %v1249, %v1250
        %v1252 = vshll.u32 2131351028, %v1243
        %v1253 = vshrl.u32 2102212464, %v1244
        %v1254 = vor.u32 %v1252, %v1253
        %v1255 = vshll.u32 2102212464, %v1243
        %v1256 = vshrl.u32 920167782, %v1244
        %v1257 = vor.u32 %v1255, %v1256
        %v1258 = vshll.u32 920167782, %v1243
        %v1259 = vshrl.u32 1326507024, %v1244
        %v1260 = vor.u32 %v1258, %v1259
        %vm1261 = vcmp.lt.s32.totalorder %v1242, 1
        %vm1262 = vcmp.lt.s32.totalorder %v1242, 2
        %vm1263 = vcmp.lt.s32.totalorder %v1242, 3
        %vm1264 = vcmp.lt.s32.totalorder %v1242, 4
        %v1265 = vsel %vm1261, %v1245, %v1248
        %v1266 = vsel %vm1264, %v1254, 2102212464
        %v1267 = vsel %vm1263, %v1251, %v1266
        %v1268 = vsel %vm1262, %v1265, %v1267
        %v1269 = vsel %vm1261, %v1248, %v1251
        %v1270 = vsel %vm1264, %v1257, 920167782
        %v1271 = vsel %vm1263, %v1254, %v1270
        %v1272 = vsel %vm1262, %v1269, %v1271
        %v1273 = vsel %vm1261, %v1251, %v1254
        %v1274 = vsel %vm1264, %v1260, 1326507024
        %v1275 = vsel %vm1263, %v1257, %v1274
        %v1276 = vsel %vm1262, %v1273, %v1275
        %v1277 = vshll.u32 %v1237, 8
        %v1278 = vmul.u32.u64.compose %v1277, %v1276
        %v1279 = vextract.low.u32 %v1278
        %v1280 = vextract.high.u32 %v1278
        %v1281 = vmul.u32.u64.compose %v1277, %v1272
        %v1282 = vextract.low.u32 %v1281
        %v1283 = vextract.high.u32 %v1281
        %v1284 = vmul.u32 %v1277, %v1268
        %v1285 = vadd.s32 %v1280, %v1282
        %vm1286 = vc.u32 %v1280, %v1282
        %v1287 = vadd.s32 %v1283, 1
        %v1288 = vsel %vm1286, %v1287, %v1283
        %v1289 = vadd.s32 %v1284, %v1288
        %v1290 = vadd.s32 %v1289, 536870912
        %v1291 = vshrl.u32 %v1290, 30
        %v1292 = vshll.u32 %v1291, 30
        %v1293 = vsub.s32 %v1289, %v1292
        %vm1294 = vcmp.lt.s32.totalorder %v1293, 0
        %v1295 = vsub.s32 0, %v1293
        %v1296 = vsel %vm1294, %v1295, %v1293
        %v1297 = vclz %v1296
        %v1298 = vsub.s32 %v1297, 2
        %vm1299 = vcmp.gt.s32.totalorder 0, %v1298
        %v1300 = vsel %vm1299, 0, %v1298
        %v1301 = vsub.s32 32, %v1300
        %v1302 = vshll.u32 %v1293, %v1300
        %v1303 = vshrl.u32 %v1285, %v1301
        %v1304 = vor.u32 %v1302, %v1303
        %v1305 = vsub.s32 4294967266, %v1300
        %v1306 = vadd.s32 %v1305, 127
        %v1307 = vshll.u32 %v1306, 23
        %v1308 = vor.u32 4788187, %v1307
        %v1309 = vand.u32 2147483647, %v1308
        %v1311 = vcvt.s32.f32 %v1304
        %v1312 = vmul.f32 %v1311, %v1309
        %v1313 = vxor.u32 %v1312, 2147483648
        %v1314 = vsel %vm1231, %v1313, %v1312
        %v1315 = vsub.s32 4, %v1291
        %v1316 = vsel %vm1231, %v1315, %v1291
        %v1317 = vsel %vm1230, %v456, %v1314
        %v1318 = vsel %vm1230, 0, %v1316
        %v1319 = vcosq.f32.pop %v1317
        %v1320 = vsinq.f32.pop %v1317
        %vm1321 = vweird.f32 %v456
        %v1322 = vadd.s32 %v1318, 3
        %v1323 = vand.u32 %v1322, 3
        %vm1324 = vcmp.lt.s32.totalorder %v1323, 2
        %vm1325 = vcmp.eq.s32.totalorder %v1323, 0
        %v1326 = vxor.u32 %v1320, 2147483648
        %v1327 = vsel %vm1325, %v1319, %v1326
        %vm1328 = vcmp.eq.s32.totalorder %v1323, 2
        %v1329 = vxor.u32 %v1319, 2147483648
        %v1330 = vsel %vm1328, %v1329, %v1320
        %v1331 = vsel %vm1324, %v1327, %v1330
        %v1332 = vsel %vm1321, nan, %v1331
        %v1333 = vand.u32 2147483647, %v461
        %vm1334 = vcmp.le.f32.partialorder %v1333, 0.7853982
        %vm1335 = vcmp.lt.s32.totalorder %v461, 0
        %v1336 = vand.u32 %v461, 2139095040
        %v1337 = vshrl.u32 %v1336, 23
        %v1338 = vsub.s32 %v1337, 127
        %v1339 = vand.u32 2147483647, %v461
        %v1340 = vand.u32 %v1339, 8388607
        %v1341 = vor.u32 %v1340, 8388608
        %v1342 = vsub.s32 0, %v1341
        %v1343 = vadd.s32 %v1338, 1
        %vm1344 = vcmp.gt.s32.totalorder %v1343, 0
        %v1345 = vsel %vm1344, %v1343, 0
        %v1346 = vshrl.u32 %v1345, 5
        %v1347 = vand.u32 %v1345, 31
        %v1348 = vsub.s32 32, %v1347
        %v1349 = vshrl.u32 683565275, %v1348
        %v1350 = vshll.u32 683565275, %v1347
        %v1351 = vshrl.u32 2475754826, %v1348
        %v1352 = vor.u32 %v1350, %v1351
        %v1353 = vshll.u32 2475754826, %v1347
        %v1354 = vshrl.u32 2131351028, %v1348
        %v1355 = vor.u32 %v1353, %v1354
        %v1356 = vshll.u32 2131351028, %v1347
        %v1357 = vshrl.u32 2102212464, %v1348
        %v1358 = vor.u32 %v1356, %v1357
        %v1359 = vshll.u32 2102212464, %v1347
        %v1360 = vshrl.u32 920167782, %v1348
        %v1361 = vor.u32 %v1359, %v1360
        %v1362 = vshll.u32 920167782, %v1347
        %v1363 = vshrl.u32 1326507024, %v1348
        %v1364 = vor.u32 %v1362, %v1363
        %vm1365 = vcmp.lt.s32.totalorder %v1346, 1
        %vm1366 = vcmp.lt.s32.totalorder %v1346, 2
        %vm1367 = vcmp.lt.s32.totalorder %v1346, 3
        %vm1368 = vcmp.lt.s32.totalorder %v1346, 4
        %v1369 = vsel %vm1365, %v1349, %v1352
        %v1370 = vsel %vm1368, %v1358, 2102212464
        %v1371 = vsel %vm1367, %v1355, %v1370
        %v1372 = vsel %vm1366, %v1369, %v1371
        %v1373 = vsel %vm1365, %v1352, %v1355
        %v1374 = vsel %vm1368, %v1361, 920167782
        %v1375 = vsel %vm1367, %v1358, %v1374
        %v1376 = vsel %vm1366, %v1373, %v1375
        %v1377 = vsel %vm1365, %v1355, %v1358
        %v1378 = vsel %vm1368, %v1364, 1326507024
        %v1379 = vsel %vm1367, %v1361, %v1378
        %v1380 = vsel %vm1366, %v1377, %v1379
        %v1381 = vshll.u32 %v1341, 8
        %v1382 = vmul.u32.u64.compose %v1381, %v1380
        %v1383 = vextract.low.u32 %v1382
        %v1384 = vextract.high.u32 %v1382
        %v1385 = vmul.u32.u64.compose %v1381, %v1376
        %v1386 = vextract.low.u32 %v1385
        %v1387 = vextract.high.u32 %v1385
        %v1388 = vmul.u32 %v1381, %v1372
        %v1389 = vadd.s32 %v1384, %v1386
        %vm1390 = vc.u32 %v1384, %v1386
        %v1391 = vadd.s32 %v1387, 1
        %v1392 = vsel %vm1390, %v1391, %v1387
        %v1393 = vadd.s32 %v1388, %v1392
        %v1394 = vadd.s32 %v1393, 536870912
        %v1395 = vshrl.u32 %v1394, 30
        %v1396 = vshll.u32 %v1395, 30
        %v1397 = vsub.s32 %v1393, %v1396
        %vm1398 = vcmp.lt.s32.totalorder %v1397, 0
        %v1399 = vsub.s32 0, %v1397
        %v1400 = vsel %vm1398, %v1399, %v1397
        %v1401 = vclz %v1400
        %v1402 = vsub.s32 %v1401, 2
        %vm1403 = vcmp.gt.s32.totalorder 0, %v1402
        %v1404 = vsel %vm1403, 0, %v1402
        %v1405 = vsub.s32 32, %v1404
        %v1406 = vshll.u32 %v1397, %v1404
        %v1407 = vshrl.u32 %v1389, %v1405
        %v1408 = vor.u32 %v1406, %v1407
        %v1409 = vsub.s32 4294967266, %v1404
        %v1410 = vadd.s32 %v1409, 127
        %v1411 = vshll.u32 %v1410, 23
        %v1412 = vor.u32 4788187, %v1411
        %v1413 = vand.u32 2147483647, %v1412
        %v1415 = vcvt.s32.f32 %v1408
        %v1416 = vmul.f32 %v1415, %v1413
        %v1417 = vxor.u32 %v1416, 2147483648
        %v1418 = vsel %vm1335, %v1417, %v1416
        %v1419 = vsub.s32 4, %v1395
        %v1420 = vsel %vm1335, %v1419, %v1395
        %v1421 = vsel %vm1334, %v461, %v1418
        %v1422 = vsel %vm1334, 0, %v1420
        %v1423 = vcosq.f32.pop %v1421
        %v1424 = vsinq.f32.pop %v1421
        %vm1425 = vweird.f32 %v461
        %v1426 = vadd.s32 %v1422, 3
        %v1427 = vand.u32 %v1426, 3
        %vm1428 = vcmp.lt.s32.totalorder %v1427, 2
        %vm1429 = vcmp.eq.s32.totalorder %v1427, 0
        %v1430 = vxor.u32 %v1424, 2147483648
        %v1431 = vsel %vm1429, %v1423, %v1430
        %vm1432 = vcmp.eq.s32.totalorder %v1427, 2
        %v1433 = vxor.u32 %v1423, 2147483648
        %v1434 = vsel %vm1432, %v1433, %v1424
        %v1435 = vsel %vm1428, %v1431, %v1434
        %v1436 = vsel %vm1425, nan, %v1435
        %v1437 = vand.u32 2147483647, %v466
        %vm1438 = vcmp.le.f32.partialorder %v1437, 0.7853982
        %vm1439 = vcmp.lt.s32.totalorder %v466, 0
        %v1440 = vand.u32 %v466, 2139095040
        %v1441 = vshrl.u32 %v1440, 23
        %v1442 = vsub.s32 %v1441, 127
        %v1443 = vand.u32 2147483647, %v466
        %v1444 = vand.u32 %v1443, 8388607
        %v1445 = vor.u32 %v1444, 8388608
        %v1446 = vsub.s32 0, %v1445
        %v1447 = vadd.s32 %v1442, 1
        %vm1448 = vcmp.gt.s32.totalorder %v1447, 0
        %v1449 = vsel %vm1448, %v1447, 0
        %v1450 = vshrl.u32 %v1449, 5
        %v1451 = vand.u32 %v1449, 31
        %v1452 = vsub.s32 32, %v1451
        %v1453 = vshrl.u32 683565275, %v1452
        %v1454 = vshll.u32 683565275, %v1451
        %v1455 = vshrl.u32 2475754826, %v1452
        %v1456 = vor.u32 %v1454, %v1455
        %v1457 = vshll.u32 2475754826, %v1451
        %v1458 = vshrl.u32 2131351028, %v1452
        %v1459 = vor.u32 %v1457, %v1458
        %v1460 = vshll.u32 2131351028, %v1451
        %v1461 = vshrl.u32 2102212464, %v1452
        %v1462 = vor.u32 %v1460, %v1461
        %v1463 = vshll.u32 2102212464, %v1451
        %v1464 = vshrl.u32 920167782, %v1452
        %v1465 = vor.u32 %v1463, %v1464
        %v1466 = vshll.u32 920167782, %v1451
        %v1467 = vshrl.u32 1326507024, %v1452
        %v1468 = vor.u32 %v1466, %v1467
        %vm1469 = vcmp.lt.s32.totalorder %v1450, 1
        %vm1470 = vcmp.lt.s32.totalorder %v1450, 2
        %vm1471 = vcmp.lt.s32.totalorder %v1450, 3
        %vm1472 = vcmp.lt.s32.totalorder %v1450, 4
        %v1473 = vsel %vm1469, %v1453, %v1456
        %v1474 = vsel %vm1472, %v1462, 2102212464
        %v1475 = vsel %vm1471, %v1459, %v1474
        %v1476 = vsel %vm1470, %v1473, %v1475
        %v1477 = vsel %vm1469, %v1456, %v1459
        %v1478 = vsel %vm1472, %v1465, 920167782
        %v1479 = vsel %vm1471, %v1462, %v1478
        %v1480 = vsel %vm1470, %v1477, %v1479
        %v1481 = vsel %vm1469, %v1459, %v1462
        %v1482 = vsel %vm1472, %v1468, 1326507024
        %v1483 = vsel %vm1471, %v1465, %v1482
        %v1484 = vsel %vm1470, %v1481, %v1483
        %v1485 = vshll.u32 %v1445, 8
        %v1486 = vmul.u32.u64.compose %v1485, %v1484
        %v1487 = vextract.low.u32 %v1486
        %v1488 = vextract.high.u32 %v1486
        %v1489 = vmul.u32.u64.compose %v1485, %v1480
        %v1490 = vextract.low.u32 %v1489
        %v1491 = vextract.high.u32 %v1489
        %v1492 = vmul.u32 %v1485, %v1476
        %v1493 = vadd.s32 %v1488, %v1490
        %vm1494 = vc.u32 %v1488, %v1490
        %v1495 = vadd.s32 %v1491, 1
        %v1496 = vsel %vm1494, %v1495, %v1491
        %v1497 = vadd.s32 %v1492, %v1496
        %v1498 = vadd.s32 %v1497, 536870912
        %v1499 = vshrl.u32 %v1498, 30
        %v1500 = vshll.u32 %v1499, 30
        %v1501 = vsub.s32 %v1497, %v1500
        %vm1502 = vcmp.lt.s32.totalorder %v1501, 0
        %v1503 = vsub.s32 0, %v1501
        %v1504 = vsel %vm1502, %v1503, %v1501
        %v1505 = vclz %v1504
        %v1506 = vsub.s32 %v1505, 2
        %vm1507 = vcmp.gt.s32.totalorder 0, %v1506
        %v1508 = vsel %vm1507, 0, %v1506
        %v1509 = vsub.s32 32, %v1508
        %v1510 = vshll.u32 %v1501, %v1508
        %v1511 = vshrl.u32 %v1493, %v1509
        %v1512 = vor.u32 %v1510, %v1511
        %v1513 = vsub.s32 4294967266, %v1508
        %v1514 = vadd.s32 %v1513, 127
        %v1515 = vshll.u32 %v1514, 23
        %v1516 = vor.u32 4788187, %v1515
        %v1517 = vand.u32 2147483647, %v1516
        %v1519 = vcvt.s32.f32 %v1512
        %v1520 = vmul.f32 %v1519, %v1517
        %v1521 = vxor.u32 %v1520, 2147483648
        %v1522 = vsel %vm1439, %v1521, %v1520
        %v1523 = vsub.s32 4, %v1499
        %v1524 = vsel %vm1439, %v1523, %v1499
        %v1525 = vsel %vm1438, %v466, %v1522
        %v1526 = vsel %vm1438, 0, %v1524
        %v1527 = vcosq.f32.pop %v1525
        %v1528 = vsinq.f32.pop %v1525
        %vm1529 = vweird.f32 %v466
        %v1530 = vadd.s32 %v1526, 3
        %v1531 = vand.u32 %v1530, 3
        %vm1532 = vcmp.lt.s32.totalorder %v1531, 2
        %vm1533 = vcmp.eq.s32.totalorder %v1531, 0
        %v1534 = vxor.u32 %v1528, 2147483648
        %v1535 = vsel %vm1533, %v1527, %v1534
        %vm1536 = vcmp.eq.s32.totalorder %v1531, 2
        %v1537 = vxor.u32 %v1527, 2147483648
        %v1538 = vsel %vm1536, %v1537, %v1528
        %v1539 = vsel %vm1532, %v1535, %v1538
        %v1540 = vsel %vm1529, nan, %v1539
        %v1541 = vand.u32 2147483647, %v471
        %vm1542 = vcmp.le.f32.partialorder %v1541, 0.7853982
        %vm1543 = vcmp.lt.s32.totalorder %v471, 0
        %v1544 = vand.u32 %v471, 2139095040
        %v1545 = vshrl.u32 %v1544, 23
        %v1546 = vsub.s32 %v1545, 127
        %v1547 = vand.u32 2147483647, %v471
        %v1548 = vand.u32 %v1547, 8388607
        %v1549 = vor.u32 %v1548, 8388608
        %v1550 = vsub.s32 0, %v1549
        %v1551 = vadd.s32 %v1546, 1
        %vm1552 = vcmp.gt.s32.totalorder %v1551, 0
        %v1553 = vsel %vm1552, %v1551, 0
        %v1554 = vshrl.u32 %v1553, 5
        %v1555 = vand.u32 %v1553, 31
        %v1556 = vsub.s32 32, %v1555
        %v1557 = vshrl.u32 683565275, %v1556
        %v1558 = vshll.u32 683565275, %v1555
        %v1559 = vshrl.u32 2475754826, %v1556
        %v1560 = vor.u32 %v1558, %v1559
        %v1561 = vshll.u32 2475754826, %v1555
        %v1562 = vshrl.u32 2131351028, %v1556
        %v1563 = vor.u32 %v1561, %v1562
        %v1564 = vshll.u32 2131351028, %v1555
        %v1565 = vshrl.u32 2102212464, %v1556
        %v1566 = vor.u32 %v1564, %v1565
        %v1567 = vshll.u32 2102212464, %v1555
        %v1568 = vshrl.u32 920167782, %v1556
        %v1569 = vor.u32 %v1567, %v1568
        %v1570 = vshll.u32 920167782, %v1555
        %v1571 = vshrl.u32 1326507024, %v1556
        %v1572 = vor.u32 %v1570, %v1571
        %vm1573 = vcmp.lt.s32.totalorder %v1554, 1
        %vm1574 = vcmp.lt.s32.totalorder %v1554, 2
        %vm1575 = vcmp.lt.s32.totalorder %v1554, 3
        %vm1576 = vcmp.lt.s32.totalorder %v1554, 4
        %v1577 = vsel %vm1573, %v1557, %v1560
        %v1578 = vsel %vm1576, %v1566, 2102212464
        %v1579 = vsel %vm1575, %v1563, %v1578
        %v1580 = vsel %vm1574, %v1577, %v1579
        %v1581 = vsel %vm1573, %v1560, %v1563
        %v1582 = vsel %vm1576, %v1569, 920167782
        %v1583 = vsel %vm1575, %v1566, %v1582
        %v1584 = vsel %vm1574, %v1581, %v1583
        %v1585 = vsel %vm1573, %v1563, %v1566
        %v1586 = vsel %vm1576, %v1572, 1326507024
        %v1587 = vsel %vm1575, %v1569, %v1586
        %v1588 = vsel %vm1574, %v1585, %v1587
        %v1589 = vshll.u32 %v1549, 8
        %v1590 = vmul.u32.u64.compose %v1589, %v1588
        %v1591 = vextract.low.u32 %v1590
        %v1592 = vextract.high.u32 %v1590
        %v1593 = vmul.u32.u64.compose %v1589, %v1584
        %v1594 = vextract.low.u32 %v1593
        %v1595 = vextract.high.u32 %v1593
        %v1596 = vmul.u32 %v1589, %v1580
        %v1597 = vadd.s32 %v1592, %v1594
        %vm1598 = vc.u32 %v1592, %v1594
        %v1599 = vadd.s32 %v1595, 1
        %v1600 = vsel %vm1598, %v1599, %v1595
        %v1601 = vadd.s32 %v1596, %v1600
        %v1602 = vadd.s32 %v1601, 536870912
        %v1603 = vshrl.u32 %v1602, 30
        %v1604 = vshll.u32 %v1603, 30
        %v1605 = vsub.s32 %v1601, %v1604
        %vm1606 = vcmp.lt.s32.totalorder %v1605, 0
        %v1607 = vsub.s32 0, %v1605
        %v1608 = vsel %vm1606, %v1607, %v1605
        %v1609 = vclz %v1608
        %v1610 = vsub.s32 %v1609, 2
        %vm1611 = vcmp.gt.s32.totalorder 0, %v1610
        %v1612 = vsel %vm1611, 0, %v1610
        %v1613 = vsub.s32 32, %v1612
        %v1614 = vshll.u32 %v1605, %v1612
        %v1615 = vshrl.u32 %v1597, %v1613
        %v1616 = vor.u32 %v1614, %v1615
        %v1617 = vsub.s32 4294967266, %v1612
        %v1618 = vadd.s32 %v1617, 127
        %v1619 = vshll.u32 %v1618, 23
        %v1620 = vor.u32 4788187, %v1619
        %v1621 = vand.u32 2147483647, %v1620
        %v1623 = vcvt.s32.f32 %v1616
        %v1624 = vmul.f32 %v1623, %v1621
        %v1625 = vxor.u32 %v1624, 2147483648
        %v1626 = vsel %vm1543, %v1625, %v1624
        %v1627 = vsub.s32 4, %v1603
        %v1628 = vsel %vm1543, %v1627, %v1603
        %v1629 = vsel %vm1542, %v471, %v1626
        %v1630 = vsel %vm1542, 0, %v1628
        %v1631 = vcosq.f32.pop %v1629
        %v1632 = vsinq.f32.pop %v1629
        %vm1633 = vweird.f32 %v471
        %v1634 = vadd.s32 %v1630, 3
        %v1635 = vand.u32 %v1634, 3
        %vm1636 = vcmp.lt.s32.totalorder %v1635, 2
        %vm1637 = vcmp.eq.s32.totalorder %v1635, 0
        %v1638 = vxor.u32 %v1632, 2147483648
        %v1639 = vsel %vm1637, %v1631, %v1638
        %vm1640 = vcmp.eq.s32.totalorder %v1635, 2
        %v1641 = vxor.u32 %v1631, 2147483648
        %v1642 = vsel %vm1640, %v1641, %v1632
        %v1643 = vsel %vm1636, %v1639, %v1642
        %v1644 = vsel %vm1633, nan, %v1643
        %v1645 = vand.u32 2147483647, %v476
        %vm1646 = vcmp.le.f32.partialorder %v1645, 0.7853982
        %vm1647 = vcmp.lt.s32.totalorder %v476, 0
        %v1648 = vand.u32 %v476, 2139095040
        %v1649 = vshrl.u32 %v1648, 23
        %v1650 = vsub.s32 %v1649, 127
        %v1651 = vand.u32 2147483647, %v476
        %v1652 = vand.u32 %v1651, 8388607
        %v1653 = vor.u32 %v1652, 8388608
        %v1654 = vsub.s32 0, %v1653
        %v1655 = vadd.s32 %v1650, 1
        %vm1656 = vcmp.gt.s32.totalorder %v1655, 0
        %v1657 = vsel %vm1656, %v1655, 0
        %v1658 = vshrl.u32 %v1657, 5
        %v1659 = vand.u32 %v1657, 31
        %v1660 = vsub.s32 32, %v1659
        %v1661 = vshrl.u32 683565275, %v1660
        %v1662 = vshll.u32 683565275, %v1659
        %v1663 = vshrl.u32 2475754826, %v1660
        %v1664 = vor.u32 %v1662, %v1663
        %v1665 = vshll.u32 2475754826, %v1659
        %v1666 = vshrl.u32 2131351028, %v1660
        %v1667 = vor.u32 %v1665, %v1666
        %v1668 = vshll.u32 2131351028, %v1659
        %v1669 = vshrl.u32 2102212464, %v1660
        %v1670 = vor.u32 %v1668, %v1669
        %v1671 = vshll.u32 2102212464, %v1659
        %v1672 = vshrl.u32 920167782, %v1660
        %v1673 = vor.u32 %v1671, %v1672
        %v1674 = vshll.u32 920167782, %v1659
        %v1675 = vshrl.u32 1326507024, %v1660
        %v1676 = vor.u32 %v1674, %v1675
        %vm1677 = vcmp.lt.s32.totalorder %v1658, 1
        %vm1678 = vcmp.lt.s32.totalorder %v1658, 2
        %vm1679 = vcmp.lt.s32.totalorder %v1658, 3
        %vm1680 = vcmp.lt.s32.totalorder %v1658, 4
        %v1681 = vsel %vm1677, %v1661, %v1664
        %v1682 = vsel %vm1680, %v1670, 2102212464
        %v1683 = vsel %vm1679, %v1667, %v1682
        %v1684 = vsel %vm1678, %v1681, %v1683
        %v1685 = vsel %vm1677, %v1664, %v1667
        %v1686 = vsel %vm1680, %v1673, 920167782
        %v1687 = vsel %vm1679, %v1670, %v1686
        %v1688 = vsel %vm1678, %v1685, %v1687
        %v1689 = vsel %vm1677, %v1667, %v1670
        %v1690 = vsel %vm1680, %v1676, 1326507024
        %v1691 = vsel %vm1679, %v1673, %v1690
        %v1692 = vsel %vm1678, %v1689, %v1691
        %v1693 = vshll.u32 %v1653, 8
        %v1694 = vmul.u32.u64.compose %v1693, %v1692
        %v1695 = vextract.low.u32 %v1694
        %v1696 = vextract.high.u32 %v1694
        %v1697 = vmul.u32.u64.compose %v1693, %v1688
        %v1698 = vextract.low.u32 %v1697
        %v1699 = vextract.high.u32 %v1697
        %v1700 = vmul.u32 %v1693, %v1684
        %v1701 = vadd.s32 %v1696, %v1698
        %vm1702 = vc.u32 %v1696, %v1698
        %v1703 = vadd.s32 %v1699, 1
        %v1704 = vsel %vm1702, %v1703, %v1699
        %v1705 = vadd.s32 %v1700, %v1704
        %v1706 = vadd.s32 %v1705, 536870912
        %v1707 = vshrl.u32 %v1706, 30
        %v1708 = vshll.u32 %v1707, 30
        %v1709 = vsub.s32 %v1705, %v1708
        %vm1710 = vcmp.lt.s32.totalorder %v1709, 0
        %v1711 = vsub.s32 0, %v1709
        %v1712 = vsel %vm1710, %v1711, %v1709
        %v1713 = vclz %v1712
        %v1714 = vsub.s32 %v1713, 2
        %vm1715 = vcmp.gt.s32.totalorder 0, %v1714
        %v1716 = vsel %vm1715, 0, %v1714
        %v1717 = vsub.s32 32, %v1716
        %v1718 = vshll.u32 %v1709, %v1716
        %v1719 = vshrl.u32 %v1701, %v1717
        %v1720 = vor.u32 %v1718, %v1719
        %v1721 = vsub.s32 4294967266, %v1716
        %v1722 = vadd.s32 %v1721, 127
        %v1723 = vshll.u32 %v1722, 23
        %v1724 = vor.u32 4788187, %v1723
        %v1725 = vand.u32 2147483647, %v1724
        %v1727 = vcvt.s32.f32 %v1720
        %v1728 = vmul.f32 %v1727, %v1725
        %v1729 = vxor.u32 %v1728, 2147483648
        %v1730 = vsel %vm1647, %v1729, %v1728
        %v1731 = vsub.s32 4, %v1707
        %v1732 = vsel %vm1647, %v1731, %v1707
        %v1733 = vsel %vm1646, %v476, %v1730
        %v1734 = vsel %vm1646, 0, %v1732
        %v1735 = vcosq.f32.pop %v1733
        %v1736 = vsinq.f32.pop %v1733
        %vm1737 = vweird.f32 %v476
        %v1738 = vadd.s32 %v1734, 3
        %v1739 = vand.u32 %v1738, 3
        %vm1740 = vcmp.lt.s32.totalorder %v1739, 2
        %vm1741 = vcmp.eq.s32.totalorder %v1739, 0
        %v1742 = vxor.u32 %v1736, 2147483648
        %v1743 = vsel %vm1741, %v1735, %v1742
        %vm1744 = vcmp.eq.s32.totalorder %v1739, 2
        %v1745 = vxor.u32 %v1735, 2147483648
        %v1746 = vsel %vm1744, %v1745, %v1736
        %v1747 = vsel %vm1740, %v1743, %v1746
        %v1748 = vsel %vm1737, nan, %v1747
        %v1749 = vand.u32 2147483647, %v481
        %vm1750 = vcmp.le.f32.partialorder %v1749, 0.7853982
        %vm1751 = vcmp.lt.s32.totalorder %v481, 0
        %v1752 = vand.u32 %v481, 2139095040
        %v1753 = vshrl.u32 %v1752, 23
        %v1754 = vsub.s32 %v1753, 127
        %v1755 = vand.u32 2147483647, %v481
        %v1756 = vand.u32 %v1755, 8388607
        %v1757 = vor.u32 %v1756, 8388608
        %v1758 = vsub.s32 0, %v1757
        %v1759 = vadd.s32 %v1754, 1
        %vm1760 = vcmp.gt.s32.totalorder %v1759, 0
        %v1761 = vsel %vm1760, %v1759, 0
        %v1762 = vshrl.u32 %v1761, 5
        %v1763 = vand.u32 %v1761, 31
        %v1764 = vsub.s32 32, %v1763
        %v1765 = vshrl.u32 683565275, %v1764
        %v1766 = vshll.u32 683565275, %v1763
        %v1767 = vshrl.u32 2475754826, %v1764
        %v1768 = vor.u32 %v1766, %v1767
        %v1769 = vshll.u32 2475754826, %v1763
        %v1770 = vshrl.u32 2131351028, %v1764
        %v1771 = vor.u32 %v1769, %v1770
        %v1772 = vshll.u32 2131351028, %v1763
        %v1773 = vshrl.u32 2102212464, %v1764
        %v1774 = vor.u32 %v1772, %v1773
        %v1775 = vshll.u32 2102212464, %v1763
        %v1776 = vshrl.u32 920167782, %v1764
        %v1777 = vor.u32 %v1775, %v1776
        %v1778 = vshll.u32 920167782, %v1763
        %v1779 = vshrl.u32 1326507024, %v1764
        %v1780 = vor.u32 %v1778, %v1779
        %vm1781 = vcmp.lt.s32.totalorder %v1762, 1
        %vm1782 = vcmp.lt.s32.totalorder %v1762, 2
        %vm1783 = vcmp.lt.s32.totalorder %v1762, 3
        %vm1784 = vcmp.lt.s32.totalorder %v1762, 4
        %v1785 = vsel %vm1781, %v1765, %v1768
        %v1786 = vsel %vm1784, %v1774, 2102212464
        %v1787 = vsel %vm1783, %v1771, %v1786
        %v1788 = vsel %vm1782, %v1785, %v1787
        %v1789 = vsel %vm1781, %v1768, %v1771
        %v1790 = vsel %vm1784, %v1777, 920167782
        %v1791 = vsel %vm1783, %v1774, %v1790
        %v1792 = vsel %vm1782, %v1789, %v1791
        %v1793 = vsel %vm1781, %v1771, %v1774
        %v1794 = vsel %vm1784, %v1780, 1326507024
        %v1795 = vsel %vm1783, %v1777, %v1794
        %v1796 = vsel %vm1782, %v1793, %v1795
        %v1797 = vshll.u32 %v1757, 8
        %v1798 = vmul.u32.u64.compose %v1797, %v1796
        %v1799 = vextract.low.u32 %v1798
        %v1800 = vextract.high.u32 %v1798
        %v1801 = vmul.u32.u64.compose %v1797, %v1792
        %v1802 = vextract.low.u32 %v1801
        %v1803 = vextract.high.u32 %v1801
        %v1804 = vmul.u32 %v1797, %v1788
        %v1805 = vadd.s32 %v1800, %v1802
        %vm1806 = vc.u32 %v1800, %v1802
        %v1807 = vadd.s32 %v1803, 1
        %v1808 = vsel %vm1806, %v1807, %v1803
        %v1809 = vadd.s32 %v1804, %v1808
        %v1810 = vadd.s32 %v1809, 536870912
        %v1811 = vshrl.u32 %v1810, 30
        %v1812 = vshll.u32 %v1811, 30
        %v1813 = vsub.s32 %v1809, %v1812
        %vm1814 = vcmp.lt.s32.totalorder %v1813, 0
        %v1815 = vsub.s32 0, %v1813
        %v1816 = vsel %vm1814, %v1815, %v1813
        %v1817 = vclz %v1816
        %v1818 = vsub.s32 %v1817, 2
        %vm1819 = vcmp.gt.s32.totalorder 0, %v1818
        %v1820 = vsel %vm1819, 0, %v1818
        %v1821 = vsub.s32 32, %v1820
        %v1822 = vshll.u32 %v1813, %v1820
        %v1823 = vshrl.u32 %v1805, %v1821
        %v1824 = vor.u32 %v1822, %v1823
        %v1825 = vsub.s32 4294967266, %v1820
        %v1826 = vadd.s32 %v1825, 127
        %v1827 = vshll.u32 %v1826, 23
        %v1828 = vor.u32 4788187, %v1827
        %v1829 = vand.u32 2147483647, %v1828
        %v1831 = vcvt.s32.f32 %v1824
        %v1832 = vmul.f32 %v1831, %v1829
        %v1833 = vxor.u32 %v1832, 2147483648
        %v1834 = vsel %vm1751, %v1833, %v1832
        %v1835 = vsub.s32 4, %v1811
        %v1836 = vsel %vm1751, %v1835, %v1811
        %v1837 = vsel %vm1750, %v481, %v1834
        %v1838 = vsel %vm1750, 0, %v1836
        %v1839 = vcosq.f32.pop %v1837
        %v1840 = vsinq.f32.pop %v1837
        %vm1841 = vweird.f32 %v481
        %v1842 = vadd.s32 %v1838, 3
        %v1843 = vand.u32 %v1842, 3
        %vm1844 = vcmp.lt.s32.totalorder %v1843, 2
        %vm1845 = vcmp.eq.s32.totalorder %v1843, 0
        %v1846 = vxor.u32 %v1840, 2147483648
        %v1847 = vsel %vm1845, %v1839, %v1846
        %vm1848 = vcmp.eq.s32.totalorder %v1843, 2
        %v1849 = vxor.u32 %v1839, 2147483648
        %v1850 = vsel %vm1848, %v1849, %v1840
        %v1851 = vsel %vm1844, %v1847, %v1850
        %v1852 = vsel %vm1841, nan, %v1851
        %v1853 = vand.u32 2147483647, %v486
        %vm1854 = vcmp.le.f32.partialorder %v1853, 0.7853982
        %vm1855 = vcmp.lt.s32.totalorder %v486, 0
        %v1856 = vand.u32 %v486, 2139095040
        %v1857 = vshrl.u32 %v1856, 23
        %v1858 = vsub.s32 %v1857, 127
        %v1859 = vand.u32 2147483647, %v486
        %v1860 = vand.u32 %v1859, 8388607
        %v1861 = vor.u32 %v1860, 8388608
        %v1862 = vsub.s32 0, %v1861
        %v1863 = vadd.s32 %v1858, 1
        %vm1864 = vcmp.gt.s32.totalorder %v1863, 0
        %v1865 = vsel %vm1864, %v1863, 0
        %v1866 = vshrl.u32 %v1865, 5
        %v1867 = vand.u32 %v1865, 31
        %v1868 = vsub.s32 32, %v1867
        %v1869 = vshrl.u32 683565275, %v1868
        %v1870 = vshll.u32 683565275, %v1867
        %v1871 = vshrl.u32 2475754826, %v1868
        %v1872 = vor.u32 %v1870, %v1871
        %v1873 = vshll.u32 2475754826, %v1867
        %v1874 = vshrl.u32 2131351028, %v1868
        %v1875 = vor.u32 %v1873, %v1874
        %v1876 = vshll.u32 2131351028, %v1867
        %v1877 = vshrl.u32 2102212464, %v1868
        %v1878 = vor.u32 %v1876, %v1877
        %v1879 = vshll.u32 2102212464, %v1867
        %v1880 = vshrl.u32 920167782, %v1868
        %v1881 = vor.u32 %v1879, %v1880
        %v1882 = vshll.u32 920167782, %v1867
        %v1883 = vshrl.u32 1326507024, %v1868
        %v1884 = vor.u32 %v1882, %v1883
        %vm1885 = vcmp.lt.s32.totalorder %v1866, 1
        %vm1886 = vcmp.lt.s32.totalorder %v1866, 2
        %vm1887 = vcmp.lt.s32.totalorder %v1866, 3
        %vm1888 = vcmp.lt.s32.totalorder %v1866, 4
        %v1889 = vsel %vm1885, %v1869, %v1872
        %v1890 = vsel %vm1888, %v1878, 2102212464
        %v1891 = vsel %vm1887, %v1875, %v1890
        %v1892 = vsel %vm1886, %v1889, %v1891
        %v1893 = vsel %vm1885, %v1872, %v1875
        %v1894 = vsel %vm1888, %v1881, 920167782
        %v1895 = vsel %vm1887, %v1878, %v1894
        %v1896 = vsel %vm1886, %v1893, %v1895
        %v1897 = vsel %vm1885, %v1875, %v1878
        %v1898 = vsel %vm1888, %v1884, 1326507024
        %v1899 = vsel %vm1887, %v1881, %v1898
        %v1900 = vsel %vm1886, %v1897, %v1899
        %v1901 = vshll.u32 %v1861, 8
        %v1902 = vmul.u32.u64.compose %v1901, %v1900
        %v1903 = vextract.low.u32 %v1902
        %v1904 = vextract.high.u32 %v1902
        %v1905 = vmul.u32.u64.compose %v1901, %v1896
        %v1906 = vextract.low.u32 %v1905
        %v1907 = vextract.high.u32 %v1905
        %v1908 = vmul.u32 %v1901, %v1892
        %v1909 = vadd.s32 %v1904, %v1906
        %vm1910 = vc.u32 %v1904, %v1906
        %v1911 = vadd.s32 %v1907, 1
        %v1912 = vsel %vm1910, %v1911, %v1907
        %v1913 = vadd.s32 %v1908, %v1912
        %v1914 = vadd.s32 %v1913, 536870912
        %v1915 = vshrl.u32 %v1914, 30
        %v1916 = vshll.u32 %v1915, 30
        %v1917 = vsub.s32 %v1913, %v1916
        %vm1918 = vcmp.lt.s32.totalorder %v1917, 0
        %v1919 = vsub.s32 0, %v1917
        %v1920 = vsel %vm1918, %v1919, %v1917
        %v1921 = vclz %v1920
        %v1922 = vsub.s32 %v1921, 2
        %vm1923 = vcmp.gt.s32.totalorder 0, %v1922
        %v1924 = vsel %vm1923, 0, %v1922
        %v1925 = vsub.s32 32, %v1924
        %v1926 = vshll.u32 %v1917, %v1924
        %v1927 = vshrl.u32 %v1909, %v1925
        %v1928 = vor.u32 %v1926, %v1927
        %v1929 = vsub.s32 4294967266, %v1924
        %v1930 = vadd.s32 %v1929, 127
        %v1931 = vshll.u32 %v1930, 23
        %v1932 = vor.u32 4788187, %v1931
        %v1933 = vand.u32 2147483647, %v1932
        %v1935 = vcvt.s32.f32 %v1928
        %v1936 = vmul.f32 %v1935, %v1933
        %v1937 = vxor.u32 %v1936, 2147483648
        %v1938 = vsel %vm1855, %v1937, %v1936
        %v1939 = vsub.s32 4, %v1915
        %v1940 = vsel %vm1855, %v1939, %v1915
        %v1941 = vsel %vm1854, %v486, %v1938
        %v1942 = vsel %vm1854, 0, %v1940
        %v1943 = vcosq.f32.pop %v1941
        %v1944 = vsinq.f32.pop %v1941
        %vm1945 = vweird.f32 %v486
        %v1946 = vadd.s32 %v1942, 3
        %v1947 = vand.u32 %v1946, 3
        %vm1948 = vcmp.lt.s32.totalorder %v1947, 2
        %vm1949 = vcmp.eq.s32.totalorder %v1947, 0
        %v1950 = vxor.u32 %v1944, 2147483648
        %v1951 = vsel %vm1949, %v1943, %v1950
        %vm1952 = vcmp.eq.s32.totalorder %v1947, 2
        %v1953 = vxor.u32 %v1943, 2147483648
        %v1954 = vsel %vm1952, %v1953, %v1944
        %v1955 = vsel %vm1948, %v1951, %v1954
        %v1956 = vsel %vm1945, nan, %v1955
        %v1957 = vand.u32 2147483647, %v491
        %vm1958 = vcmp.le.f32.partialorder %v1957, 0.7853982
        %vm1959 = vcmp.lt.s32.totalorder %v491, 0
        %v1960 = vand.u32 %v491, 2139095040
        %v1961 = vshrl.u32 %v1960, 23
        %v1962 = vsub.s32 %v1961, 127
        %v1963 = vand.u32 2147483647, %v491
        %v1964 = vand.u32 %v1963, 8388607
        %v1965 = vor.u32 %v1964, 8388608
        %v1966 = vsub.s32 0, %v1965
        %v1967 = vadd.s32 %v1962, 1
        %vm1968 = vcmp.gt.s32.totalorder %v1967, 0
        %v1969 = vsel %vm1968, %v1967, 0
        %v1970 = vshrl.u32 %v1969, 5
        %v1971 = vand.u32 %v1969, 31
        %v1972 = vsub.s32 32, %v1971
        %v1973 = vshrl.u32 683565275, %v1972
        %v1974 = vshll.u32 683565275, %v1971
        %v1975 = vshrl.u32 2475754826, %v1972
        %v1976 = vor.u32 %v1974, %v1975
        %v1977 = vshll.u32 2475754826, %v1971
        %v1978 = vshrl.u32 2131351028, %v1972
        %v1979 = vor.u32 %v1977, %v1978
        %v1980 = vshll.u32 2131351028, %v1971
        %v1981 = vshrl.u32 2102212464, %v1972
        %v1982 = vor.u32 %v1980, %v1981
        %v1983 = vshll.u32 2102212464, %v1971
        %v1984 = vshrl.u32 920167782, %v1972
        %v1985 = vor.u32 %v1983, %v1984
        %v1986 = vshll.u32 920167782, %v1971
        %v1987 = vshrl.u32 1326507024, %v1972
        %v1988 = vor.u32 %v1986, %v1987
        %vm1989 = vcmp.lt.s32.totalorder %v1970, 1
        %vm1990 = vcmp.lt.s32.totalorder %v1970, 2
        %vm1991 = vcmp.lt.s32.totalorder %v1970, 3
        %vm1992 = vcmp.lt.s32.totalorder %v1970, 4
        %v1993 = vsel %vm1989, %v1973, %v1976
        %v1994 = vsel %vm1992, %v1982, 2102212464
        %v1995 = vsel %vm1991, %v1979, %v1994
        %v1996 = vsel %vm1990, %v1993, %v1995
        %v1997 = vsel %vm1989, %v1976, %v1979
        %v1998 = vsel %vm1992, %v1985, 920167782
        %v1999 = vsel %vm1991, %v1982, %v1998
        %v2000 = vsel %vm1990, %v1997, %v1999
        %v2001 = vsel %vm1989, %v1979, %v1982
        %v2002 = vsel %vm1992, %v1988, 1326507024
        %v2003 = vsel %vm1991, %v1985, %v2002
        %v2004 = vsel %vm1990, %v2001, %v2003
        %v2005 = vshll.u32 %v1965, 8
        %v2006 = vmul.u32.u64.compose %v2005, %v2004
        %v2007 = vextract.low.u32 %v2006
        %v2008 = vextract.high.u32 %v2006
        %v2009 = vmul.u32.u64.compose %v2005, %v2000
        %v2010 = vextract.low.u32 %v2009
        %v2011 = vextract.high.u32 %v2009
        %v2012 = vmul.u32 %v2005, %v1996
        %v2013 = vadd.s32 %v2008, %v2010
        %vm2014 = vc.u32 %v2008, %v2010
        %v2015 = vadd.s32 %v2011, 1
        %v2016 = vsel %vm2014, %v2015, %v2011
        %v2017 = vadd.s32 %v2012, %v2016
        %v2018 = vadd.s32 %v2017, 536870912
        %v2019 = vshrl.u32 %v2018, 30
        %v2020 = vshll.u32 %v2019, 30
        %v2021 = vsub.s32 %v2017, %v2020
        %vm2022 = vcmp.lt.s32.totalorder %v2021, 0
        %v2023 = vsub.s32 0, %v2021
        %v2024 = vsel %vm2022, %v2023, %v2021
        %v2025 = vclz %v2024
        %v2026 = vsub.s32 %v2025, 2
        %vm2027 = vcmp.gt.s32.totalorder 0, %v2026
        %v2028 = vsel %vm2027, 0, %v2026
        %v2029 = vsub.s32 32, %v2028
        %v2030 = vshll.u32 %v2021, %v2028
        %v2031 = vshrl.u32 %v2013, %v2029
        %v2032 = vor.u32 %v2030, %v2031
        %v2033 = vsub.s32 4294967266, %v2028
        %v2034 = vadd.s32 %v2033, 127
        %v2035 = vshll.u32 %v2034, 23
        %v2036 = vor.u32 4788187, %v2035
        %v2037 = vand.u32 2147483647, %v2036
        %v2039 = vcvt.s32.f32 %v2032
        %v2040 = vmul.f32 %v2039, %v2037
        %v2041 = vxor.u32 %v2040, 2147483648
        %v2042 = vsel %vm1959, %v2041, %v2040
        %v2043 = vsub.s32 4, %v2019
        %v2044 = vsel %vm1959, %v2043, %v2019
        %v2045 = vsel %vm1958, %v491, %v2042
        %v2046 = vsel %vm1958, 0, %v2044
        %v2047 = vcosq.f32.pop %v2045
        %v2048 = vsinq.f32.pop %v2045
        %vm2049 = vweird.f32 %v491
        %v2050 = vadd.s32 %v2046, 3
        %v2051 = vand.u32 %v2050, 3
        %vm2052 = vcmp.lt.s32.totalorder %v2051, 2
        %vm2053 = vcmp.eq.s32.totalorder %v2051, 0
        %v2054 = vxor.u32 %v2048, 2147483648
        %v2055 = vsel %vm2053, %v2047, %v2054
        %vm2056 = vcmp.eq.s32.totalorder %v2051, 2
        %v2057 = vxor.u32 %v2047, 2147483648
        %v2058 = vsel %vm2056, %v2057, %v2048
        %v2059 = vsel %vm2052, %v2055, %v2058
        %v2060 = vsel %vm2049, nan, %v2059
        %v2061 = vand.u32 2147483647, %v496
        %vm2062 = vcmp.le.f32.partialorder %v2061, 0.7853982
        %vm2063 = vcmp.lt.s32.totalorder %v496, 0
        %v2064 = vand.u32 %v496, 2139095040
        %v2065 = vshrl.u32 %v2064, 23
        %v2066 = vsub.s32 %v2065, 127
        %v2067 = vand.u32 2147483647, %v496
        %v2068 = vand.u32 %v2067, 8388607
        %v2069 = vor.u32 %v2068, 8388608
        %v2070 = vsub.s32 0, %v2069
        %v2071 = vadd.s32 %v2066, 1
        %vm2072 = vcmp.gt.s32.totalorder %v2071, 0
        %v2073 = vsel %vm2072, %v2071, 0
        %v2074 = vshrl.u32 %v2073, 5
        %v2075 = vand.u32 %v2073, 31
        %v2076 = vsub.s32 32, %v2075
        %v2077 = vshrl.u32 683565275, %v2076
        %v2078 = vshll.u32 683565275, %v2075
        %v2079 = vshrl.u32 2475754826, %v2076
        %v2080 = vor.u32 %v2078, %v2079
        %v2081 = vshll.u32 2475754826, %v2075
        %v2082 = vshrl.u32 2131351028, %v2076
        %v2083 = vor.u32 %v2081, %v2082
        %v2084 = vshll.u32 2131351028, %v2075
        %v2085 = vshrl.u32 2102212464, %v2076
        %v2086 = vor.u32 %v2084, %v2085
        %v2087 = vshll.u32 2102212464, %v2075
        %v2088 = vshrl.u32 920167782, %v2076
        %v2089 = vor.u32 %v2087, %v2088
        %v2090 = vshll.u32 920167782, %v2075
        %v2091 = vshrl.u32 1326507024, %v2076
        %v2092 = vor.u32 %v2090, %v2091
        %vm2093 = vcmp.lt.s32.totalorder %v2074, 1
        %vm2094 = vcmp.lt.s32.totalorder %v2074, 2
        %vm2095 = vcmp.lt.s32.totalorder %v2074, 3
        %vm2096 = vcmp.lt.s32.totalorder %v2074, 4
        %v2097 = vsel %vm2093, %v2077, %v2080
        %v2098 = vsel %vm2096, %v2086, 2102212464
        %v2099 = vsel %vm2095, %v2083, %v2098
        %v2100 = vsel %vm2094, %v2097, %v2099
        %v2101 = vsel %vm2093, %v2080, %v2083
        %v2102 = vsel %vm2096, %v2089, 920167782
        %v2103 = vsel %vm2095, %v2086, %v2102
        %v2104 = vsel %vm2094, %v2101, %v2103
        %v2105 = vsel %vm2093, %v2083, %v2086
        %v2106 = vsel %vm2096, %v2092, 1326507024
        %v2107 = vsel %vm2095, %v2089, %v2106
        %v2108 = vsel %vm2094, %v2105, %v2107
        %v2109 = vshll.u32 %v2069, 8
        %v2110 = vmul.u32.u64.compose %v2109, %v2108
        %v2111 = vextract.low.u32 %v2110
        %v2112 = vextract.high.u32 %v2110
        %v2113 = vmul.u32.u64.compose %v2109, %v2104
        %v2114 = vextract.low.u32 %v2113
        %v2115 = vextract.high.u32 %v2113
        %v2116 = vmul.u32 %v2109, %v2100
        %v2117 = vadd.s32 %v2112, %v2114
        %vm2118 = vc.u32 %v2112, %v2114
        %v2119 = vadd.s32 %v2115, 1
        %v2120 = vsel %vm2118, %v2119, %v2115
        %v2121 = vadd.s32 %v2116, %v2120
        %v2122 = vadd.s32 %v2121, 536870912
        %v2123 = vshrl.u32 %v2122, 30
        %v2124 = vshll.u32 %v2123, 30
        %v2125 = vsub.s32 %v2121, %v2124
        %vm2126 = vcmp.lt.s32.totalorder %v2125, 0
        %v2127 = vsub.s32 0, %v2125
        %v2128 = vsel %vm2126, %v2127, %v2125
        %v2129 = vclz %v2128
        %v2130 = vsub.s32 %v2129, 2
        %vm2131 = vcmp.gt.s32.totalorder 0, %v2130
        %v2132 = vsel %vm2131, 0, %v2130
        %v2133 = vsub.s32 32, %v2132
        %v2134 = vshll.u32 %v2125, %v2132
        %v2135 = vshrl.u32 %v2117, %v2133
        %v2136 = vor.u32 %v2134, %v2135
        %v2137 = vsub.s32 4294967266, %v2132
        %v2138 = vadd.s32 %v2137, 127
        %v2139 = vshll.u32 %v2138, 23
        %v2140 = vor.u32 4788187, %v2139
        %v2141 = vand.u32 2147483647, %v2140
        %v2143 = vcvt.s32.f32 %v2136
        %v2144 = vmul.f32 %v2143, %v2141
        %v2145 = vxor.u32 %v2144, 2147483648
        %v2146 = vsel %vm2063, %v2145, %v2144
        %v2147 = vsub.s32 4, %v2123
        %v2148 = vsel %vm2063, %v2147, %v2123
        %v2149 = vsel %vm2062, %v496, %v2146
        %v2150 = vsel %vm2062, 0, %v2148
        %v2151 = vcosq.f32.pop %v2149
        %v2152 = vsinq.f32.pop %v2149
        %vm2153 = vweird.f32 %v496
        %v2154 = vadd.s32 %v2150, 3
        %v2155 = vand.u32 %v2154, 3
        %vm2156 = vcmp.lt.s32.totalorder %v2155, 2
        %vm2157 = vcmp.eq.s32.totalorder %v2155, 0
        %v2158 = vxor.u32 %v2152, 2147483648
        %v2159 = vsel %vm2157, %v2151, %v2158
        %vm2160 = vcmp.eq.s32.totalorder %v2155, 2
        %v2161 = vxor.u32 %v2151, 2147483648
        %v2162 = vsel %vm2160, %v2161, %v2152
        %v2163 = vsel %vm2156, %v2159, %v2162
        %v2164 = vsel %vm2153, nan, %v2163
        %vm2165 = vcmp.ge.f32.partialorder %v421, 0.0
        %vm2166 = vcmp.ge.f32.partialorder %v426, 0.0
        %vm2167 = vcmp.ge.f32.partialorder %v431, 0.0
        %vm2168 = vcmp.ge.f32.partialorder %v436, 0.0
        %vm2169 = vcmp.ge.f32.partialorder %v441, 0.0
        %vm2170 = vcmp.ge.f32.partialorder %v446, 0.0
        %vm2171 = vcmp.ge.f32.partialorder %v451, 0.0
        %vm2172 = vcmp.ge.f32.partialorder %v456, 0.0
        %vm2173 = vcmp.ge.f32.partialorder %v461, 0.0
        %vm2174 = vcmp.ge.f32.partialorder %v466, 0.0
        %vm2175 = vcmp.ge.f32.partialorder %v471, 0.0
        %vm2176 = vcmp.ge.f32.partialorder %v476, 0.0
        %vm2177 = vcmp.ge.f32.partialorder %v481, 0.0
        %vm2178 = vcmp.ge.f32.partialorder %v486, 0.0
        %vm2179 = vcmp.ge.f32.partialorder %v491, 0.0
        %vm2180 = vcmp.ge.f32.partialorder %v496, 0.0
        %v2181 = vmul.f32 %v421, 0.01
        %v2182 = vmul.f32 %v426, 0.01
        %v2183 = vmul.f32 %v431, 0.01
        %v2184 = vmul.f32 %v436, 0.01
        %v2185 = vmul.f32 %v441, 0.01
        %v2186 = vmul.f32 %v446, 0.01
        %v2187 = vmul.f32 %v451, 0.01
        %v2188 = vmul.f32 %v456, 0.01
        %v2189 = vmul.f32 %v461, 0.01
        %v2190 = vmul.f32 %v466, 0.01
        %v2191 = vmul.f32 %v471, 0.01
        %v2192 = vmul.f32 %v476, 0.01
        %v2193 = vmul.f32 %v481, 0.01
        %v2194 = vmul.f32 %v486, 0.01
        %v2195 = vmul.f32 %v491, 0.01
        %v2196 = vmul.f32 %v496, 0.01
        %v2197 = vsel %vm2165, %v421, %v2181
        %v2198 = vsel %vm2166, %v426, %v2182
        %v2199 = vsel %vm2167, %v431, %v2183
        %v2200 = vsel %vm2168, %v436, %v2184
        %v2201 = vsel %vm2169, %v441, %v2185
        %v2202 = vsel %vm2170, %v446, %v2186
        %v2203 = vsel %vm2171, %v451, %v2187
        %v2204 = vsel %vm2172, %v456, %v2188
        %v2205 = vsel %vm2173, %v461, %v2189
        %v2206 = vsel %vm2174, %v466, %v2190
        %v2207 = vsel %vm2175, %v471, %v2191
        %v2208 = vsel %vm2176, %v476, %v2192
        %v2209 = vsel %vm2177, %v481, %v2193
        %v2210 = vsel %vm2178, %v486, %v2194
        %v2211 = vsel %vm2179, %v491, %v2195
        %v2212 = vsel %vm2180, %v496, %v2196
        %vm2213 = vcmp.lt.s32.totalorder %v500, 32
        %v2214 = vsel %vm2213, %v604, %v2197
        %v2215 = vsel %vm2213, %v708, %v2198
        %v2216 = vsel %vm2213, %v812, %v2199
        %v2217 = vsel %vm2213, %v916, %v2200
        %v2218 = vsel %vm2213, %v1020, %v2201
        %v2219 = vsel %vm2213, %v1124, %v2202
        %v2220 = vsel %vm2213, %v1228, %v2203
        %v2221 = vsel %vm2213, %v1332, %v2204
        %v2222 = vsel %vm2213, %v1436, %v2205
        %v2223 = vsel %vm2213, %v1540, %v2206
        %v2224 = vsel %vm2213, %v1644, %v2207
        %v2225 = vsel %vm2213, %v1748, %v2208
        %v2226 = vsel %vm2213, %v1852, %v2209
        %v2227 = vsel %vm2213, %v1956, %v2210
        %v2228 = vsel %vm2213, %v2060, %v2211
        %v2229 = vsel %vm2213, %v2164, %v2212
        %v2230 = vld [vmem:[%s3] sm:$0xff]
        %v2231 = vld [vmem:[%s3 + $0x8] sm:$0xff]
        %v2232 = vld [vmem:[%s3 + $0x10] sm:$0xff]
        %v2233 = vld [vmem:[%s3 + $0x18] sm:$0xff]
        %v2234 = vld [vmem:[%s3 + $0x20] sm:$0xff]
        %v2235 = vld [vmem:[%s3 + $0x28] sm:$0xff]
        %v2236 = vld [vmem:[%s3 + $0x30] sm:$0xff]
        %v2237 = vld [vmem:[%s3 + $0x38] sm:$0xff]
        %v2238 = vld [vmem:[%s4] sm:$0x1]
        %v2240 = vlaneseq
        %v2241 = vshrl.u32 %v2240, 7
        %v2242 = vsub.s32 0, %v2241
        %v2243 = vrot.slane %v2238, %v2242
        %vm2245 = vcmask 523264
        %v2247 = vsel %vm2245, %v2214, 0
        %v2250 = vsel %vm2245, %v2215, 0
        %v2253 = vsel %vm2245, %v2216, 0
        %v2256 = vsel %vm2245, %v2217, 0
        %v2259 = vsel %vm2245, %v2218, 0
        %v2262 = vsel %vm2245, %v2219, 0
        %v2265 = vsel %vm2245, %v2220, 0
        %v2268 = vsel %vm2245, %v2221, 0
        %v2271 = vsel %vm2245, %v2222, 0
        %v2274 = vsel %vm2245, %v2223, 0
        %v2277 = vsel %vm2245, %v2224, 0
        %v2280 = vsel %vm2245, %v2225, 0
        %v2283 = vsel %vm2245, %v2226, 0
        %v2286 = vsel %vm2245, %v2227, 0
        %v2289 = vsel %vm2245, %v2228, 0
        %v2292 = vsel %vm2245, %v2229, 0
        %2294 = vmatprep.subr.mxu0 0.0
        %2295 = vmatpush1.msra.mxu0 0.0
        %2296 = vmatprep.subr.mxu0 0.0
        %2297 = vmatpush1.msra.mxu0 0.0
        %2298 = vmatprep.subr.mxu0 0.0
        %2299 = vmatpush1.msra.mxu0 0.0
        %2300 = vmatprep.subr.mxu0 0.0
        %2301 = vmatpush1.msra.mxu0 0.0
        %2302 = vmatprep.subr.mxu0 0.0
        %2303 = vmatpush1.msra.mxu0 0.0
        %2304 = vmatprep.subr.mxu0 0.0
        %2305 = vmatpush1.msra.mxu0 0.0
        %2306 = vmatprep.subr.mxu0 0.0
        %2307 = vmatpush1.msra.mxu0 0.0
        %2308 = vmatprep.subr.mxu0 0.0
        %2309 = vmatpush1.msra.mxu0 0.0
        %2310 = vmatprep.subr.mxu0 0.0
        %2311 = vmatpush1.msra.mxu0 %v2237
        %2312 = vmatprep.subr.mxu0 0.0
        %2313 = vmatpush1.msra.mxu0 %v2236
        %2314 = vmatprep.subr.mxu0 0.0
        %2315 = vmatpush1.msra.mxu0 %v2235
        %2316 = vmatprep.subr.mxu0 0.0
        %2317 = vmatpush1.msra.mxu0 %v2234
        %2318 = vmatprep.subr.mxu0 0.0
        %2319 = vmatpush1.msra.mxu0 %v2233
        %2320 = vmatprep.subr.mxu0 0.0
        %2321 = vmatpush1.msra.mxu0 %v2232
        %2322 = vmatprep.subr.mxu0 0.0
        %2323 = vmatpush1.msra.mxu0 %v2231
        %2324 = vmatprep.subr.mxu0 0.0
        %2325 = vmatpush1.msra.mxu0 %v2230
        %2326 = vmatprep.subr.mxu0 0.0
        %2327 = vmatpush2.msra.mxu0 0.0
        %2328 = vmatprep.subr.mxu0 0.0
        %2329 = vmatpush2.msra.mxu0 0.0
        %2330 = vmatprep.subr.mxu0 0.0
        %2331 = vmatpush2.msra.mxu0 0.0
        %2332 = vmatprep.subr.mxu0 0.0
        %2333 = vmatpush2.msra.mxu0 0.0
        %2334 = vmatprep.subr.mxu0 0.0
        %2335 = vmatpush2.msra.mxu0 0.0
        %2336 = vmatprep.subr.mxu0 0.0
        %2337 = vmatpush2.msra.mxu0 0.0
        %2338 = vmatprep.subr.mxu0 0.0
        %2339 = vmatpush2.msra.mxu0 0.0
        %2340 = vmatprep.subr.mxu0 0.0
        %2341 = vmatpush2.msra.mxu0 0.0
        %2342 = vmatprep.subr.mxu0 0.0
        %2343 = vmatpush2.msra.mxu0 0.0
        %2344 = vmatprep.subr.mxu0 0.0
        %2345 = vmatpush2.msra.mxu0 0.0
        %2346 = vmatprep.subr.mxu0 0.0
        %2347 = vmatpush2.msra.mxu0 0.0
        %2348 = vmatprep.subr.mxu0 0.0
        %2349 = vmatpush2.msra.mxu0 0.0
        %2350 = vmatprep.subr.mxu0 0.0
        %2351 = vmatpush2.msra.mxu0 0.0
        %2352 = vmatprep.subr.mxu0 0.0
        %2353 = vmatpush2.msra.mxu0 0.0
        %2354 = vmatprep.subr.mxu0 0.0
        %2355 = vmatpush2.msra.mxu0 0.0
        %2356 = vmatprep.subr.mxu0 0.0
        %2357 = vmatpush2.msra.mxu0 0.0
        %2358 = vmatprep.mubr.f32.mxu0 0.0
        %2359 = vmatmul.mubr.f32.gmra.mxu0 %v2247
        %v2360 = vpop.f32.mrf.mxu0
        %v2361 = vadd.f32 %v2243, %v2360
        %v2362 = vpop.f32.mrf.mxu0
        %2363 = vmatprep.mubr.f32.mxu0 0.0
        %2364 = vmatmul.mubr.f32.gmra.mxu0 %v2250
        %v2365 = vpop.f32.mrf.mxu0
        %v2366 = vadd.f32 %v2243, %v2365
        %v2367 = vpop.f32.mrf.mxu0
        %2368 = vmatprep.mubr.f32.mxu0 0.0
        %2369 = vmatmul.mubr.f32.gmra.mxu0 %v2253
        %v2370 = vpop.f32.mrf.mxu0
        %v2371 = vadd.f32 %v2243, %v2370
        %v2372 = vpop.f32.mrf.mxu0
        %2373 = vmatprep.mubr.f32.mxu0 0.0
        %2374 = vmatmul.mubr.f32.gmra.mxu0 %v2256
        %v2375 = vpop.f32.mrf.mxu0
        %v2376 = vadd.f32 %v2243, %v2375
        %v2377 = vpop.f32.mrf.mxu0
        %2378 = vmatprep.mubr.f32.mxu0 0.0
        %2379 = vmatmul.mubr.f32.gmra.mxu0 %v2259
        %v2380 = vpop.f32.mrf.mxu0
        %v2381 = vadd.f32 %v2243, %v2380
        %v2382 = vpop.f32.mrf.mxu0
        %2383 = vmatprep.mubr.f32.mxu0 0.0
        %2384 = vmatmul.mubr.f32.gmra.mxu0 %v2262
        %v2385 = vpop.f32.mrf.mxu0
        %v2386 = vadd.f32 %v2243, %v2385
        %v2387 = vpop.f32.mrf.mxu0
        %2388 = vmatprep.mubr.f32.mxu0 0.0
        %2389 = vmatmul.mubr.f32.gmra.mxu0 %v2265
        %v2390 = vpop.f32.mrf.mxu0
        %v2391 = vadd.f32 %v2243, %v2390
        %v2392 = vpop.f32.mrf.mxu0
        %2393 = vmatprep.mubr.f32.mxu0 0.0
        %2394 = vmatmul.mubr.f32.gmra.mxu0 %v2268
        %v2395 = vpop.f32.mrf.mxu0
        %v2396 = vadd.f32 %v2243, %v2395
        %v2397 = vpop.f32.mrf.mxu0
        %2398 = vmatprep.mubr.f32.mxu0 0.0
        %2399 = vmatmul.mubr.f32.gmra.mxu0 %v2271
        %v2400 = vpop.f32.mrf.mxu0
        %v2401 = vadd.f32 %v2243, %v2400
        %v2402 = vpop.f32.mrf.mxu0
        %2403 = vmatprep.mubr.f32.mxu0 0.0
        %2404 = vmatmul.mubr.f32.gmra.mxu0 %v2274
        %v2405 = vpop.f32.mrf.mxu0
        %v2406 = vadd.f32 %v2243, %v2405
        %v2407 = vpop.f32.mrf.mxu0
        %2408 = vmatprep.mubr.f32.mxu0 0.0
        %2409 = vmatmul.mubr.f32.gmra.mxu0 %v2277
        %v2410 = vpop.f32.mrf.mxu0
        %v2411 = vadd.f32 %v2243, %v2410
        %v2412 = vpop.f32.mrf.mxu0
        %2413 = vmatprep.mubr.f32.mxu0 0.0
        %2414 = vmatmul.mubr.f32.gmra.mxu0 %v2280
        %v2415 = vpop.f32.mrf.mxu0
        %v2416 = vadd.f32 %v2243, %v2415
        %v2417 = vpop.f32.mrf.mxu0
        %2418 = vmatprep.mubr.f32.mxu0 0.0
        %2419 = vmatmul.mubr.f32.gmra.mxu0 %v2283
        %v2420 = vpop.f32.mrf.mxu0
        %v2421 = vadd.f32 %v2243, %v2420
        %v2422 = vpop.f32.mrf.mxu0
        %2423 = vmatprep.mubr.f32.mxu0 0.0
        %2424 = vmatmul.mubr.f32.gmra.mxu0 %v2286
        %v2425 = vpop.f32.mrf.mxu0
        %v2426 = vadd.f32 %v2243, %v2425
        %v2427 = vpop.f32.mrf.mxu0
        %2428 = vmatprep.mubr.f32.mxu0 0.0
        %2429 = vmatmul.mubr.f32.gmra.mxu0 %v2289
        %v2430 = vpop.f32.mrf.mxu0
        %v2431 = vadd.f32 %v2243, %v2430
        %v2432 = vpop.f32.mrf.mxu0
        %2433 = vmatprep.mubr.f32.mxu0 0.0
        %2434 = vmatmul.mubr.f32.gmra.mxu0 %v2292
        %v2435 = vpop.f32.mrf.mxu0
        %v2436 = vadd.f32 %v2243, %v2435
        %v2437 = vpop.f32.mrf.mxu0
        %2438 = vdwg.mxu0
        %v2439 = vand.u32 2147483647, %v2361
        %vm2440 = vcmp.le.f32.partialorder %v2439, 0.7853982
        %vm2441 = vcmp.lt.s32.totalorder %v2361, 0
        %v2442 = vand.u32 %v2361, 2139095040
        %v2443 = vshrl.u32 %v2442, 23
        %v2444 = vsub.s32 %v2443, 127
        %v2445 = vand.u32 2147483647, %v2361
        %v2446 = vand.u32 %v2445, 8388607
        %v2447 = vor.u32 %v2446, 8388608
        %v2448 = vsub.s32 0, %v2447
        %v2449 = vadd.s32 %v2444, 1
        %vm2450 = vcmp.gt.s32.totalorder %v2449, 0
        %v2451 = vsel %vm2450, %v2449, 0
        %v2452 = vshrl.u32 %v2451, 5
        %v2453 = vand.u32 %v2451, 31
        %v2454 = vsub.s32 32, %v2453
        %v2455 = vshrl.u32 683565275, %v2454
        %v2456 = vshll.u32 683565275, %v2453
        %v2457 = vshrl.u32 2475754826, %v2454
        %v2458 = vor.u32 %v2456, %v2457
        %v2459 = vshll.u32 2475754826, %v2453
        %v2460 = vshrl.u32 2131351028, %v2454
        %v2461 = vor.u32 %v2459, %v2460
        %v2462 = vshll.u32 2131351028, %v2453
        %v2463 = vshrl.u32 2102212464, %v2454
        %v2464 = vor.u32 %v2462, %v2463
        %v2465 = vshll.u32 2102212464, %v2453
        %v2466 = vshrl.u32 920167782, %v2454
        %v2467 = vor.u32 %v2465, %v2466
        %v2468 = vshll.u32 920167782, %v2453
        %v2469 = vshrl.u32 1326507024, %v2454
        %v2470 = vor.u32 %v2468, %v2469
        %vm2471 = vcmp.lt.s32.totalorder %v2452, 1
        %vm2472 = vcmp.lt.s32.totalorder %v2452, 2
        %vm2473 = vcmp.lt.s32.totalorder %v2452, 3
        %vm2474 = vcmp.lt.s32.totalorder %v2452, 4
        %v2475 = vsel %vm2471, %v2455, %v2458
        %v2476 = vsel %vm2474, %v2464, 2102212464
        %v2477 = vsel %vm2473, %v2461, %v2476
        %v2478 = vsel %vm2472, %v2475, %v2477
        %v2479 = vsel %vm2471, %v2458, %v2461
        %v2480 = vsel %vm2474, %v2467, 920167782
        %v2481 = vsel %vm2473, %v2464, %v2480
        %v2482 = vsel %vm2472, %v2479, %v2481
        %v2483 = vsel %vm2471, %v2461, %v2464
        %v2484 = vsel %vm2474, %v2470, 1326507024
        %v2485 = vsel %vm2473, %v2467, %v2484
        %v2486 = vsel %vm2472, %v2483, %v2485
        %v2487 = vshll.u32 %v2447, 8
        %v2488 = vmul.u32.u64.compose %v2487, %v2486
        %v2489 = vextract.low.u32 %v2488
        %v2490 = vextract.high.u32 %v2488
        %v2491 = vmul.u32.u64.compose %v2487, %v2482
        %v2492 = vextract.low.u32 %v2491
        %v2493 = vextract.high.u32 %v2491
        %v2494 = vmul.u32 %v2487, %v2478
        %v2495 = vadd.s32 %v2490, %v2492
        %vm2496 = vc.u32 %v2490, %v2492
        %v2497 = vadd.s32 %v2493, 1
        %v2498 = vsel %vm2496, %v2497, %v2493
        %v2499 = vadd.s32 %v2494, %v2498
        %v2500 = vadd.s32 %v2499, 536870912
        %v2501 = vshrl.u32 %v2500, 30
        %v2502 = vshll.u32 %v2501, 30
        %v2503 = vsub.s32 %v2499, %v2502
        %vm2504 = vcmp.lt.s32.totalorder %v2503, 0
        %v2505 = vsub.s32 0, %v2503
        %v2506 = vsel %vm2504, %v2505, %v2503
        %v2507 = vclz %v2506
        %v2508 = vsub.s32 %v2507, 2
        %vm2509 = vcmp.gt.s32.totalorder 0, %v2508
        %v2510 = vsel %vm2509, 0, %v2508
        %v2511 = vsub.s32 32, %v2510
        %v2512 = vshll.u32 %v2503, %v2510
        %v2513 = vshrl.u32 %v2495, %v2511
        %v2514 = vor.u32 %v2512, %v2513
        %v2515 = vsub.s32 4294967266, %v2510
        %v2516 = vadd.s32 %v2515, 127
        %v2517 = vshll.u32 %v2516, 23
        %v2518 = vor.u32 4788187, %v2517
        %v2519 = vand.u32 2147483647, %v2518
        %v2521 = vcvt.s32.f32 %v2514
        %v2522 = vmul.f32 %v2521, %v2519
        %v2523 = vxor.u32 %v2522, 2147483648
        %v2524 = vsel %vm2441, %v2523, %v2522
        %v2525 = vsub.s32 4, %v2501
        %v2526 = vsel %vm2441, %v2525, %v2501
        %v2527 = vsel %vm2440, %v2361, %v2524
        %v2528 = vsel %vm2440, 0, %v2526
        %v2529 = vcosq.f32.pop %v2527
        %v2530 = vsinq.f32.pop %v2527
        %vm2531 = vweird.f32 %v2361
        %v2532 = vadd.s32 %v2528, 3
        %v2533 = vand.u32 %v2532, 3
        %vm2534 = vcmp.lt.s32.totalorder %v2533, 2
        %vm2535 = vcmp.eq.s32.totalorder %v2533, 0
        %v2536 = vxor.u32 %v2530, 2147483648
        %v2537 = vsel %vm2535, %v2529, %v2536
        %vm2538 = vcmp.eq.s32.totalorder %v2533, 2
        %v2539 = vxor.u32 %v2529, 2147483648
        %v2540 = vsel %vm2538, %v2539, %v2530
        %v2541 = vsel %vm2534, %v2537, %v2540
        %v2542 = vsel %vm2531, nan, %v2541
        %v2543 = vand.u32 2147483647, %v2366
        %vm2544 = vcmp.le.f32.partialorder %v2543, 0.7853982
        %vm2545 = vcmp.lt.s32.totalorder %v2366, 0
        %v2546 = vand.u32 %v2366, 2139095040
        %v2547 = vshrl.u32 %v2546, 23
        %v2548 = vsub.s32 %v2547, 127
        %v2549 = vand.u32 2147483647, %v2366
        %v2550 = vand.u32 %v2549, 8388607
        %v2551 = vor.u32 %v2550, 8388608
        %v2552 = vsub.s32 0, %v2551
        %v2553 = vadd.s32 %v2548, 1
        %vm2554 = vcmp.gt.s32.totalorder %v2553, 0
        %v2555 = vsel %vm2554, %v2553, 0
        %v2556 = vshrl.u32 %v2555, 5
        %v2557 = vand.u32 %v2555, 31
        %v2558 = vsub.s32 32, %v2557
        %v2559 = vshrl.u32 683565275, %v2558
        %v2560 = vshll.u32 683565275, %v2557
        %v2561 = vshrl.u32 2475754826, %v2558
        %v2562 = vor.u32 %v2560, %v2561
        %v2563 = vshll.u32 2475754826, %v2557
        %v2564 = vshrl.u32 2131351028, %v2558
        %v2565 = vor.u32 %v2563, %v2564
        %v2566 = vshll.u32 2131351028, %v2557
        %v2567 = vshrl.u32 2102212464, %v2558
        %v2568 = vor.u32 %v2566, %v2567
        %v2569 = vshll.u32 2102212464, %v2557
        %v2570 = vshrl.u32 920167782, %v2558
        %v2571 = vor.u32 %v2569, %v2570
        %v2572 = vshll.u32 920167782, %v2557
        %v2573 = vshrl.u32 1326507024, %v2558
        %v2574 = vor.u32 %v2572, %v2573
        %vm2575 = vcmp.lt.s32.totalorder %v2556, 1
        %vm2576 = vcmp.lt.s32.totalorder %v2556, 2
        %vm2577 = vcmp.lt.s32.totalorder %v2556, 3
        %vm2578 = vcmp.lt.s32.totalorder %v2556, 4
        %v2579 = vsel %vm2575, %v2559, %v2562
        %v2580 = vsel %vm2578, %v2568, 2102212464
        %v2581 = vsel %vm2577, %v2565, %v2580
        %v2582 = vsel %vm2576, %v2579, %v2581
        %v2583 = vsel %vm2575, %v2562, %v2565
        %v2584 = vsel %vm2578, %v2571, 920167782
        %v2585 = vsel %vm2577, %v2568, %v2584
        %v2586 = vsel %vm2576, %v2583, %v2585
        %v2587 = vsel %vm2575, %v2565, %v2568
        %v2588 = vsel %vm2578, %v2574, 1326507024
        %v2589 = vsel %vm2577, %v2571, %v2588
        %v2590 = vsel %vm2576, %v2587, %v2589
        %v2591 = vshll.u32 %v2551, 8
        %v2592 = vmul.u32.u64.compose %v2591, %v2590
        %v2593 = vextract.low.u32 %v2592
        %v2594 = vextract.high.u32 %v2592
        %v2595 = vmul.u32.u64.compose %v2591, %v2586
        %v2596 = vextract.low.u32 %v2595
        %v2597 = vextract.high.u32 %v2595
        %v2598 = vmul.u32 %v2591, %v2582
        %v2599 = vadd.s32 %v2594, %v2596
        %vm2600 = vc.u32 %v2594, %v2596
        %v2601 = vadd.s32 %v2597, 1
        %v2602 = vsel %vm2600, %v2601, %v2597
        %v2603 = vadd.s32 %v2598, %v2602
        %v2604 = vadd.s32 %v2603, 536870912
        %v2605 = vshrl.u32 %v2604, 30
        %v2606 = vshll.u32 %v2605, 30
        %v2607 = vsub.s32 %v2603, %v2606
        %vm2608 = vcmp.lt.s32.totalorder %v2607, 0
        %v2609 = vsub.s32 0, %v2607
        %v2610 = vsel %vm2608, %v2609, %v2607
        %v2611 = vclz %v2610
        %v2612 = vsub.s32 %v2611, 2
        %vm2613 = vcmp.gt.s32.totalorder 0, %v2612
        %v2614 = vsel %vm2613, 0, %v2612
        %v2615 = vsub.s32 32, %v2614
        %v2616 = vshll.u32 %v2607, %v2614
        %v2617 = vshrl.u32 %v2599, %v2615
        %v2618 = vor.u32 %v2616, %v2617
        %v2619 = vsub.s32 4294967266, %v2614
        %v2620 = vadd.s32 %v2619, 127
        %v2621 = vshll.u32 %v2620, 23
        %v2622 = vor.u32 4788187, %v2621
        %v2623 = vand.u32 2147483647, %v2622
        %v2625 = vcvt.s32.f32 %v2618
        %v2626 = vmul.f32 %v2625, %v2623
        %v2627 = vxor.u32 %v2626, 2147483648
        %v2628 = vsel %vm2545, %v2627, %v2626
        %v2629 = vsub.s32 4, %v2605
        %v2630 = vsel %vm2545, %v2629, %v2605
        %v2631 = vsel %vm2544, %v2366, %v2628
        %v2632 = vsel %vm2544, 0, %v2630
        %v2633 = vcosq.f32.pop %v2631
        %v2634 = vsinq.f32.pop %v2631
        %vm2635 = vweird.f32 %v2366
        %v2636 = vadd.s32 %v2632, 3
        %v2637 = vand.u32 %v2636, 3
        %vm2638 = vcmp.lt.s32.totalorder %v2637, 2
        %vm2639 = vcmp.eq.s32.totalorder %v2637, 0
        %v2640 = vxor.u32 %v2634, 2147483648
        %v2641 = vsel %vm2639, %v2633, %v2640
        %vm2642 = vcmp.eq.s32.totalorder %v2637, 2
        %v2643 = vxor.u32 %v2633, 2147483648
        %v2644 = vsel %vm2642, %v2643, %v2634
        %v2645 = vsel %vm2638, %v2641, %v2644
        %v2646 = vsel %vm2635, nan, %v2645
        %v2647 = vand.u32 2147483647, %v2371
        %vm2648 = vcmp.le.f32.partialorder %v2647, 0.7853982
        %vm2649 = vcmp.lt.s32.totalorder %v2371, 0
        %v2650 = vand.u32 %v2371, 2139095040
        %v2651 = vshrl.u32 %v2650, 23
        %v2652 = vsub.s32 %v2651, 127
        %v2653 = vand.u32 2147483647, %v2371
        %v2654 = vand.u32 %v2653, 8388607
        %v2655 = vor.u32 %v2654, 8388608
        %v2656 = vsub.s32 0, %v2655
        %v2657 = vadd.s32 %v2652, 1
        %vm2658 = vcmp.gt.s32.totalorder %v2657, 0
        %v2659 = vsel %vm2658, %v2657, 0
        %v2660 = vshrl.u32 %v2659, 5
        %v2661 = vand.u32 %v2659, 31
        %v2662 = vsub.s32 32, %v2661
        %v2663 = vshrl.u32 683565275, %v2662
        %v2664 = vshll.u32 683565275, %v2661
        %v2665 = vshrl.u32 2475754826, %v2662
        %v2666 = vor.u32 %v2664, %v2665
        %v2667 = vshll.u32 2475754826, %v2661
        %v2668 = vshrl.u32 2131351028, %v2662
        %v2669 = vor.u32 %v2667, %v2668
        %v2670 = vshll.u32 2131351028, %v2661
        %v2671 = vshrl.u32 2102212464, %v2662
        %v2672 = vor.u32 %v2670, %v2671
        %v2673 = vshll.u32 2102212464, %v2661
        %v2674 = vshrl.u32 920167782, %v2662
        %v2675 = vor.u32 %v2673, %v2674
        %v2676 = vshll.u32 920167782, %v2661
        %v2677 = vshrl.u32 1326507024, %v2662
        %v2678 = vor.u32 %v2676, %v2677
        %vm2679 = vcmp.lt.s32.totalorder %v2660, 1
        %vm2680 = vcmp.lt.s32.totalorder %v2660, 2
        %vm2681 = vcmp.lt.s32.totalorder %v2660, 3
        %vm2682 = vcmp.lt.s32.totalorder %v2660, 4
        %v2683 = vsel %vm2679, %v2663, %v2666
        %v2684 = vsel %vm2682, %v2672, 2102212464
        %v2685 = vsel %vm2681, %v2669, %v2684
        %v2686 = vsel %vm2680, %v2683, %v2685
        %v2687 = vsel %vm2679, %v2666, %v2669
        %v2688 = vsel %vm2682, %v2675, 920167782
        %v2689 = vsel %vm2681, %v2672, %v2688
        %v2690 = vsel %vm2680, %v2687, %v2689
        %v2691 = vsel %vm2679, %v2669, %v2672
        %v2692 = vsel %vm2682, %v2678, 1326507024
        %v2693 = vsel %vm2681, %v2675, %v2692
        %v2694 = vsel %vm2680, %v2691, %v2693
        %v2695 = vshll.u32 %v2655, 8
        %v2696 = vmul.u32.u64.compose %v2695, %v2694
        %v2697 = vextract.low.u32 %v2696
        %v2698 = vextract.high.u32 %v2696
        %v2699 = vmul.u32.u64.compose %v2695, %v2690
        %v2700 = vextract.low.u32 %v2699
        %v2701 = vextract.high.u32 %v2699
        %v2702 = vmul.u32 %v2695, %v2686
        %v2703 = vadd.s32 %v2698, %v2700
        %vm2704 = vc.u32 %v2698, %v2700
        %v2705 = vadd.s32 %v2701, 1
        %v2706 = vsel %vm2704, %v2705, %v2701
        %v2707 = vadd.s32 %v2702, %v2706
        %v2708 = vadd.s32 %v2707, 536870912
        %v2709 = vshrl.u32 %v2708, 30
        %v2710 = vshll.u32 %v2709, 30
        %v2711 = vsub.s32 %v2707, %v2710
        %vm2712 = vcmp.lt.s32.totalorder %v2711, 0
        %v2713 = vsub.s32 0, %v2711
        %v2714 = vsel %vm2712, %v2713, %v2711
        %v2715 = vclz %v2714
        %v2716 = vsub.s32 %v2715, 2
        %vm2717 = vcmp.gt.s32.totalorder 0, %v2716
        %v2718 = vsel %vm2717, 0, %v2716
        %v2719 = vsub.s32 32, %v2718
        %v2720 = vshll.u32 %v2711, %v2718
        %v2721 = vshrl.u32 %v2703, %v2719
        %v2722 = vor.u32 %v2720, %v2721
        %v2723 = vsub.s32 4294967266, %v2718
        %v2724 = vadd.s32 %v2723, 127
        %v2725 = vshll.u32 %v2724, 23
        %v2726 = vor.u32 4788187, %v2725
        %v2727 = vand.u32 2147483647, %v2726
        %v2729 = vcvt.s32.f32 %v2722
        %v2730 = vmul.f32 %v2729, %v2727
        %v2731 = vxor.u32 %v2730, 2147483648
        %v2732 = vsel %vm2649, %v2731, %v2730
        %v2733 = vsub.s32 4, %v2709
        %v2734 = vsel %vm2649, %v2733, %v2709
        %v2735 = vsel %vm2648, %v2371, %v2732
        %v2736 = vsel %vm2648, 0, %v2734
        %v2737 = vcosq.f32.pop %v2735
        %v2738 = vsinq.f32.pop %v2735
        %vm2739 = vweird.f32 %v2371
        %v2740 = vadd.s32 %v2736, 3
        %v2741 = vand.u32 %v2740, 3
        %vm2742 = vcmp.lt.s32.totalorder %v2741, 2
        %vm2743 = vcmp.eq.s32.totalorder %v2741, 0
        %v2744 = vxor.u32 %v2738, 2147483648
        %v2745 = vsel %vm2743, %v2737, %v2744
        %vm2746 = vcmp.eq.s32.totalorder %v2741, 2
        %v2747 = vxor.u32 %v2737, 2147483648
        %v2748 = vsel %vm2746, %v2747, %v2738
        %v2749 = vsel %vm2742, %v2745, %v2748
        %v2750 = vsel %vm2739, nan, %v2749
        %v2751 = vand.u32 2147483647, %v2376
        %vm2752 = vcmp.le.f32.partialorder %v2751, 0.7853982
        %vm2753 = vcmp.lt.s32.totalorder %v2376, 0
        %v2754 = vand.u32 %v2376, 2139095040
        %v2755 = vshrl.u32 %v2754, 23
        %v2756 = vsub.s32 %v2755, 127
        %v2757 = vand.u32 2147483647, %v2376
        %v2758 = vand.u32 %v2757, 8388607
        %v2759 = vor.u32 %v2758, 8388608
        %v2760 = vsub.s32 0, %v2759
        %v2761 = vadd.s32 %v2756, 1
        %vm2762 = vcmp.gt.s32.totalorder %v2761, 0
        %v2763 = vsel %vm2762, %v2761, 0
        %v2764 = vshrl.u32 %v2763, 5
        %v2765 = vand.u32 %v2763, 31
        %v2766 = vsub.s32 32, %v2765
        %v2767 = vshrl.u32 683565275, %v2766
        %v2768 = vshll.u32 683565275, %v2765
        %v2769 = vshrl.u32 2475754826, %v2766
        %v2770 = vor.u32 %v2768, %v2769
        %v2771 = vshll.u32 2475754826, %v2765
        %v2772 = vshrl.u32 2131351028, %v2766
        %v2773 = vor.u32 %v2771, %v2772
        %v2774 = vshll.u32 2131351028, %v2765
        %v2775 = vshrl.u32 2102212464, %v2766
        %v2776 = vor.u32 %v2774, %v2775
        %v2777 = vshll.u32 2102212464, %v2765
        %v2778 = vshrl.u32 920167782, %v2766
        %v2779 = vor.u32 %v2777, %v2778
        %v2780 = vshll.u32 920167782, %v2765
        %v2781 = vshrl.u32 1326507024, %v2766
        %v2782 = vor.u32 %v2780, %v2781
        %vm2783 = vcmp.lt.s32.totalorder %v2764, 1
        %vm2784 = vcmp.lt.s32.totalorder %v2764, 2
        %vm2785 = vcmp.lt.s32.totalorder %v2764, 3
        %vm2786 = vcmp.lt.s32.totalorder %v2764, 4
        %v2787 = vsel %vm2783, %v2767, %v2770
        %v2788 = vsel %vm2786, %v2776, 2102212464
        %v2789 = vsel %vm2785, %v2773, %v2788
        %v2790 = vsel %vm2784, %v2787, %v2789
        %v2791 = vsel %vm2783, %v2770, %v2773
        %v2792 = vsel %vm2786, %v2779, 920167782
        %v2793 = vsel %vm2785, %v2776, %v2792
        %v2794 = vsel %vm2784, %v2791, %v2793
        %v2795 = vsel %vm2783, %v2773, %v2776
        %v2796 = vsel %vm2786, %v2782, 1326507024
        %v2797 = vsel %vm2785, %v2779, %v2796
        %v2798 = vsel %vm2784, %v2795, %v2797
        %v2799 = vshll.u32 %v2759, 8
        %v2800 = vmul.u32.u64.compose %v2799, %v2798
        %v2801 = vextract.low.u32 %v2800
        %v2802 = vextract.high.u32 %v2800
        %v2803 = vmul.u32.u64.compose %v2799, %v2794
        %v2804 = vextract.low.u32 %v2803
        %v2805 = vextract.high.u32 %v2803
        %v2806 = vmul.u32 %v2799, %v2790
        %v2807 = vadd.s32 %v2802, %v2804
        %vm2808 = vc.u32 %v2802, %v2804
        %v2809 = vadd.s32 %v2805, 1
        %v2810 = vsel %vm2808, %v2809, %v2805
        %v2811 = vadd.s32 %v2806, %v2810
        %v2812 = vadd.s32 %v2811, 536870912
        %v2813 = vshrl.u32 %v2812, 30
        %v2814 = vshll.u32 %v2813, 30
        %v2815 = vsub.s32 %v2811, %v2814
        %vm2816 = vcmp.lt.s32.totalorder %v2815, 0
        %v2817 = vsub.s32 0, %v2815
        %v2818 = vsel %vm2816, %v2817, %v2815
        %v2819 = vclz %v2818
        %v2820 = vsub.s32 %v2819, 2
        %vm2821 = vcmp.gt.s32.totalorder 0, %v2820
        %v2822 = vsel %vm2821, 0, %v2820
        %v2823 = vsub.s32 32, %v2822
        %v2824 = vshll.u32 %v2815, %v2822
        %v2825 = vshrl.u32 %v2807, %v2823
        %v2826 = vor.u32 %v2824, %v2825
        %v2827 = vsub.s32 4294967266, %v2822
        %v2828 = vadd.s32 %v2827, 127
        %v2829 = vshll.u32 %v2828, 23
        %v2830 = vor.u32 4788187, %v2829
        %v2831 = vand.u32 2147483647, %v2830
        %v2833 = vcvt.s32.f32 %v2826
        %v2834 = vmul.f32 %v2833, %v2831
        %v2835 = vxor.u32 %v2834, 2147483648
        %v2836 = vsel %vm2753, %v2835, %v2834
        %v2837 = vsub.s32 4, %v2813
        %v2838 = vsel %vm2753, %v2837, %v2813
        %v2839 = vsel %vm2752, %v2376, %v2836
        %v2840 = vsel %vm2752, 0, %v2838
        %v2841 = vcosq.f32.pop %v2839
        %v2842 = vsinq.f32.pop %v2839
        %vm2843 = vweird.f32 %v2376
        %v2844 = vadd.s32 %v2840, 3
        %v2845 = vand.u32 %v2844, 3
        %vm2846 = vcmp.lt.s32.totalorder %v2845, 2
        %vm2847 = vcmp.eq.s32.totalorder %v2845, 0
        %v2848 = vxor.u32 %v2842, 2147483648
        %v2849 = vsel %vm2847, %v2841, %v2848
        %vm2850 = vcmp.eq.s32.totalorder %v2845, 2
        %v2851 = vxor.u32 %v2841, 2147483648
        %v2852 = vsel %vm2850, %v2851, %v2842
        %v2853 = vsel %vm2846, %v2849, %v2852
        %v2854 = vsel %vm2843, nan, %v2853
        %v2855 = vand.u32 2147483647, %v2381
        %vm2856 = vcmp.le.f32.partialorder %v2855, 0.7853982
        %vm2857 = vcmp.lt.s32.totalorder %v2381, 0
        %v2858 = vand.u32 %v2381, 2139095040
        %v2859 = vshrl.u32 %v2858, 23
        %v2860 = vsub.s32 %v2859, 127
        %v2861 = vand.u32 2147483647, %v2381
        %v2862 = vand.u32 %v2861, 8388607
        %v2863 = vor.u32 %v2862, 8388608
        %v2864 = vsub.s32 0, %v2863
        %v2865 = vadd.s32 %v2860, 1
        %vm2866 = vcmp.gt.s32.totalorder %v2865, 0
        %v2867 = vsel %vm2866, %v2865, 0
        %v2868 = vshrl.u32 %v2867, 5
        %v2869 = vand.u32 %v2867, 31
        %v2870 = vsub.s32 32, %v2869
        %v2871 = vshrl.u32 683565275, %v2870
        %v2872 = vshll.u32 683565275, %v2869
        %v2873 = vshrl.u32 2475754826, %v2870
        %v2874 = vor.u32 %v2872, %v2873
        %v2875 = vshll.u32 2475754826, %v2869
        %v2876 = vshrl.u32 2131351028, %v2870
        %v2877 = vor.u32 %v2875, %v2876
        %v2878 = vshll.u32 2131351028, %v2869
        %v2879 = vshrl.u32 2102212464, %v2870
        %v2880 = vor.u32 %v2878, %v2879
        %v2881 = vshll.u32 2102212464, %v2869
        %v2882 = vshrl.u32 920167782, %v2870
        %v2883 = vor.u32 %v2881, %v2882
        %v2884 = vshll.u32 920167782, %v2869
        %v2885 = vshrl.u32 1326507024, %v2870
        %v2886 = vor.u32 %v2884, %v2885
        %vm2887 = vcmp.lt.s32.totalorder %v2868, 1
        %vm2888 = vcmp.lt.s32.totalorder %v2868, 2
        %vm2889 = vcmp.lt.s32.totalorder %v2868, 3
        %vm2890 = vcmp.lt.s32.totalorder %v2868, 4
        %v2891 = vsel %vm2887, %v2871, %v2874
        %v2892 = vsel %vm2890, %v2880, 2102212464
        %v2893 = vsel %vm2889, %v2877, %v2892
        %v2894 = vsel %vm2888, %v2891, %v2893
        %v2895 = vsel %vm2887, %v2874, %v2877
        %v2896 = vsel %vm2890, %v2883, 920167782
        %v2897 = vsel %vm2889, %v2880, %v2896
        %v2898 = vsel %vm2888, %v2895, %v2897
        %v2899 = vsel %vm2887, %v2877, %v2880
        %v2900 = vsel %vm2890, %v2886, 1326507024
        %v2901 = vsel %vm2889, %v2883, %v2900
        %v2902 = vsel %vm2888, %v2899, %v2901
        %v2903 = vshll.u32 %v2863, 8
        %v2904 = vmul.u32.u64.compose %v2903, %v2902
        %v2905 = vextract.low.u32 %v2904
        %v2906 = vextract.high.u32 %v2904
        %v2907 = vmul.u32.u64.compose %v2903, %v2898
        %v2908 = vextract.low.u32 %v2907
        %v2909 = vextract.high.u32 %v2907
        %v2910 = vmul.u32 %v2903, %v2894
        %v2911 = vadd.s32 %v2906, %v2908
        %vm2912 = vc.u32 %v2906, %v2908
        %v2913 = vadd.s32 %v2909, 1
        %v2914 = vsel %vm2912, %v2913, %v2909
        %v2915 = vadd.s32 %v2910, %v2914
        %v2916 = vadd.s32 %v2915, 536870912
        %v2917 = vshrl.u32 %v2916, 30
        %v2918 = vshll.u32 %v2917, 30
        %v2919 = vsub.s32 %v2915, %v2918
        %vm2920 = vcmp.lt.s32.totalorder %v2919, 0
        %v2921 = vsub.s32 0, %v2919
        %v2922 = vsel %vm2920, %v2921, %v2919
        %v2923 = vclz %v2922
        %v2924 = vsub.s32 %v2923, 2
        %vm2925 = vcmp.gt.s32.totalorder 0, %v2924
        %v2926 = vsel %vm2925, 0, %v2924
        %v2927 = vsub.s32 32, %v2926
        %v2928 = vshll.u32 %v2919, %v2926
        %v2929 = vshrl.u32 %v2911, %v2927
        %v2930 = vor.u32 %v2928, %v2929
        %v2931 = vsub.s32 4294967266, %v2926
        %v2932 = vadd.s32 %v2931, 127
        %v2933 = vshll.u32 %v2932, 23
        %v2934 = vor.u32 4788187, %v2933
        %v2935 = vand.u32 2147483647, %v2934
        %v2937 = vcvt.s32.f32 %v2930
        %v2938 = vmul.f32 %v2937, %v2935
        %v2939 = vxor.u32 %v2938, 2147483648
        %v2940 = vsel %vm2857, %v2939, %v2938
        %v2941 = vsub.s32 4, %v2917
        %v2942 = vsel %vm2857, %v2941, %v2917
        %v2943 = vsel %vm2856, %v2381, %v2940
        %v2944 = vsel %vm2856, 0, %v2942
        %v2945 = vcosq.f32.pop %v2943
        %v2946 = vsinq.f32.pop %v2943
        %vm2947 = vweird.f32 %v2381
        %v2948 = vadd.s32 %v2944, 3
        %v2949 = vand.u32 %v2948, 3
        %vm2950 = vcmp.lt.s32.totalorder %v2949, 2
        %vm2951 = vcmp.eq.s32.totalorder %v2949, 0
        %v2952 = vxor.u32 %v2946, 2147483648
        %v2953 = vsel %vm2951, %v2945, %v2952
        %vm2954 = vcmp.eq.s32.totalorder %v2949, 2
        %v2955 = vxor.u32 %v2945, 2147483648
        %v2956 = vsel %vm2954, %v2955, %v2946
        %v2957 = vsel %vm2950, %v2953, %v2956
        %v2958 = vsel %vm2947, nan, %v2957
        %v2959 = vand.u32 2147483647, %v2386
        %vm2960 = vcmp.le.f32.partialorder %v2959, 0.7853982
        %vm2961 = vcmp.lt.s32.totalorder %v2386, 0
        %v2962 = vand.u32 %v2386, 2139095040
        %v2963 = vshrl.u32 %v2962, 23
        %v2964 = vsub.s32 %v2963, 127
        %v2965 = vand.u32 2147483647, %v2386
        %v2966 = vand.u32 %v2965, 8388607
        %v2967 = vor.u32 %v2966, 8388608
        %v2968 = vsub.s32 0, %v2967
        %v2969 = vadd.s32 %v2964, 1
        %vm2970 = vcmp.gt.s32.totalorder %v2969, 0
        %v2971 = vsel %vm2970, %v2969, 0
        %v2972 = vshrl.u32 %v2971, 5
        %v2973 = vand.u32 %v2971, 31
        %v2974 = vsub.s32 32, %v2973
        %v2975 = vshrl.u32 683565275, %v2974
        %v2976 = vshll.u32 683565275, %v2973
        %v2977 = vshrl.u32 2475754826, %v2974
        %v2978 = vor.u32 %v2976, %v2977
        %v2979 = vshll.u32 2475754826, %v2973
        %v2980 = vshrl.u32 2131351028, %v2974
        %v2981 = vor.u32 %v2979, %v2980
        %v2982 = vshll.u32 2131351028, %v2973
        %v2983 = vshrl.u32 2102212464, %v2974
        %v2984 = vor.u32 %v2982, %v2983
        %v2985 = vshll.u32 2102212464, %v2973
        %v2986 = vshrl.u32 920167782, %v2974
        %v2987 = vor.u32 %v2985, %v2986
        %v2988 = vshll.u32 920167782, %v2973
        %v2989 = vshrl.u32 1326507024, %v2974
        %v2990 = vor.u32 %v2988, %v2989
        %vm2991 = vcmp.lt.s32.totalorder %v2972, 1
        %vm2992 = vcmp.lt.s32.totalorder %v2972, 2
        %vm2993 = vcmp.lt.s32.totalorder %v2972, 3
        %vm2994 = vcmp.lt.s32.totalorder %v2972, 4
        %v2995 = vsel %vm2991, %v2975, %v2978
        %v2996 = vsel %vm2994, %v2984, 2102212464
        %v2997 = vsel %vm2993, %v2981, %v2996
        %v2998 = vsel %vm2992, %v2995, %v2997
        %v2999 = vsel %vm2991, %v2978, %v2981
        %v3000 = vsel %vm2994, %v2987, 920167782
        %v3001 = vsel %vm2993, %v2984, %v3000
        %v3002 = vsel %vm2992, %v2999, %v3001
        %v3003 = vsel %vm2991, %v2981, %v2984
        %v3004 = vsel %vm2994, %v2990, 1326507024
        %v3005 = vsel %vm2993, %v2987, %v3004
        %v3006 = vsel %vm2992, %v3003, %v3005
        %v3007 = vshll.u32 %v2967, 8
        %v3008 = vmul.u32.u64.compose %v3007, %v3006
        %v3009 = vextract.low.u32 %v3008
        %v3010 = vextract.high.u32 %v3008
        %v3011 = vmul.u32.u64.compose %v3007, %v3002
        %v3012 = vextract.low.u32 %v3011
        %v3013 = vextract.high.u32 %v3011
        %v3014 = vmul.u32 %v3007, %v2998
        %v3015 = vadd.s32 %v3010, %v3012
        %vm3016 = vc.u32 %v3010, %v3012
        %v3017 = vadd.s32 %v3013, 1
        %v3018 = vsel %vm3016, %v3017, %v3013
        %v3019 = vadd.s32 %v3014, %v3018
        %v3020 = vadd.s32 %v3019, 536870912
        %v3021 = vshrl.u32 %v3020, 30
        %v3022 = vshll.u32 %v3021, 30
        %v3023 = vsub.s32 %v3019, %v3022
        %vm3024 = vcmp.lt.s32.totalorder %v3023, 0
        %v3025 = vsub.s32 0, %v3023
        %v3026 = vsel %vm3024, %v3025, %v3023
        %v3027 = vclz %v3026
        %v3028 = vsub.s32 %v3027, 2
        %vm3029 = vcmp.gt.s32.totalorder 0, %v3028
        %v3030 = vsel %vm3029, 0, %v3028
        %v3031 = vsub.s32 32, %v3030
        %v3032 = vshll.u32 %v3023, %v3030
        %v3033 = vshrl.u32 %v3015, %v3031
        %v3034 = vor.u32 %v3032, %v3033
        %v3035 = vsub.s32 4294967266, %v3030
        %v3036 = vadd.s32 %v3035, 127
        %v3037 = vshll.u32 %v3036, 23
        %v3038 = vor.u32 4788187, %v3037
        %v3039 = vand.u32 2147483647, %v3038
        %v3041 = vcvt.s32.f32 %v3034
        %v3042 = vmul.f32 %v3041, %v3039
        %v3043 = vxor.u32 %v3042, 2147483648
        %v3044 = vsel %vm2961, %v3043, %v3042
        %v3045 = vsub.s32 4, %v3021
        %v3046 = vsel %vm2961, %v3045, %v3021
        %v3047 = vsel %vm2960, %v2386, %v3044
        %v3048 = vsel %vm2960, 0, %v3046
        %v3049 = vcosq.f32.pop %v3047
        %v3050 = vsinq.f32.pop %v3047
        %vm3051 = vweird.f32 %v2386
        %v3052 = vadd.s32 %v3048, 3
        %v3053 = vand.u32 %v3052, 3
        %vm3054 = vcmp.lt.s32.totalorder %v3053, 2
        %vm3055 = vcmp.eq.s32.totalorder %v3053, 0
        %v3056 = vxor.u32 %v3050, 2147483648
        %v3057 = vsel %vm3055, %v3049, %v3056
        %vm3058 = vcmp.eq.s32.totalorder %v3053, 2
        %v3059 = vxor.u32 %v3049, 2147483648
        %v3060 = vsel %vm3058, %v3059, %v3050
        %v3061 = vsel %vm3054, %v3057, %v3060
        %v3062 = vsel %vm3051, nan, %v3061
        %v3063 = vand.u32 2147483647, %v2391
        %vm3064 = vcmp.le.f32.partialorder %v3063, 0.7853982
        %vm3065 = vcmp.lt.s32.totalorder %v2391, 0
        %v3066 = vand.u32 %v2391, 2139095040
        %v3067 = vshrl.u32 %v3066, 23
        %v3068 = vsub.s32 %v3067, 127
        %v3069 = vand.u32 2147483647, %v2391
        %v3070 = vand.u32 %v3069, 8388607
        %v3071 = vor.u32 %v3070, 8388608
        %v3072 = vsub.s32 0, %v3071
        %v3073 = vadd.s32 %v3068, 1
        %vm3074 = vcmp.gt.s32.totalorder %v3073, 0
        %v3075 = vsel %vm3074, %v3073, 0
        %v3076 = vshrl.u32 %v3075, 5
        %v3077 = vand.u32 %v3075, 31
        %v3078 = vsub.s32 32, %v3077
        %v3079 = vshrl.u32 683565275, %v3078
        %v3080 = vshll.u32 683565275, %v3077
        %v3081 = vshrl.u32 2475754826, %v3078
        %v3082 = vor.u32 %v3080, %v3081
        %v3083 = vshll.u32 2475754826, %v3077
        %v3084 = vshrl.u32 2131351028, %v3078
        %v3085 = vor.u32 %v3083, %v3084
        %v3086 = vshll.u32 2131351028, %v3077
        %v3087 = vshrl.u32 2102212464, %v3078
        %v3088 = vor.u32 %v3086, %v3087
        %v3089 = vshll.u32 2102212464, %v3077
        %v3090 = vshrl.u32 920167782, %v3078
        %v3091 = vor.u32 %v3089, %v3090
        %v3092 = vshll.u32 920167782, %v3077
        %v3093 = vshrl.u32 1326507024, %v3078
        %v3094 = vor.u32 %v3092, %v3093
        %vm3095 = vcmp.lt.s32.totalorder %v3076, 1
        %vm3096 = vcmp.lt.s32.totalorder %v3076, 2
        %vm3097 = vcmp.lt.s32.totalorder %v3076, 3
        %vm3098 = vcmp.lt.s32.totalorder %v3076, 4
        %v3099 = vsel %vm3095, %v3079, %v3082
        %v3100 = vsel %vm3098, %v3088, 2102212464
        %v3101 = vsel %vm3097, %v3085, %v3100
        %v3102 = vsel %vm3096, %v3099, %v3101
        %v3103 = vsel %vm3095, %v3082, %v3085
        %v3104 = vsel %vm3098, %v3091, 920167782
        %v3105 = vsel %vm3097, %v3088, %v3104
        %v3106 = vsel %vm3096, %v3103, %v3105
        %v3107 = vsel %vm3095, %v3085, %v3088
        %v3108 = vsel %vm3098, %v3094, 1326507024
        %v3109 = vsel %vm3097, %v3091, %v3108
        %v3110 = vsel %vm3096, %v3107, %v3109
        %v3111 = vshll.u32 %v3071, 8
        %v3112 = vmul.u32.u64.compose %v3111, %v3110
        %v3113 = vextract.low.u32 %v3112
        %v3114 = vextract.high.u32 %v3112
        %v3115 = vmul.u32.u64.compose %v3111, %v3106
        %v3116 = vextract.low.u32 %v3115
        %v3117 = vextract.high.u32 %v3115
        %v3118 = vmul.u32 %v3111, %v3102
        %v3119 = vadd.s32 %v3114, %v3116
        %vm3120 = vc.u32 %v3114, %v3116
        %v3121 = vadd.s32 %v3117, 1
        %v3122 = vsel %vm3120, %v3121, %v3117
        %v3123 = vadd.s32 %v3118, %v3122
        %v3124 = vadd.s32 %v3123, 536870912
        %v3125 = vshrl.u32 %v3124, 30
        %v3126 = vshll.u32 %v3125, 30
        %v3127 = vsub.s32 %v3123, %v3126
        %vm3128 = vcmp.lt.s32.totalorder %v3127, 0
        %v3129 = vsub.s32 0, %v3127
        %v3130 = vsel %vm3128, %v3129, %v3127
        %v3131 = vclz %v3130
        %v3132 = vsub.s32 %v3131, 2
        %vm3133 = vcmp.gt.s32.totalorder 0, %v3132
        %v3134 = vsel %vm3133, 0, %v3132
        %v3135 = vsub.s32 32, %v3134
        %v3136 = vshll.u32 %v3127, %v3134
        %v3137 = vshrl.u32 %v3119, %v3135
        %v3138 = vor.u32 %v3136, %v3137
        %v3139 = vsub.s32 4294967266, %v3134
        %v3140 = vadd.s32 %v3139, 127
        %v3141 = vshll.u32 %v3140, 23
        %v3142 = vor.u32 4788187, %v3141
        %v3143 = vand.u32 2147483647, %v3142
        %v3145 = vcvt.s32.f32 %v3138
        %v3146 = vmul.f32 %v3145, %v3143
        %v3147 = vxor.u32 %v3146, 2147483648
        %v3148 = vsel %vm3065, %v3147, %v3146
        %v3149 = vsub.s32 4, %v3125
        %v3150 = vsel %vm3065, %v3149, %v3125
        %v3151 = vsel %vm3064, %v2391, %v3148
        %v3152 = vsel %vm3064, 0, %v3150
        %v3153 = vcosq.f32.pop %v3151
        %v3154 = vsinq.f32.pop %v3151
        %vm3155 = vweird.f32 %v2391
        %v3156 = vadd.s32 %v3152, 3
        %v3157 = vand.u32 %v3156, 3
        %vm3158 = vcmp.lt.s32.totalorder %v3157, 2
        %vm3159 = vcmp.eq.s32.totalorder %v3157, 0
        %v3160 = vxor.u32 %v3154, 2147483648
        %v3161 = vsel %vm3159, %v3153, %v3160
        %vm3162 = vcmp.eq.s32.totalorder %v3157, 2
        %v3163 = vxor.u32 %v3153, 2147483648
        %v3164 = vsel %vm3162, %v3163, %v3154
        %v3165 = vsel %vm3158, %v3161, %v3164
        %v3166 = vsel %vm3155, nan, %v3165
        %v3167 = vand.u32 2147483647, %v2396
        %vm3168 = vcmp.le.f32.partialorder %v3167, 0.7853982
        %vm3169 = vcmp.lt.s32.totalorder %v2396, 0
        %v3170 = vand.u32 %v2396, 2139095040
        %v3171 = vshrl.u32 %v3170, 23
        %v3172 = vsub.s32 %v3171, 127
        %v3173 = vand.u32 2147483647, %v2396
        %v3174 = vand.u32 %v3173, 8388607
        %v3175 = vor.u32 %v3174, 8388608
        %v3176 = vsub.s32 0, %v3175
        %v3177 = vadd.s32 %v3172, 1
        %vm3178 = vcmp.gt.s32.totalorder %v3177, 0
        %v3179 = vsel %vm3178, %v3177, 0
        %v3180 = vshrl.u32 %v3179, 5
        %v3181 = vand.u32 %v3179, 31
        %v3182 = vsub.s32 32, %v3181
        %v3183 = vshrl.u32 683565275, %v3182
        %v3184 = vshll.u32 683565275, %v3181
        %v3185 = vshrl.u32 2475754826, %v3182
        %v3186 = vor.u32 %v3184, %v3185
        %v3187 = vshll.u32 2475754826, %v3181
        %v3188 = vshrl.u32 2131351028, %v3182
        %v3189 = vor.u32 %v3187, %v3188
        %v3190 = vshll.u32 2131351028, %v3181
        %v3191 = vshrl.u32 2102212464, %v3182
        %v3192 = vor.u32 %v3190, %v3191
        %v3193 = vshll.u32 2102212464, %v3181
        %v3194 = vshrl.u32 920167782, %v3182
        %v3195 = vor.u32 %v3193, %v3194
        %v3196 = vshll.u32 920167782, %v3181
        %v3197 = vshrl.u32 1326507024, %v3182
        %v3198 = vor.u32 %v3196, %v3197
        %vm3199 = vcmp.lt.s32.totalorder %v3180, 1
        %vm3200 = vcmp.lt.s32.totalorder %v3180, 2
        %vm3201 = vcmp.lt.s32.totalorder %v3180, 3
        %vm3202 = vcmp.lt.s32.totalorder %v3180, 4
        %v3203 = vsel %vm3199, %v3183, %v3186
        %v3204 = vsel %vm3202, %v3192, 2102212464
        %v3205 = vsel %vm3201, %v3189, %v3204
        %v3206 = vsel %vm3200, %v3203, %v3205
        %v3207 = vsel %vm3199, %v3186, %v3189
        %v3208 = vsel %vm3202, %v3195, 920167782
        %v3209 = vsel %vm3201, %v3192, %v3208
        %v3210 = vsel %vm3200, %v3207, %v3209
        %v3211 = vsel %vm3199, %v3189, %v3192
        %v3212 = vsel %vm3202, %v3198, 1326507024
        %v3213 = vsel %vm3201, %v3195, %v3212
        %v3214 = vsel %vm3200, %v3211, %v3213
        %v3215 = vshll.u32 %v3175, 8
        %v3216 = vmul.u32.u64.compose %v3215, %v3214
        %v3217 = vextract.low.u32 %v3216
        %v3218 = vextract.high.u32 %v3216
        %v3219 = vmul.u32.u64.compose %v3215, %v3210
        %v3220 = vextract.low.u32 %v3219
        %v3221 = vextract.high.u32 %v3219
        %v3222 = vmul.u32 %v3215, %v3206
        %v3223 = vadd.s32 %v3218, %v3220
        %vm3224 = vc.u32 %v3218, %v3220
        %v3225 = vadd.s32 %v3221, 1
        %v3226 = vsel %vm3224, %v3225, %v3221
        %v3227 = vadd.s32 %v3222, %v3226
        %v3228 = vadd.s32 %v3227, 536870912
        %v3229 = vshrl.u32 %v3228, 30
        %v3230 = vshll.u32 %v3229, 30
        %v3231 = vsub.s32 %v3227, %v3230
        %vm3232 = vcmp.lt.s32.totalorder %v3231, 0
        %v3233 = vsub.s32 0, %v3231
        %v3234 = vsel %vm3232, %v3233, %v3231
        %v3235 = vclz %v3234
        %v3236 = vsub.s32 %v3235, 2
        %vm3237 = vcmp.gt.s32.totalorder 0, %v3236
        %v3238 = vsel %vm3237, 0, %v3236
        %v3239 = vsub.s32 32, %v3238
        %v3240 = vshll.u32 %v3231, %v3238
        %v3241 = vshrl.u32 %v3223, %v3239
        %v3242 = vor.u32 %v3240, %v3241
        %v3243 = vsub.s32 4294967266, %v3238
        %v3244 = vadd.s32 %v3243, 127
        %v3245 = vshll.u32 %v3244, 23
        %v3246 = vor.u32 4788187, %v3245
        %v3247 = vand.u32 2147483647, %v3246
        %v3249 = vcvt.s32.f32 %v3242
        %v3250 = vmul.f32 %v3249, %v3247
        %v3251 = vxor.u32 %v3250, 2147483648
        %v3252 = vsel %vm3169, %v3251, %v3250
        %v3253 = vsub.s32 4, %v3229
        %v3254 = vsel %vm3169, %v3253, %v3229
        %v3255 = vsel %vm3168, %v2396, %v3252
        %v3256 = vsel %vm3168, 0, %v3254
        %v3257 = vcosq.f32.pop %v3255
        %v3258 = vsinq.f32.pop %v3255
        %vm3259 = vweird.f32 %v2396
        %v3260 = vadd.s32 %v3256, 3
        %v3261 = vand.u32 %v3260, 3
        %vm3262 = vcmp.lt.s32.totalorder %v3261, 2
        %vm3263 = vcmp.eq.s32.totalorder %v3261, 0
        %v3264 = vxor.u32 %v3258, 2147483648
        %v3265 = vsel %vm3263, %v3257, %v3264
        %vm3266 = vcmp.eq.s32.totalorder %v3261, 2
        %v3267 = vxor.u32 %v3257, 2147483648
        %v3268 = vsel %vm3266, %v3267, %v3258
        %v3269 = vsel %vm3262, %v3265, %v3268
        %v3270 = vsel %vm3259, nan, %v3269
        %v3271 = vand.u32 2147483647, %v2401
        %vm3272 = vcmp.le.f32.partialorder %v3271, 0.7853982
        %vm3273 = vcmp.lt.s32.totalorder %v2401, 0
        %v3274 = vand.u32 %v2401, 2139095040
        %v3275 = vshrl.u32 %v3274, 23
        %v3276 = vsub.s32 %v3275, 127
        %v3277 = vand.u32 2147483647, %v2401
        %v3278 = vand.u32 %v3277, 8388607
        %v3279 = vor.u32 %v3278, 8388608
        %v3280 = vsub.s32 0, %v3279
        %v3281 = vadd.s32 %v3276, 1
        %vm3282 = vcmp.gt.s32.totalorder %v3281, 0
        %v3283 = vsel %vm3282, %v3281, 0
        %v3284 = vshrl.u32 %v3283, 5
        %v3285 = vand.u32 %v3283, 31
        %v3286 = vsub.s32 32, %v3285
        %v3287 = vshrl.u32 683565275, %v3286
        %v3288 = vshll.u32 683565275, %v3285
        %v3289 = vshrl.u32 2475754826, %v3286
        %v3290 = vor.u32 %v3288, %v3289
        %v3291 = vshll.u32 2475754826, %v3285
        %v3292 = vshrl.u32 2131351028, %v3286
        %v3293 = vor.u32 %v3291, %v3292
        %v3294 = vshll.u32 2131351028, %v3285
        %v3295 = vshrl.u32 2102212464, %v3286
        %v3296 = vor.u32 %v3294, %v3295
        %v3297 = vshll.u32 2102212464, %v3285
        %v3298 = vshrl.u32 920167782, %v3286
        %v3299 = vor.u32 %v3297, %v3298
        %v3300 = vshll.u32 920167782, %v3285
        %v3301 = vshrl.u32 1326507024, %v3286
        %v3302 = vor.u32 %v3300, %v3301
        %vm3303 = vcmp.lt.s32.totalorder %v3284, 1
        %vm3304 = vcmp.lt.s32.totalorder %v3284, 2
        %vm3305 = vcmp.lt.s32.totalorder %v3284, 3
        %vm3306 = vcmp.lt.s32.totalorder %v3284, 4
        %v3307 = vsel %vm3303, %v3287, %v3290
        %v3308 = vsel %vm3306, %v3296, 2102212464
        %v3309 = vsel %vm3305, %v3293, %v3308
        %v3310 = vsel %vm3304, %v3307, %v3309
        %v3311 = vsel %vm3303, %v3290, %v3293
        %v3312 = vsel %vm3306, %v3299, 920167782
        %v3313 = vsel %vm3305, %v3296, %v3312
        %v3314 = vsel %vm3304, %v3311, %v3313
        %v3315 = vsel %vm3303, %v3293, %v3296
        %v3316 = vsel %vm3306, %v3302, 1326507024
        %v3317 = vsel %vm3305, %v3299, %v3316
        %v3318 = vsel %vm3304, %v3315, %v3317
        %v3319 = vshll.u32 %v3279, 8
        %v3320 = vmul.u32.u64.compose %v3319, %v3318
        %v3321 = vextract.low.u32 %v3320
        %v3322 = vextract.high.u32 %v3320
        %v3323 = vmul.u32.u64.compose %v3319, %v3314
        %v3324 = vextract.low.u32 %v3323
        %v3325 = vextract.high.u32 %v3323
        %v3326 = vmul.u32 %v3319, %v3310
        %v3327 = vadd.s32 %v3322, %v3324
        %vm3328 = vc.u32 %v3322, %v3324
        %v3329 = vadd.s32 %v3325, 1
        %v3330 = vsel %vm3328, %v3329, %v3325
        %v3331 = vadd.s32 %v3326, %v3330
        %v3332 = vadd.s32 %v3331, 536870912
        %v3333 = vshrl.u32 %v3332, 30
        %v3334 = vshll.u32 %v3333, 30
        %v3335 = vsub.s32 %v3331, %v3334
        %vm3336 = vcmp.lt.s32.totalorder %v3335, 0
        %v3337 = vsub.s32 0, %v3335
        %v3338 = vsel %vm3336, %v3337, %v3335
        %v3339 = vclz %v3338
        %v3340 = vsub.s32 %v3339, 2
        %vm3341 = vcmp.gt.s32.totalorder 0, %v3340
        %v3342 = vsel %vm3341, 0, %v3340
        %v3343 = vsub.s32 32, %v3342
        %v3344 = vshll.u32 %v3335, %v3342
        %v3345 = vshrl.u32 %v3327, %v3343
        %v3346 = vor.u32 %v3344, %v3345
        %v3347 = vsub.s32 4294967266, %v3342
        %v3348 = vadd.s32 %v3347, 127
        %v3349 = vshll.u32 %v3348, 23
        %v3350 = vor.u32 4788187, %v3349
        %v3351 = vand.u32 2147483647, %v3350
        %v3353 = vcvt.s32.f32 %v3346
        %v3354 = vmul.f32 %v3353, %v3351
        %v3355 = vxor.u32 %v3354, 2147483648
        %v3356 = vsel %vm3273, %v3355, %v3354
        %v3357 = vsub.s32 4, %v3333
        %v3358 = vsel %vm3273, %v3357, %v3333
        %v3359 = vsel %vm3272, %v2401, %v3356
        %v3360 = vsel %vm3272, 0, %v3358
        %v3361 = vcosq.f32.pop %v3359
        %v3362 = vsinq.f32.pop %v3359
        %vm3363 = vweird.f32 %v2401
        %v3364 = vadd.s32 %v3360, 3
        %v3365 = vand.u32 %v3364, 3
        %vm3366 = vcmp.lt.s32.totalorder %v3365, 2
        %vm3367 = vcmp.eq.s32.totalorder %v3365, 0
        %v3368 = vxor.u32 %v3362, 2147483648
        %v3369 = vsel %vm3367, %v3361, %v3368
        %vm3370 = vcmp.eq.s32.totalorder %v3365, 2
        %v3371 = vxor.u32 %v3361, 2147483648
        %v3372 = vsel %vm3370, %v3371, %v3362
        %v3373 = vsel %vm3366, %v3369, %v3372
        %v3374 = vsel %vm3363, nan, %v3373
        %v3375 = vand.u32 2147483647, %v2406
        %vm3376 = vcmp.le.f32.partialorder %v3375, 0.7853982
        %vm3377 = vcmp.lt.s32.totalorder %v2406, 0
        %v3378 = vand.u32 %v2406, 2139095040
        %v3379 = vshrl.u32 %v3378, 23
        %v3380 = vsub.s32 %v3379, 127
        %v3381 = vand.u32 2147483647, %v2406
        %v3382 = vand.u32 %v3381, 8388607
        %v3383 = vor.u32 %v3382, 8388608
        %v3384 = vsub.s32 0, %v3383
        %v3385 = vadd.s32 %v3380, 1
        %vm3386 = vcmp.gt.s32.totalorder %v3385, 0
        %v3387 = vsel %vm3386, %v3385, 0
        %v3388 = vshrl.u32 %v3387, 5
        %v3389 = vand.u32 %v3387, 31
        %v3390 = vsub.s32 32, %v3389
        %v3391 = vshrl.u32 683565275, %v3390
        %v3392 = vshll.u32 683565275, %v3389
        %v3393 = vshrl.u32 2475754826, %v3390
        %v3394 = vor.u32 %v3392, %v3393
        %v3395 = vshll.u32 2475754826, %v3389
        %v3396 = vshrl.u32 2131351028, %v3390
        %v3397 = vor.u32 %v3395, %v3396
        %v3398 = vshll.u32 2131351028, %v3389
        %v3399 = vshrl.u32 2102212464, %v3390
        %v3400 = vor.u32 %v3398, %v3399
        %v3401 = vshll.u32 2102212464, %v3389
        %v3402 = vshrl.u32 920167782, %v3390
        %v3403 = vor.u32 %v3401, %v3402
        %v3404 = vshll.u32 920167782, %v3389
        %v3405 = vshrl.u32 1326507024, %v3390
        %v3406 = vor.u32 %v3404, %v3405
        %vm3407 = vcmp.lt.s32.totalorder %v3388, 1
        %vm3408 = vcmp.lt.s32.totalorder %v3388, 2
        %vm3409 = vcmp.lt.s32.totalorder %v3388, 3
        %vm3410 = vcmp.lt.s32.totalorder %v3388, 4
        %v3411 = vsel %vm3407, %v3391, %v3394
        %v3412 = vsel %vm3410, %v3400, 2102212464
        %v3413 = vsel %vm3409, %v3397, %v3412
        %v3414 = vsel %vm3408, %v3411, %v3413
        %v3415 = vsel %vm3407, %v3394, %v3397
        %v3416 = vsel %vm3410, %v3403, 920167782
        %v3417 = vsel %vm3409, %v3400, %v3416
        %v3418 = vsel %vm3408, %v3415, %v3417
        %v3419 = vsel %vm3407, %v3397, %v3400
        %v3420 = vsel %vm3410, %v3406, 1326507024
        %v3421 = vsel %vm3409, %v3403, %v3420
        %v3422 = vsel %vm3408, %v3419, %v3421
        %v3423 = vshll.u32 %v3383, 8
        %v3424 = vmul.u32.u64.compose %v3423, %v3422
        %v3425 = vextract.low.u32 %v3424
        %v3426 = vextract.high.u32 %v3424
        %v3427 = vmul.u32.u64.compose %v3423, %v3418
        %v3428 = vextract.low.u32 %v3427
        %v3429 = vextract.high.u32 %v3427
        %v3430 = vmul.u32 %v3423, %v3414
        %v3431 = vadd.s32 %v3426, %v3428
        %vm3432 = vc.u32 %v3426, %v3428
        %v3433 = vadd.s32 %v3429, 1
        %v3434 = vsel %vm3432, %v3433, %v3429
        %v3435 = vadd.s32 %v3430, %v3434
        %v3436 = vadd.s32 %v3435, 536870912
        %v3437 = vshrl.u32 %v3436, 30
        %v3438 = vshll.u32 %v3437, 30
        %v3439 = vsub.s32 %v3435, %v3438
        %vm3440 = vcmp.lt.s32.totalorder %v3439, 0
        %v3441 = vsub.s32 0, %v3439
        %v3442 = vsel %vm3440, %v3441, %v3439
        %v3443 = vclz %v3442
        %v3444 = vsub.s32 %v3443, 2
        %vm3445 = vcmp.gt.s32.totalorder 0, %v3444
        %v3446 = vsel %vm3445, 0, %v3444
        %v3447 = vsub.s32 32, %v3446
        %v3448 = vshll.u32 %v3439, %v3446
        %v3449 = vshrl.u32 %v3431, %v3447
        %v3450 = vor.u32 %v3448, %v3449
        %v3451 = vsub.s32 4294967266, %v3446
        %v3452 = vadd.s32 %v3451, 127
        %v3453 = vshll.u32 %v3452, 23
        %v3454 = vor.u32 4788187, %v3453
        %v3455 = vand.u32 2147483647, %v3454
        %v3457 = vcvt.s32.f32 %v3450
        %v3458 = vmul.f32 %v3457, %v3455
        %v3459 = vxor.u32 %v3458, 2147483648
        %v3460 = vsel %vm3377, %v3459, %v3458
        %v3461 = vsub.s32 4, %v3437
        %v3462 = vsel %vm3377, %v3461, %v3437
        %v3463 = vsel %vm3376, %v2406, %v3460
        %v3464 = vsel %vm3376, 0, %v3462
        %v3465 = vcosq.f32.pop %v3463
        %v3466 = vsinq.f32.pop %v3463
        %vm3467 = vweird.f32 %v2406
        %v3468 = vadd.s32 %v3464, 3
        %v3469 = vand.u32 %v3468, 3
        %vm3470 = vcmp.lt.s32.totalorder %v3469, 2
        %vm3471 = vcmp.eq.s32.totalorder %v3469, 0
        %v3472 = vxor.u32 %v3466, 2147483648
        %v3473 = vsel %vm3471, %v3465, %v3472
        %vm3474 = vcmp.eq.s32.totalorder %v3469, 2
        %v3475 = vxor.u32 %v3465, 2147483648
        %v3476 = vsel %vm3474, %v3475, %v3466
        %v3477 = vsel %vm3470, %v3473, %v3476
        %v3478 = vsel %vm3467, nan, %v3477
        %v3479 = vand.u32 2147483647, %v2411
        %vm3480 = vcmp.le.f32.partialorder %v3479, 0.7853982
        %vm3481 = vcmp.lt.s32.totalorder %v2411, 0
        %v3482 = vand.u32 %v2411, 2139095040
        %v3483 = vshrl.u32 %v3482, 23
        %v3484 = vsub.s32 %v3483, 127
        %v3485 = vand.u32 2147483647, %v2411
        %v3486 = vand.u32 %v3485, 8388607
        %v3487 = vor.u32 %v3486, 8388608
        %v3488 = vsub.s32 0, %v3487
        %v3489 = vadd.s32 %v3484, 1
        %vm3490 = vcmp.gt.s32.totalorder %v3489, 0
        %v3491 = vsel %vm3490, %v3489, 0
        %v3492 = vshrl.u32 %v3491, 5
        %v3493 = vand.u32 %v3491, 31
        %v3494 = vsub.s32 32, %v3493
        %v3495 = vshrl.u32 683565275, %v3494
        %v3496 = vshll.u32 683565275, %v3493
        %v3497 = vshrl.u32 2475754826, %v3494
        %v3498 = vor.u32 %v3496, %v3497
        %v3499 = vshll.u32 2475754826, %v3493
        %v3500 = vshrl.u32 2131351028, %v3494
        %v3501 = vor.u32 %v3499, %v3500
        %v3502 = vshll.u32 2131351028, %v3493
        %v3503 = vshrl.u32 2102212464, %v3494
        %v3504 = vor.u32 %v3502, %v3503
        %v3505 = vshll.u32 2102212464, %v3493
        %v3506 = vshrl.u32 920167782, %v3494
        %v3507 = vor.u32 %v3505, %v3506
        %v3508 = vshll.u32 920167782, %v3493
        %v3509 = vshrl.u32 1326507024, %v3494
        %v3510 = vor.u32 %v3508, %v3509
        %vm3511 = vcmp.lt.s32.totalorder %v3492, 1
        %vm3512 = vcmp.lt.s32.totalorder %v3492, 2
        %vm3513 = vcmp.lt.s32.totalorder %v3492, 3
        %vm3514 = vcmp.lt.s32.totalorder %v3492, 4
        %v3515 = vsel %vm3511, %v3495, %v3498
        %v3516 = vsel %vm3514, %v3504, 2102212464
        %v3517 = vsel %vm3513, %v3501, %v3516
        %v3518 = vsel %vm3512, %v3515, %v3517
        %v3519 = vsel %vm3511, %v3498, %v3501
        %v3520 = vsel %vm3514, %v3507, 920167782
        %v3521 = vsel %vm3513, %v3504, %v3520
        %v3522 = vsel %vm3512, %v3519, %v3521
        %v3523 = vsel %vm3511, %v3501, %v3504
        %v3524 = vsel %vm3514, %v3510, 1326507024
        %v3525 = vsel %vm3513, %v3507, %v3524
        %v3526 = vsel %vm3512, %v3523, %v3525
        %v3527 = vshll.u32 %v3487, 8
        %v3528 = vmul.u32.u64.compose %v3527, %v3526
        %v3529 = vextract.low.u32 %v3528
        %v3530 = vextract.high.u32 %v3528
        %v3531 = vmul.u32.u64.compose %v3527, %v3522
        %v3532 = vextract.low.u32 %v3531
        %v3533 = vextract.high.u32 %v3531
        %v3534 = vmul.u32 %v3527, %v3518
        %v3535 = vadd.s32 %v3530, %v3532
        %vm3536 = vc.u32 %v3530, %v3532
        %v3537 = vadd.s32 %v3533, 1
        %v3538 = vsel %vm3536, %v3537, %v3533
        %v3539 = vadd.s32 %v3534, %v3538
        %v3540 = vadd.s32 %v3539, 536870912
        %v3541 = vshrl.u32 %v3540, 30
        %v3542 = vshll.u32 %v3541, 30
        %v3543 = vsub.s32 %v3539, %v3542
        %vm3544 = vcmp.lt.s32.totalorder %v3543, 0
        %v3545 = vsub.s32 0, %v3543
        %v3546 = vsel %vm3544, %v3545, %v3543
        %v3547 = vclz %v3546
        %v3548 = vsub.s32 %v3547, 2
        %vm3549 = vcmp.gt.s32.totalorder 0, %v3548
        %v3550 = vsel %vm3549, 0, %v3548
        %v3551 = vsub.s32 32, %v3550
        %v3552 = vshll.u32 %v3543, %v3550
        %v3553 = vshrl.u32 %v3535, %v3551
        %v3554 = vor.u32 %v3552, %v3553
        %v3555 = vsub.s32 4294967266, %v3550
        %v3556 = vadd.s32 %v3555, 127
        %v3557 = vshll.u32 %v3556, 23
        %v3558 = vor.u32 4788187, %v3557
        %v3559 = vand.u32 2147483647, %v3558
        %v3561 = vcvt.s32.f32 %v3554
        %v3562 = vmul.f32 %v3561, %v3559
        %v3563 = vxor.u32 %v3562, 2147483648
        %v3564 = vsel %vm3481, %v3563, %v3562
        %v3565 = vsub.s32 4, %v3541
        %v3566 = vsel %vm3481, %v3565, %v3541
        %v3567 = vsel %vm3480, %v2411, %v3564
        %v3568 = vsel %vm3480, 0, %v3566
        %v3569 = vcosq.f32.pop %v3567
        %v3570 = vsinq.f32.pop %v3567
        %vm3571 = vweird.f32 %v2411
        %v3572 = vadd.s32 %v3568, 3
        %v3573 = vand.u32 %v3572, 3
        %vm3574 = vcmp.lt.s32.totalorder %v3573, 2
        %vm3575 = vcmp.eq.s32.totalorder %v3573, 0
        %v3576 = vxor.u32 %v3570, 2147483648
        %v3577 = vsel %vm3575, %v3569, %v3576
        %vm3578 = vcmp.eq.s32.totalorder %v3573, 2
        %v3579 = vxor.u32 %v3569, 2147483648
        %v3580 = vsel %vm3578, %v3579, %v3570
        %v3581 = vsel %vm3574, %v3577, %v3580
        %v3582 = vsel %vm3571, nan, %v3581
        %v3583 = vand.u32 2147483647, %v2416
        %vm3584 = vcmp.le.f32.partialorder %v3583, 0.7853982
        %vm3585 = vcmp.lt.s32.totalorder %v2416, 0
        %v3586 = vand.u32 %v2416, 2139095040
        %v3587 = vshrl.u32 %v3586, 23
        %v3588 = vsub.s32 %v3587, 127
        %v3589 = vand.u32 2147483647, %v2416
        %v3590 = vand.u32 %v3589, 8388607
        %v3591 = vor.u32 %v3590, 8388608
        %v3592 = vsub.s32 0, %v3591
        %v3593 = vadd.s32 %v3588, 1
        %vm3594 = vcmp.gt.s32.totalorder %v3593, 0
        %v3595 = vsel %vm3594, %v3593, 0
        %v3596 = vshrl.u32 %v3595, 5
        %v3597 = vand.u32 %v3595, 31
        %v3598 = vsub.s32 32, %v3597
        %v3599 = vshrl.u32 683565275, %v3598
        %v3600 = vshll.u32 683565275, %v3597
        %v3601 = vshrl.u32 2475754826, %v3598
        %v3602 = vor.u32 %v3600, %v3601
        %v3603 = vshll.u32 2475754826, %v3597
        %v3604 = vshrl.u32 2131351028, %v3598
        %v3605 = vor.u32 %v3603, %v3604
        %v3606 = vshll.u32 2131351028, %v3597
        %v3607 = vshrl.u32 2102212464, %v3598
        %v3608 = vor.u32 %v3606, %v3607
        %v3609 = vshll.u32 2102212464, %v3597
        %v3610 = vshrl.u32 920167782, %v3598
        %v3611 = vor.u32 %v3609, %v3610
        %v3612 = vshll.u32 920167782, %v3597
        %v3613 = vshrl.u32 1326507024, %v3598
        %v3614 = vor.u32 %v3612, %v3613
        %vm3615 = vcmp.lt.s32.totalorder %v3596, 1
        %vm3616 = vcmp.lt.s32.totalorder %v3596, 2
        %vm3617 = vcmp.lt.s32.totalorder %v3596, 3
        %vm3618 = vcmp.lt.s32.totalorder %v3596, 4
        %v3619 = vsel %vm3615, %v3599, %v3602
        %v3620 = vsel %vm3618, %v3608, 2102212464
        %v3621 = vsel %vm3617, %v3605, %v3620
        %v3622 = vsel %vm3616, %v3619, %v3621
        %v3623 = vsel %vm3615, %v3602, %v3605
        %v3624 = vsel %vm3618, %v3611, 920167782
        %v3625 = vsel %vm3617, %v3608, %v3624
        %v3626 = vsel %vm3616, %v3623, %v3625
        %v3627 = vsel %vm3615, %v3605, %v3608
        %v3628 = vsel %vm3618, %v3614, 1326507024
        %v3629 = vsel %vm3617, %v3611, %v3628
        %v3630 = vsel %vm3616, %v3627, %v3629
        %v3631 = vshll.u32 %v3591, 8
        %v3632 = vmul.u32.u64.compose %v3631, %v3630
        %v3633 = vextract.low.u32 %v3632
        %v3634 = vextract.high.u32 %v3632
        %v3635 = vmul.u32.u64.compose %v3631, %v3626
        %v3636 = vextract.low.u32 %v3635
        %v3637 = vextract.high.u32 %v3635
        %v3638 = vmul.u32 %v3631, %v3622
        %v3639 = vadd.s32 %v3634, %v3636
        %vm3640 = vc.u32 %v3634, %v3636
        %v3641 = vadd.s32 %v3637, 1
        %v3642 = vsel %vm3640, %v3641, %v3637
        %v3643 = vadd.s32 %v3638, %v3642
        %v3644 = vadd.s32 %v3643, 536870912
        %v3645 = vshrl.u32 %v3644, 30
        %v3646 = vshll.u32 %v3645, 30
        %v3647 = vsub.s32 %v3643, %v3646
        %vm3648 = vcmp.lt.s32.totalorder %v3647, 0
        %v3649 = vsub.s32 0, %v3647
        %v3650 = vsel %vm3648, %v3649, %v3647
        %v3651 = vclz %v3650
        %v3652 = vsub.s32 %v3651, 2
        %vm3653 = vcmp.gt.s32.totalorder 0, %v3652
        %v3654 = vsel %vm3653, 0, %v3652
        %v3655 = vsub.s32 32, %v3654
        %v3656 = vshll.u32 %v3647, %v3654
        %v3657 = vshrl.u32 %v3639, %v3655
        %v3658 = vor.u32 %v3656, %v3657
        %v3659 = vsub.s32 4294967266, %v3654
        %v3660 = vadd.s32 %v3659, 127
        %v3661 = vshll.u32 %v3660, 23
        %v3662 = vor.u32 4788187, %v3661
        %v3663 = vand.u32 2147483647, %v3662
        %v3665 = vcvt.s32.f32 %v3658
        %v3666 = vmul.f32 %v3665, %v3663
        %v3667 = vxor.u32 %v3666, 2147483648
        %v3668 = vsel %vm3585, %v3667, %v3666
        %v3669 = vsub.s32 4, %v3645
        %v3670 = vsel %vm3585, %v3669, %v3645
        %v3671 = vsel %vm3584, %v2416, %v3668
        %v3672 = vsel %vm3584, 0, %v3670
        %v3673 = vcosq.f32.pop %v3671
        %v3674 = vsinq.f32.pop %v3671
        %vm3675 = vweird.f32 %v2416
        %v3676 = vadd.s32 %v3672, 3
        %v3677 = vand.u32 %v3676, 3
        %vm3678 = vcmp.lt.s32.totalorder %v3677, 2
        %vm3679 = vcmp.eq.s32.totalorder %v3677, 0
        %v3680 = vxor.u32 %v3674, 2147483648
        %v3681 = vsel %vm3679, %v3673, %v3680
        %vm3682 = vcmp.eq.s32.totalorder %v3677, 2
        %v3683 = vxor.u32 %v3673, 2147483648
        %v3684 = vsel %vm3682, %v3683, %v3674
        %v3685 = vsel %vm3678, %v3681, %v3684
        %v3686 = vsel %vm3675, nan, %v3685
        %v3687 = vand.u32 2147483647, %v2421
        %vm3688 = vcmp.le.f32.partialorder %v3687, 0.7853982
        %vm3689 = vcmp.lt.s32.totalorder %v2421, 0
        %v3690 = vand.u32 %v2421, 2139095040
        %v3691 = vshrl.u32 %v3690, 23
        %v3692 = vsub.s32 %v3691, 127
        %v3693 = vand.u32 2147483647, %v2421
        %v3694 = vand.u32 %v3693, 8388607
        %v3695 = vor.u32 %v3694, 8388608
        %v3696 = vsub.s32 0, %v3695
        %v3697 = vadd.s32 %v3692, 1
        %vm3698 = vcmp.gt.s32.totalorder %v3697, 0
        %v3699 = vsel %vm3698, %v3697, 0
        %v3700 = vshrl.u32 %v3699, 5
        %v3701 = vand.u32 %v3699, 31
        %v3702 = vsub.s32 32, %v3701
        %v3703 = vshrl.u32 683565275, %v3702
        %v3704 = vshll.u32 683565275, %v3701
        %v3705 = vshrl.u32 2475754826, %v3702
        %v3706 = vor.u32 %v3704, %v3705
        %v3707 = vshll.u32 2475754826, %v3701
        %v3708 = vshrl.u32 2131351028, %v3702
        %v3709 = vor.u32 %v3707, %v3708
        %v3710 = vshll.u32 2131351028, %v3701
        %v3711 = vshrl.u32 2102212464, %v3702
        %v3712 = vor.u32 %v3710, %v3711
        %v3713 = vshll.u32 2102212464, %v3701
        %v3714 = vshrl.u32 920167782, %v3702
        %v3715 = vor.u32 %v3713, %v3714
        %v3716 = vshll.u32 920167782, %v3701
        %v3717 = vshrl.u32 1326507024, %v3702
        %v3718 = vor.u32 %v3716, %v3717
        %vm3719 = vcmp.lt.s32.totalorder %v3700, 1
        %vm3720 = vcmp.lt.s32.totalorder %v3700, 2
        %vm3721 = vcmp.lt.s32.totalorder %v3700, 3
        %vm3722 = vcmp.lt.s32.totalorder %v3700, 4
        %v3723 = vsel %vm3719, %v3703, %v3706
        %v3724 = vsel %vm3722, %v3712, 2102212464
        %v3725 = vsel %vm3721, %v3709, %v3724
        %v3726 = vsel %vm3720, %v3723, %v3725
        %v3727 = vsel %vm3719, %v3706, %v3709
        %v3728 = vsel %vm3722, %v3715, 920167782
        %v3729 = vsel %vm3721, %v3712, %v3728
        %v3730 = vsel %vm3720, %v3727, %v3729
        %v3731 = vsel %vm3719, %v3709, %v3712
        %v3732 = vsel %vm3722, %v3718, 1326507024
        %v3733 = vsel %vm3721, %v3715, %v3732
        %v3734 = vsel %vm3720, %v3731, %v3733
        %v3735 = vshll.u32 %v3695, 8
        %v3736 = vmul.u32.u64.compose %v3735, %v3734
        %v3737 = vextract.low.u32 %v3736
        %v3738 = vextract.high.u32 %v3736
        %v3739 = vmul.u32.u64.compose %v3735, %v3730
        %v3740 = vextract.low.u32 %v3739
        %v3741 = vextract.high.u32 %v3739
        %v3742 = vmul.u32 %v3735, %v3726
        %v3743 = vadd.s32 %v3738, %v3740
        %vm3744 = vc.u32 %v3738, %v3740
        %v3745 = vadd.s32 %v3741, 1
        %v3746 = vsel %vm3744, %v3745, %v3741
        %v3747 = vadd.s32 %v3742, %v3746
        %v3748 = vadd.s32 %v3747, 536870912
        %v3749 = vshrl.u32 %v3748, 30
        %v3750 = vshll.u32 %v3749, 30
        %v3751 = vsub.s32 %v3747, %v3750
        %vm3752 = vcmp.lt.s32.totalorder %v3751, 0
        %v3753 = vsub.s32 0, %v3751
        %v3754 = vsel %vm3752, %v3753, %v3751
        %v3755 = vclz %v3754
        %v3756 = vsub.s32 %v3755, 2
        %vm3757 = vcmp.gt.s32.totalorder 0, %v3756
        %v3758 = vsel %vm3757, 0, %v3756
        %v3759 = vsub.s32 32, %v3758
        %v3760 = vshll.u32 %v3751, %v3758
        %v3761 = vshrl.u32 %v3743, %v3759
        %v3762 = vor.u32 %v3760, %v3761
        %v3763 = vsub.s32 4294967266, %v3758
        %v3764 = vadd.s32 %v3763, 127
        %v3765 = vshll.u32 %v3764, 23
        %v3766 = vor.u32 4788187, %v3765
        %v3767 = vand.u32 2147483647, %v3766
        %v3769 = vcvt.s32.f32 %v3762
        %v3770 = vmul.f32 %v3769, %v3767
        %v3771 = vxor.u32 %v3770, 2147483648
        %v3772 = vsel %vm3689, %v3771, %v3770
        %v3773 = vsub.s32 4, %v3749
        %v3774 = vsel %vm3689, %v3773, %v3749
        %v3775 = vsel %vm3688, %v2421, %v3772
        %v3776 = vsel %vm3688, 0, %v3774
        %v3777 = vcosq.f32.pop %v3775
        %v3778 = vsinq.f32.pop %v3775
        %vm3779 = vweird.f32 %v2421
        %v3780 = vadd.s32 %v3776, 3
        %v3781 = vand.u32 %v3780, 3
        %vm3782 = vcmp.lt.s32.totalorder %v3781, 2
        %vm3783 = vcmp.eq.s32.totalorder %v3781, 0
        %v3784 = vxor.u32 %v3778, 2147483648
        %v3785 = vsel %vm3783, %v3777, %v3784
        %vm3786 = vcmp.eq.s32.totalorder %v3781, 2
        %v3787 = vxor.u32 %v3777, 2147483648
        %v3788 = vsel %vm3786, %v3787, %v3778
        %v3789 = vsel %vm3782, %v3785, %v3788
        %v3790 = vsel %vm3779, nan, %v3789
        %v3791 = vand.u32 2147483647, %v2426
        %vm3792 = vcmp.le.f32.partialorder %v3791, 0.7853982
        %vm3793 = vcmp.lt.s32.totalorder %v2426, 0
        %v3794 = vand.u32 %v2426, 2139095040
        %v3795 = vshrl.u32 %v3794, 23
        %v3796 = vsub.s32 %v3795, 127
        %v3797 = vand.u32 2147483647, %v2426
        %v3798 = vand.u32 %v3797, 8388607
        %v3799 = vor.u32 %v3798, 8388608
        %v3800 = vsub.s32 0, %v3799
        %v3801 = vadd.s32 %v3796, 1
        %vm3802 = vcmp.gt.s32.totalorder %v3801, 0
        %v3803 = vsel %vm3802, %v3801, 0
        %v3804 = vshrl.u32 %v3803, 5
        %v3805 = vand.u32 %v3803, 31
        %v3806 = vsub.s32 32, %v3805
        %v3807 = vshrl.u32 683565275, %v3806
        %v3808 = vshll.u32 683565275, %v3805
        %v3809 = vshrl.u32 2475754826, %v3806
        %v3810 = vor.u32 %v3808, %v3809
        %v3811 = vshll.u32 2475754826, %v3805
        %v3812 = vshrl.u32 2131351028, %v3806
        %v3813 = vor.u32 %v3811, %v3812
        %v3814 = vshll.u32 2131351028, %v3805
        %v3815 = vshrl.u32 2102212464, %v3806
        %v3816 = vor.u32 %v3814, %v3815
        %v3817 = vshll.u32 2102212464, %v3805
        %v3818 = vshrl.u32 920167782, %v3806
        %v3819 = vor.u32 %v3817, %v3818
        %v3820 = vshll.u32 920167782, %v3805
        %v3821 = vshrl.u32 1326507024, %v3806
        %v3822 = vor.u32 %v3820, %v3821
        %vm3823 = vcmp.lt.s32.totalorder %v3804, 1
        %vm3824 = vcmp.lt.s32.totalorder %v3804, 2
        %vm3825 = vcmp.lt.s32.totalorder %v3804, 3
        %vm3826 = vcmp.lt.s32.totalorder %v3804, 4
        %v3827 = vsel %vm3823, %v3807, %v3810
        %v3828 = vsel %vm3826, %v3816, 2102212464
        %v3829 = vsel %vm3825, %v3813, %v3828
        %v3830 = vsel %vm3824, %v3827, %v3829
        %v3831 = vsel %vm3823, %v3810, %v3813
        %v3832 = vsel %vm3826, %v3819, 920167782
        %v3833 = vsel %vm3825, %v3816, %v3832
        %v3834 = vsel %vm3824, %v3831, %v3833
        %v3835 = vsel %vm3823, %v3813, %v3816
        %v3836 = vsel %vm3826, %v3822, 1326507024
        %v3837 = vsel %vm3825, %v3819, %v3836
        %v3838 = vsel %vm3824, %v3835, %v3837
        %v3839 = vshll.u32 %v3799, 8
        %v3840 = vmul.u32.u64.compose %v3839, %v3838
        %v3841 = vextract.low.u32 %v3840
        %v3842 = vextract.high.u32 %v3840
        %v3843 = vmul.u32.u64.compose %v3839, %v3834
        %v3844 = vextract.low.u32 %v3843
        %v3845 = vextract.high.u32 %v3843
        %v3846 = vmul.u32 %v3839, %v3830
        %v3847 = vadd.s32 %v3842, %v3844
        %vm3848 = vc.u32 %v3842, %v3844
        %v3849 = vadd.s32 %v3845, 1
        %v3850 = vsel %vm3848, %v3849, %v3845
        %v3851 = vadd.s32 %v3846, %v3850
        %v3852 = vadd.s32 %v3851, 536870912
        %v3853 = vshrl.u32 %v3852, 30
        %v3854 = vshll.u32 %v3853, 30
        %v3855 = vsub.s32 %v3851, %v3854
        %vm3856 = vcmp.lt.s32.totalorder %v3855, 0
        %v3857 = vsub.s32 0, %v3855
        %v3858 = vsel %vm3856, %v3857, %v3855
        %v3859 = vclz %v3858
        %v3860 = vsub.s32 %v3859, 2
        %vm3861 = vcmp.gt.s32.totalorder 0, %v3860
        %v3862 = vsel %vm3861, 0, %v3860
        %v3863 = vsub.s32 32, %v3862
        %v3864 = vshll.u32 %v3855, %v3862
        %v3865 = vshrl.u32 %v3847, %v3863
        %v3866 = vor.u32 %v3864, %v3865
        %v3867 = vsub.s32 4294967266, %v3862
        %v3868 = vadd.s32 %v3867, 127
        %v3869 = vshll.u32 %v3868, 23
        %v3870 = vor.u32 4788187, %v3869
        %v3871 = vand.u32 2147483647, %v3870
        %v3873 = vcvt.s32.f32 %v3866
        %v3874 = vmul.f32 %v3873, %v3871
        %v3875 = vxor.u32 %v3874, 2147483648
        %v3876 = vsel %vm3793, %v3875, %v3874
        %v3877 = vsub.s32 4, %v3853
        %v3878 = vsel %vm3793, %v3877, %v3853
        %v3879 = vsel %vm3792, %v2426, %v3876
        %v3880 = vsel %vm3792, 0, %v3878
        %v3881 = vcosq.f32.pop %v3879
        %v3882 = vsinq.f32.pop %v3879
        %vm3883 = vweird.f32 %v2426
        %v3884 = vadd.s32 %v3880, 3
        %v3885 = vand.u32 %v3884, 3
        %vm3886 = vcmp.lt.s32.totalorder %v3885, 2
        %vm3887 = vcmp.eq.s32.totalorder %v3885, 0
        %v3888 = vxor.u32 %v3882, 2147483648
        %v3889 = vsel %vm3887, %v3881, %v3888
        %vm3890 = vcmp.eq.s32.totalorder %v3885, 2
        %v3891 = vxor.u32 %v3881, 2147483648
        %v3892 = vsel %vm3890, %v3891, %v3882
        %v3893 = vsel %vm3886, %v3889, %v3892
        %v3894 = vsel %vm3883, nan, %v3893
        %v3895 = vand.u32 2147483647, %v2431
        %vm3896 = vcmp.le.f32.partialorder %v3895, 0.7853982
        %vm3897 = vcmp.lt.s32.totalorder %v2431, 0
        %v3898 = vand.u32 %v2431, 2139095040
        %v3899 = vshrl.u32 %v3898, 23
        %v3900 = vsub.s32 %v3899, 127
        %v3901 = vand.u32 2147483647, %v2431
        %v3902 = vand.u32 %v3901, 8388607
        %v3903 = vor.u32 %v3902, 8388608
        %v3904 = vsub.s32 0, %v3903
        %v3905 = vadd.s32 %v3900, 1
        %vm3906 = vcmp.gt.s32.totalorder %v3905, 0
        %v3907 = vsel %vm3906, %v3905, 0
        %v3908 = vshrl.u32 %v3907, 5
        %v3909 = vand.u32 %v3907, 31
        %v3910 = vsub.s32 32, %v3909
        %v3911 = vshrl.u32 683565275, %v3910
        %v3912 = vshll.u32 683565275, %v3909
        %v3913 = vshrl.u32 2475754826, %v3910
        %v3914 = vor.u32 %v3912, %v3913
        %v3915 = vshll.u32 2475754826, %v3909
        %v3916 = vshrl.u32 2131351028, %v3910
        %v3917 = vor.u32 %v3915, %v3916
        %v3918 = vshll.u32 2131351028, %v3909
        %v3919 = vshrl.u32 2102212464, %v3910
        %v3920 = vor.u32 %v3918, %v3919
        %v3921 = vshll.u32 2102212464, %v3909
        %v3922 = vshrl.u32 920167782, %v3910
        %v3923 = vor.u32 %v3921, %v3922
        %v3924 = vshll.u32 920167782, %v3909
        %v3925 = vshrl.u32 1326507024, %v3910
        %v3926 = vor.u32 %v3924, %v3925
        %vm3927 = vcmp.lt.s32.totalorder %v3908, 1
        %vm3928 = vcmp.lt.s32.totalorder %v3908, 2
        %vm3929 = vcmp.lt.s32.totalorder %v3908, 3
        %vm3930 = vcmp.lt.s32.totalorder %v3908, 4
        %v3931 = vsel %vm3927, %v3911, %v3914
        %v3932 = vsel %vm3930, %v3920, 2102212464
        %v3933 = vsel %vm3929, %v3917, %v3932
        %v3934 = vsel %vm3928, %v3931, %v3933
        %v3935 = vsel %vm3927, %v3914, %v3917
        %v3936 = vsel %vm3930, %v3923, 920167782
        %v3937 = vsel %vm3929, %v3920, %v3936
        %v3938 = vsel %vm3928, %v3935, %v3937
        %v3939 = vsel %vm3927, %v3917, %v3920
        %v3940 = vsel %vm3930, %v3926, 1326507024
        %v3941 = vsel %vm3929, %v3923, %v3940
        %v3942 = vsel %vm3928, %v3939, %v3941
        %v3943 = vshll.u32 %v3903, 8
        %v3944 = vmul.u32.u64.compose %v3943, %v3942
        %v3945 = vextract.low.u32 %v3944
        %v3946 = vextract.high.u32 %v3944
        %v3947 = vmul.u32.u64.compose %v3943, %v3938
        %v3948 = vextract.low.u32 %v3947
        %v3949 = vextract.high.u32 %v3947
        %v3950 = vmul.u32 %v3943, %v3934
        %v3951 = vadd.s32 %v3946, %v3948
        %vm3952 = vc.u32 %v3946, %v3948
        %v3953 = vadd.s32 %v3949, 1
        %v3954 = vsel %vm3952, %v3953, %v3949
        %v3955 = vadd.s32 %v3950, %v3954
        %v3956 = vadd.s32 %v3955, 536870912
        %v3957 = vshrl.u32 %v3956, 30
        %v3958 = vshll.u32 %v3957, 30
        %v3959 = vsub.s32 %v3955, %v3958
        %vm3960 = vcmp.lt.s32.totalorder %v3959, 0
        %v3961 = vsub.s32 0, %v3959
        %v3962 = vsel %vm3960, %v3961, %v3959
        %v3963 = vclz %v3962
        %v3964 = vsub.s32 %v3963, 2
        %vm3965 = vcmp.gt.s32.totalorder 0, %v3964
        %v3966 = vsel %vm3965, 0, %v3964
        %v3967 = vsub.s32 32, %v3966
        %v3968 = vshll.u32 %v3959, %v3966
        %v3969 = vshrl.u32 %v3951, %v3967
        %v3970 = vor.u32 %v3968, %v3969
        %v3971 = vsub.s32 4294967266, %v3966
        %v3972 = vadd.s32 %v3971, 127
        %v3973 = vshll.u32 %v3972, 23
        %v3974 = vor.u32 4788187, %v3973
        %v3975 = vand.u32 2147483647, %v3974
        %v3977 = vcvt.s32.f32 %v3970
        %v3978 = vmul.f32 %v3977, %v3975
        %v3979 = vxor.u32 %v3978, 2147483648
        %v3980 = vsel %vm3897, %v3979, %v3978
        %v3981 = vsub.s32 4, %v3957
        %v3982 = vsel %vm3897, %v3981, %v3957
        %v3983 = vsel %vm3896, %v2431, %v3980
        %v3984 = vsel %vm3896, 0, %v3982
        %v3985 = vcosq.f32.pop %v3983
        %v3986 = vsinq.f32.pop %v3983
        %vm3987 = vweird.f32 %v2431
        %v3988 = vadd.s32 %v3984, 3
        %v3989 = vand.u32 %v3988, 3
        %vm3990 = vcmp.lt.s32.totalorder %v3989, 2
        %vm3991 = vcmp.eq.s32.totalorder %v3989, 0
        %v3992 = vxor.u32 %v3986, 2147483648
        %v3993 = vsel %vm3991, %v3985, %v3992
        %vm3994 = vcmp.eq.s32.totalorder %v3989, 2
        %v3995 = vxor.u32 %v3985, 2147483648
        %v3996 = vsel %vm3994, %v3995, %v3986
        %v3997 = vsel %vm3990, %v3993, %v3996
        %v3998 = vsel %vm3987, nan, %v3997
        %v3999 = vand.u32 2147483647, %v2436
        %vm4000 = vcmp.le.f32.partialorder %v3999, 0.7853982
        %vm4001 = vcmp.lt.s32.totalorder %v2436, 0
        %v4002 = vand.u32 %v2436, 2139095040
        %v4003 = vshrl.u32 %v4002, 23
        %v4004 = vsub.s32 %v4003, 127
        %v4005 = vand.u32 2147483647, %v2436
        %v4006 = vand.u32 %v4005, 8388607
        %v4007 = vor.u32 %v4006, 8388608
        %v4008 = vsub.s32 0, %v4007
        %v4009 = vadd.s32 %v4004, 1
        %vm4010 = vcmp.gt.s32.totalorder %v4009, 0
        %v4011 = vsel %vm4010, %v4009, 0
        %v4012 = vshrl.u32 %v4011, 5
        %v4013 = vand.u32 %v4011, 31
        %v4014 = vsub.s32 32, %v4013
        %v4015 = vshrl.u32 683565275, %v4014
        %v4016 = vshll.u32 683565275, %v4013
        %v4017 = vshrl.u32 2475754826, %v4014
        %v4018 = vor.u32 %v4016, %v4017
        %v4019 = vshll.u32 2475754826, %v4013
        %v4020 = vshrl.u32 2131351028, %v4014
        %v4021 = vor.u32 %v4019, %v4020
        %v4022 = vshll.u32 2131351028, %v4013
        %v4023 = vshrl.u32 2102212464, %v4014
        %v4024 = vor.u32 %v4022, %v4023
        %v4025 = vshll.u32 2102212464, %v4013
        %v4026 = vshrl.u32 920167782, %v4014
        %v4027 = vor.u32 %v4025, %v4026
        %v4028 = vshll.u32 920167782, %v4013
        %v4029 = vshrl.u32 1326507024, %v4014
        %v4030 = vor.u32 %v4028, %v4029
        %vm4031 = vcmp.lt.s32.totalorder %v4012, 1
        %vm4032 = vcmp.lt.s32.totalorder %v4012, 2
        %vm4033 = vcmp.lt.s32.totalorder %v4012, 3
        %vm4034 = vcmp.lt.s32.totalorder %v4012, 4
        %v4035 = vsel %vm4031, %v4015, %v4018
        %v4036 = vsel %vm4034, %v4024, 2102212464
        %v4037 = vsel %vm4033, %v4021, %v4036
        %v4038 = vsel %vm4032, %v4035, %v4037
        %v4039 = vsel %vm4031, %v4018, %v4021
        %v4040 = vsel %vm4034, %v4027, 920167782
        %v4041 = vsel %vm4033, %v4024, %v4040
        %v4042 = vsel %vm4032, %v4039, %v4041
        %v4043 = vsel %vm4031, %v4021, %v4024
        %v4044 = vsel %vm4034, %v4030, 1326507024
        %v4045 = vsel %vm4033, %v4027, %v4044
        %v4046 = vsel %vm4032, %v4043, %v4045
        %v4047 = vshll.u32 %v4007, 8
        %v4048 = vmul.u32.u64.compose %v4047, %v4046
        %v4049 = vextract.low.u32 %v4048
        %v4050 = vextract.high.u32 %v4048
        %v4051 = vmul.u32.u64.compose %v4047, %v4042
        %v4052 = vextract.low.u32 %v4051
        %v4053 = vextract.high.u32 %v4051
        %v4054 = vmul.u32 %v4047, %v4038
        %v4055 = vadd.s32 %v4050, %v4052
        %vm4056 = vc.u32 %v4050, %v4052
        %v4057 = vadd.s32 %v4053, 1
        %v4058 = vsel %vm4056, %v4057, %v4053
        %v4059 = vadd.s32 %v4054, %v4058
        %v4060 = vadd.s32 %v4059, 536870912
        %v4061 = vshrl.u32 %v4060, 30
        %v4062 = vshll.u32 %v4061, 30
        %v4063 = vsub.s32 %v4059, %v4062
        %vm4064 = vcmp.lt.s32.totalorder %v4063, 0
        %v4065 = vsub.s32 0, %v4063
        %v4066 = vsel %vm4064, %v4065, %v4063
        %v4067 = vclz %v4066
        %v4068 = vsub.s32 %v4067, 2
        %vm4069 = vcmp.gt.s32.totalorder 0, %v4068
        %v4070 = vsel %vm4069, 0, %v4068
        %v4071 = vsub.s32 32, %v4070
        %v4072 = vshll.u32 %v4063, %v4070
        %v4073 = vshrl.u32 %v4055, %v4071
        %v4074 = vor.u32 %v4072, %v4073
        %v4075 = vsub.s32 4294967266, %v4070
        %v4076 = vadd.s32 %v4075, 127
        %v4077 = vshll.u32 %v4076, 23
        %v4078 = vor.u32 4788187, %v4077
        %v4079 = vand.u32 2147483647, %v4078
        %v4081 = vcvt.s32.f32 %v4074
        %v4082 = vmul.f32 %v4081, %v4079
        %v4083 = vxor.u32 %v4082, 2147483648
        %v4084 = vsel %vm4001, %v4083, %v4082
        %v4085 = vsub.s32 4, %v4061
        %v4086 = vsel %vm4001, %v4085, %v4061
        %v4087 = vsel %vm4000, %v2436, %v4084
        %v4088 = vsel %vm4000, 0, %v4086
        %v4089 = vcosq.f32.pop %v4087
        %v4090 = vsinq.f32.pop %v4087
        %vm4091 = vweird.f32 %v2436
        %v4092 = vadd.s32 %v4088, 3
        %v4093 = vand.u32 %v4092, 3
        %vm4094 = vcmp.lt.s32.totalorder %v4093, 2
        %vm4095 = vcmp.eq.s32.totalorder %v4093, 0
        %v4096 = vxor.u32 %v4090, 2147483648
        %v4097 = vsel %vm4095, %v4089, %v4096
        %vm4098 = vcmp.eq.s32.totalorder %v4093, 2
        %v4099 = vxor.u32 %v4089, 2147483648
        %v4100 = vsel %vm4098, %v4099, %v4090
        %v4101 = vsel %vm4094, %v4097, %v4100
        %v4102 = vsel %vm4091, nan, %v4101
        %vm4103 = vcmp.ge.f32.partialorder %v2361, 0.0
        %vm4104 = vcmp.ge.f32.partialorder %v2366, 0.0
        %vm4105 = vcmp.ge.f32.partialorder %v2371, 0.0
        %vm4106 = vcmp.ge.f32.partialorder %v2376, 0.0
        %vm4107 = vcmp.ge.f32.partialorder %v2381, 0.0
        %vm4108 = vcmp.ge.f32.partialorder %v2386, 0.0
        %vm4109 = vcmp.ge.f32.partialorder %v2391, 0.0
        %vm4110 = vcmp.ge.f32.partialorder %v2396, 0.0
        %vm4111 = vcmp.ge.f32.partialorder %v2401, 0.0
        %vm4112 = vcmp.ge.f32.partialorder %v2406, 0.0
        %vm4113 = vcmp.ge.f32.partialorder %v2411, 0.0
        %vm4114 = vcmp.ge.f32.partialorder %v2416, 0.0
        %vm4115 = vcmp.ge.f32.partialorder %v2421, 0.0
        %vm4116 = vcmp.ge.f32.partialorder %v2426, 0.0
        %vm4117 = vcmp.ge.f32.partialorder %v2431, 0.0
        %vm4118 = vcmp.ge.f32.partialorder %v2436, 0.0
        %v4119 = vmul.f32 %v2361, 0.01
        %v4120 = vmul.f32 %v2366, 0.01
        %v4121 = vmul.f32 %v2371, 0.01
        %v4122 = vmul.f32 %v2376, 0.01
        %v4123 = vmul.f32 %v2381, 0.01
        %v4124 = vmul.f32 %v2386, 0.01
        %v4125 = vmul.f32 %v2391, 0.01
        %v4126 = vmul.f32 %v2396, 0.01
        %v4127 = vmul.f32 %v2401, 0.01
        %v4128 = vmul.f32 %v2406, 0.01
        %v4129 = vmul.f32 %v2411, 0.01
        %v4130 = vmul.f32 %v2416, 0.01
        %v4131 = vmul.f32 %v2421, 0.01
        %v4132 = vmul.f32 %v2426, 0.01
        %v4133 = vmul.f32 %v2431, 0.01
        %v4134 = vmul.f32 %v2436, 0.01
        %v4135 = vsel %vm4103, %v2361, %v4119
        %v4136 = vsel %vm4104, %v2366, %v4120
        %v4137 = vsel %vm4105, %v2371, %v4121
        %v4138 = vsel %vm4106, %v2376, %v4122
        %v4139 = vsel %vm4107, %v2381, %v4123
        %v4140 = vsel %vm4108, %v2386, %v4124
        %v4141 = vsel %vm4109, %v2391, %v4125
        %v4142 = vsel %vm4110, %v2396, %v4126
        %v4143 = vsel %vm4111, %v2401, %v4127
        %v4144 = vsel %vm4112, %v2406, %v4128
        %v4145 = vsel %vm4113, %v2411, %v4129
        %v4146 = vsel %vm4114, %v2416, %v4130
        %v4147 = vsel %vm4115, %v2421, %v4131
        %v4148 = vsel %vm4116, %v2426, %v4132
        %v4149 = vsel %vm4117, %v2431, %v4133
        %v4150 = vsel %vm4118, %v2436, %v4134
        %v4151 = vsel %vm2213, %v2542, %v4135
        %v4152 = vsel %vm2213, %v2646, %v4136
        %v4153 = vsel %vm2213, %v2750, %v4137
        %v4154 = vsel %vm2213, %v2854, %v4138
        %v4155 = vsel %vm2213, %v2958, %v4139
        %v4156 = vsel %vm2213, %v3062, %v4140
        %v4157 = vsel %vm2213, %v3166, %v4141
        %v4158 = vsel %vm2213, %v3270, %v4142
        %v4159 = vsel %vm2213, %v3374, %v4143
        %v4160 = vsel %vm2213, %v3478, %v4144
        %v4161 = vsel %vm2213, %v3582, %v4145
        %v4162 = vsel %vm2213, %v3686, %v4146
        %v4163 = vsel %vm2213, %v3790, %v4147
        %v4164 = vsel %vm2213, %v3894, %v4148
        %v4165 = vsel %vm2213, %v3998, %v4149
        %v4166 = vsel %vm2213, %v4102, %v4150
        %v4167 = vld [vmem:[%s5] sm:$0xff]
        %v4168 = vld [vmem:[%s5 + $0x8] sm:$0xff]
        %v4169 = vld [vmem:[%s5 + $0x10] sm:$0xff]
        %v4170 = vld [vmem:[%s5 + $0x18] sm:$0xff]
        %v4171 = vld [vmem:[%s5 + $0x20] sm:$0xff]
        %v4172 = vld [vmem:[%s5 + $0x28] sm:$0xff]
        %v4173 = vld [vmem:[%s5 + $0x30] sm:$0xff]
        %v4174 = vld [vmem:[%s5 + $0x38] sm:$0xff]
        %v4175 = vld [vmem:[%s6] sm:$0x1]
        %v4177 = vlaneseq
        %v4178 = vshrl.u32 %v4177, 7
        %v4179 = vsub.s32 0, %v4178
        %v4180 = vrot.slane %v4175, %v4179
        %v4183 = vsel %vm2245, %v4151, 0
        %v4186 = vsel %vm2245, %v4152, 0
        %v4189 = vsel %vm2245, %v4153, 0
        %v4192 = vsel %vm2245, %v4154, 0
        %v4195 = vsel %vm2245, %v4155, 0
        %v4198 = vsel %vm2245, %v4156, 0
        %v4201 = vsel %vm2245, %v4157, 0
        %v4204 = vsel %vm2245, %v4158, 0
        %v4207 = vsel %vm2245, %v4159, 0
        %v4210 = vsel %vm2245, %v4160, 0
        %v4213 = vsel %vm2245, %v4161, 0
        %v4216 = vsel %vm2245, %v4162, 0
        %v4219 = vsel %vm2245, %v4163, 0
        %v4222 = vsel %vm2245, %v4164, 0
        %v4225 = vsel %vm2245, %v4165, 0
        %v4228 = vsel %vm2245, %v4166, 0
        %4230 = vmatprep.subr.mxu0 0.0
        %4231 = vmatpush1.msra.mxu0 0.0
        %4232 = vmatprep.subr.mxu0 0.0
        %4233 = vmatpush1.msra.mxu0 0.0
        %4234 = vmatprep.subr.mxu0 0.0
        %4235 = vmatpush1.msra.mxu0 0.0
        %4236 = vmatprep.subr.mxu0 0.0
        %4237 = vmatpush1.msra.mxu0 0.0
        %4238 = vmatprep.subr.mxu0 0.0
        %4239 = vmatpush1.msra.mxu0 0.0
        %4240 = vmatprep.subr.mxu0 0.0
        %4241 = vmatpush1.msra.mxu0 0.0
        %4242 = vmatprep.subr.mxu0 0.0
        %4243 = vmatpush1.msra.mxu0 0.0
        %4244 = vmatprep.subr.mxu0 0.0
        %4245 = vmatpush1.msra.mxu0 0.0
        %4246 = vmatprep.subr.mxu0 0.0
        %4247 = vmatpush1.msra.mxu0 %v4174
        %4248 = vmatprep.subr.mxu0 0.0
        %4249 = vmatpush1.msra.mxu0 %v4173
        %4250 = vmatprep.subr.mxu0 0.0
        %4251 = vmatpush1.msra.mxu0 %v4172
        %4252 = vmatprep.subr.mxu0 0.0
        %4253 = vmatpush1.msra.mxu0 %v4171
        %4254 = vmatprep.subr.mxu0 0.0
        %4255 = vmatpush1.msra.mxu0 %v4170
        %4256 = vmatprep.subr.mxu0 0.0
        %4257 = vmatpush1.msra.mxu0 %v4169
        %4258 = vmatprep.subr.mxu0 0.0
        %4259 = vmatpush1.msra.mxu0 %v4168
        %4260 = vmatprep.subr.mxu0 0.0
        %4261 = vmatpush1.msra.mxu0 %v4167
        %4262 = vmatprep.subr.mxu0 0.0
        %4263 = vmatpush2.msra.mxu0 0.0
        %4264 = vmatprep.subr.mxu0 0.0
        %4265 = vmatpush2.msra.mxu0 0.0
        %4266 = vmatprep.subr.mxu0 0.0
        %4267 = vmatpush2.msra.mxu0 0.0
        %4268 = vmatprep.subr.mxu0 0.0
        %4269 = vmatpush2.msra.mxu0 0.0
        %4270 = vmatprep.subr.mxu0 0.0
        %4271 = vmatpush2.msra.mxu0 0.0
        %4272 = vmatprep.subr.mxu0 0.0
        %4273 = vmatpush2.msra.mxu0 0.0
        %4274 = vmatprep.subr.mxu0 0.0
        %4275 = vmatpush2.msra.mxu0 0.0
        %4276 = vmatprep.subr.mxu0 0.0
        %4277 = vmatpush2.msra.mxu0 0.0
        %4278 = vmatprep.subr.mxu0 0.0
        %4279 = vmatpush2.msra.mxu0 0.0
        %4280 = vmatprep.subr.mxu0 0.0
        %4281 = vmatpush2.msra.mxu0 0.0
        %4282 = vmatprep.subr.mxu0 0.0
        %4283 = vmatpush2.msra.mxu0 0.0
        %4284 = vmatprep.subr.mxu0 0.0
        %4285 = vmatpush2.msra.mxu0 0.0
        %4286 = vmatprep.subr.mxu0 0.0
        %4287 = vmatpush2.msra.mxu0 0.0
        %4288 = vmatprep.subr.mxu0 0.0
        %4289 = vmatpush2.msra.mxu0 0.0
        %4290 = vmatprep.subr.mxu0 0.0
        %4291 = vmatpush2.msra.mxu0 0.0
        %4292 = vmatprep.subr.mxu0 0.0
        %4293 = vmatpush2.msra.mxu0 0.0
        %4294 = vmatprep.mubr.f32.mxu0 0.0
        %4295 = vmatmul.mubr.f32.gmra.mxu0 %v4183
        %v4296 = vpop.f32.mrf.mxu0
        %v4297 = vadd.f32 %v4180, %v4296
        %v4298 = vpop.f32.mrf.mxu0
        %4299 = vmatprep.mubr.f32.mxu0 0.0
        %4300 = vmatmul.mubr.f32.gmra.mxu0 %v4186
        %v4301 = vpop.f32.mrf.mxu0
        %v4302 = vadd.f32 %v4180, %v4301
        %v4303 = vpop.f32.mrf.mxu0
        %4304 = vmatprep.mubr.f32.mxu0 0.0
        %4305 = vmatmul.mubr.f32.gmra.mxu0 %v4189
        %v4306 = vpop.f32.mrf.mxu0
        %v4307 = vadd.f32 %v4180, %v4306
        %v4308 = vpop.f32.mrf.mxu0
        %4309 = vmatprep.mubr.f32.mxu0 0.0
        %4310 = vmatmul.mubr.f32.gmra.mxu0 %v4192
        %v4311 = vpop.f32.mrf.mxu0
        %v4312 = vadd.f32 %v4180, %v4311
        %v4313 = vpop.f32.mrf.mxu0
        %4314 = vmatprep.mubr.f32.mxu0 0.0
        %4315 = vmatmul.mubr.f32.gmra.mxu0 %v4195
        %v4316 = vpop.f32.mrf.mxu0
        %v4317 = vadd.f32 %v4180, %v4316
        %v4318 = vpop.f32.mrf.mxu0
        %4319 = vmatprep.mubr.f32.mxu0 0.0
        %4320 = vmatmul.mubr.f32.gmra.mxu0 %v4198
        %v4321 = vpop.f32.mrf.mxu0
        %v4322 = vadd.f32 %v4180, %v4321
        %v4323 = vpop.f32.mrf.mxu0
        %4324 = vmatprep.mubr.f32.mxu0 0.0
        %4325 = vmatmul.mubr.f32.gmra.mxu0 %v4201
        %v4326 = vpop.f32.mrf.mxu0
        %v4327 = vadd.f32 %v4180, %v4326
        %v4328 = vpop.f32.mrf.mxu0
        %4329 = vmatprep.mubr.f32.mxu0 0.0
        %4330 = vmatmul.mubr.f32.gmra.mxu0 %v4204
        %v4331 = vpop.f32.mrf.mxu0
        %v4332 = vadd.f32 %v4180, %v4331
        %v4333 = vpop.f32.mrf.mxu0
        %4334 = vmatprep.mubr.f32.mxu0 0.0
        %4335 = vmatmul.mubr.f32.gmra.mxu0 %v4207
        %v4336 = vpop.f32.mrf.mxu0
        %v4337 = vadd.f32 %v4180, %v4336
        %v4338 = vpop.f32.mrf.mxu0
        %4339 = vmatprep.mubr.f32.mxu0 0.0
        %4340 = vmatmul.mubr.f32.gmra.mxu0 %v4210
        %v4341 = vpop.f32.mrf.mxu0
        %v4342 = vadd.f32 %v4180, %v4341
        %v4343 = vpop.f32.mrf.mxu0
        %4344 = vmatprep.mubr.f32.mxu0 0.0
        %4345 = vmatmul.mubr.f32.gmra.mxu0 %v4213
        %v4346 = vpop.f32.mrf.mxu0
        %v4347 = vadd.f32 %v4180, %v4346
        %v4348 = vpop.f32.mrf.mxu0
        %4349 = vmatprep.mubr.f32.mxu0 0.0
        %4350 = vmatmul.mubr.f32.gmra.mxu0 %v4216
        %v4351 = vpop.f32.mrf.mxu0
        %v4352 = vadd.f32 %v4180, %v4351
        %v4353 = vpop.f32.mrf.mxu0
        %4354 = vmatprep.mubr.f32.mxu0 0.0
        %4355 = vmatmul.mubr.f32.gmra.mxu0 %v4219
        %v4356 = vpop.f32.mrf.mxu0
        %v4357 = vadd.f32 %v4180, %v4356
        %v4358 = vpop.f32.mrf.mxu0
        %4359 = vmatprep.mubr.f32.mxu0 0.0
        %4360 = vmatmul.mubr.f32.gmra.mxu0 %v4222
        %v4361 = vpop.f32.mrf.mxu0
        %v4362 = vadd.f32 %v4180, %v4361
        %v4363 = vpop.f32.mrf.mxu0
        %4364 = vmatprep.mubr.f32.mxu0 0.0
        %4365 = vmatmul.mubr.f32.gmra.mxu0 %v4225
        %v4366 = vpop.f32.mrf.mxu0
        %v4367 = vadd.f32 %v4180, %v4366
        %v4368 = vpop.f32.mrf.mxu0
        %4369 = vmatprep.mubr.f32.mxu0 0.0
        %4370 = vmatmul.mubr.f32.gmra.mxu0 %v4228
        %v4371 = vpop.f32.mrf.mxu0
        %v4372 = vadd.f32 %v4180, %v4371
        %v4373 = vpop.f32.mrf.mxu0
        %4374 = vdwg.mxu0
        %4375 = vst [vmem:[%s272] sm:$0xff] %v4297
        %4376 = vst [vmem:[%s272 + $0x8] sm:$0xff] %v4302
        %4377 = vst [vmem:[%s272 + $0x10] sm:$0xff] %v4307
        %4378 = vst [vmem:[%s272 + $0x18] sm:$0xff] %v4312
        %4379 = vst [vmem:[%s272 + $0x20] sm:$0xff] %v4317
        %4380 = vst [vmem:[%s272 + $0x28] sm:$0xff] %v4322
        %4381 = vst [vmem:[%s272 + $0x30] sm:$0xff] %v4327
        %4382 = vst [vmem:[%s272 + $0x38] sm:$0xff] %v4332
        %4383 = vst [vmem:[%s272 + $0x40] sm:$0xff] %v4337
        %4384 = vst [vmem:[%s272 + $0x48] sm:$0xff] %v4342
        %4385 = vst [vmem:[%s272 + $0x50] sm:$0xff] %v4347
        %4386 = vst [vmem:[%s272 + $0x58] sm:$0xff] %v4352
        %4387 = vst [vmem:[%s272 + $0x60] sm:$0xff] %v4357
        %4388 = vst [vmem:[%s272 + $0x68] sm:$0xff] %v4362
        %4389 = vst [vmem:[%s272 + $0x70] sm:$0xff] %v4367
        %4390 = vst [vmem:[%s272 + $0x78] sm:$0xff] %v4372
        %s4391 = sand.u32 %s181, 1
        %s4392 = scalar_lea.sflag [#allocation3], %s4391
        %s4393 = sand.u32 %s181, 1
        %s4394 = smul.addr %s4393, 128
        %s4395 = scalar_lea.vmem [#allocation2], %s4394
        // Predicated region
        $region49: #{tpu_custom_call.1} parent=47 // pred_check
          %p4396 = pneg %p191
        $region50: #{tpu_custom_call.1} parent=47 // pred_check_branch
          %4398 = sbr.rel (%p4396) target = $region52
        $region51: #{tpu_custom_call.1} parent=47 // pred_region
          %s4399 = smul.u32 16, %s21
          %s4401 = ssub.s32 2048, 2048
          %4402 = vsyncadd %s4392, %s4401
          %s4403 = smul.addr %s4399, 128
          %s4404 = scalar_lea.hbm %s7, %s4403
          %s4405 = sshll.u32 %s4395, 4
          %s4406 = int_to_ptr.vmem [resolvable:$true] %s4405
          %4411 = dma.vmem_to_hbm [thread:$0]  %s4406, 2048, %s4404, %s4392, 128, 128, 8
        $region52: #{tpu_custom_call.1} parent=47 // pred_fallthru
          _
      $region48: #{tpu_custom_call.1} parent=5 // pred_fallthru
        _
      %p4412 = scmp.le.s32.totalorder 2, %s16
      // Predicated region
      $region53: #{tpu_custom_call.1} parent=5 // pred_check
        %p4413 = pneg %p4412
      $region54: #{tpu_custom_call.1} parent=5 // pred_check_branch
        %4415 = sbr.rel (%p4413) target = $region56
      $region55: #{tpu_custom_call.1} parent=5 // pred_region
        %s4416 = ssub.s32 %s16, 2
        // Predicated region
        $region57: #{tpu_custom_call.1} parent=55 // pred_check
          %p4417 = pneg %p197
        $region58: #{tpu_custom_call.1} parent=55 // pred_check_branch
          %4419 = sbr.rel (%p4417) target = $region60
        $region59: #{tpu_custom_call.1} parent=55 // pred_region
          %s4420 = sand.u32 %s182, 1
          %s4421 = scalar_lea.sflag [#allocation3], %s4420
          %s4422 = sand.u32 %s182, 1
          %s4423 = smul.addr %s4422, 128
          %s4424 = scalar_lea.vmem [#allocation2], %s4423
          %4425 = dma.done %s4421, 2048
        $region60: #{tpu_custom_call.1} parent=55 // pred_fallthru
          _
      $region56: #{tpu_custom_call.1} parent=5 // pred_fallthru
        _
    $region6: #{tpu_custom_call.1} parent=1 // loop_footer
      %s20 = sadd.s32 1, %s16
    $region7: #{tpu_custom_call.1} parent=1 // loop_footer_branch
      %15 = sbr.rel target = $region3
    $region8: #{tpu_custom_call.1} parent=1 // loop_exit
      _
    %4426 = vsyncpa [#allocation3], 1
    %s4427 = scalar_lea.sflag [#allocation3], 1
    %4428 = vsyncpa %s4427, 1

</llo_original>
